<compile_context>
chip_gen: v5e
topology: v5e:2x2
jax: 0.10.0
libtpu: 0.0.40
codegen_flags: <defaults>
</compile_context>

<pallas_src>
import functools

import jax
import jax.numpy as jnp
from jax.experimental import pallas as pl
from jax.experimental.pallas import tpu as pltpu

_BF16_GEMM_WEIGHTS = True   # big GEMM weights/activations in bf16, f32 MXU accumulation


# ---------------------------------------------------------------------------
# Fused forward kernel (one grid step == one bag)
# ---------------------------------------------------------------------------
def _gated_attention_kernel(patches_ref, w1_ref, w2_ref, w1a_ref, w1b_ref,
                            biases_ref, att_ref, scal_ref,
                            yprob_ref, a_ref, *, n_inst):
    f32 = jnp.float32
    two_n = 2 * n_inst
    rows_g = patches_ref.shape[0] // 8        # V * 2N  (rows per conv1 parity group)
    v_cnt = rows_g // two_n                   # V = 12
    l_out = v_cnt - 1                         # 11 (MaxPool1d output length)
    r_lo = l_out * two_n                      # 88
    gemm_dt = w2_ref.dtype

    def leaky(t):                             # nn.LeakyReLU default slope 0.01
        return jnp.where(t >= 0.0, t, 0.01 * t)

    # ---- cnn1: Conv2d(1,256,(3,3),stride=(1,2)) as ONE GEMM over all 8 parity groups.
    # Rows are ordered (g, v, b) with conv1 output position w = 8v + g, so the fused
    # MaxPool2d((1,2)) is a max of two 96-row aligned slices; bias + LeakyReLU run on
    # the pooled half only (exact: LeakyReLU is monotone, bias shared by the pair).
    c1 = jnp.dot(patches_ref[...], w1_ref[...], preferred_element_type=f32)    # (8V*2N, 256)
    b1 = biases_ref[:, 0:256]
    p1 = [leaky(jnp.maximum(c1[(2 * q) * rows_g:(2 * q + 1) * rows_g],
                            c1[(2 * q + 1) * rows_g:(2 * q + 2) * rows_g]) + b1)
          for q in range(4)]                                                    # 4 x (V*2N, 256)

    # ---- cnn2: Conv1d(256,128,4,stride=2), BOTH output-time parities, as ONE K=1024 GEMM.
    # Taps stacked on lanes (weight rows kt*256 + ci), even/odd output rows stacked on
    # sublanes; a single f32->bf16 cast of the stacked operand.
    even_in = jnp.concatenate([p1[0], p1[1], p1[2], p1[3]], axis=1)             # (96, 1024)
    odd_in = jnp.concatenate([p1[2][:r_lo], p1[3][:r_lo],
                              p1[0][two_n:], p1[1][two_n:]], axis=1)            # (88, 1024)
    c2_in = jnp.concatenate([even_in, odd_in], axis=0).astype(gemm_dt)          # (184, 1024)
    c2 = jnp.dot(c2_in, w2_ref[...], preferred_element_type=f32)                # (184, 128)

    # MaxPool1d(3, stride=2) + bias + LeakyReLU fused: pooled[s] = max(t=2s, 2s+1, 2s+2).
    b2 = biases_ref[:, 256:384]
    pooled = leaky(jnp.maximum(jnp.maximum(c2[:r_lo], c2[rows_g:rows_g + r_lo]),
                               c2[two_n:rows_g]) + b2)                          # (88, 128)

    # ---- fc1: Linear(1408,512)+LeakyReLU, Linear(512,256)+LeakyReLU.
    # The torch channel-major flatten (k = c*11 + s) is baked into w1a's row order
    # (k' = s*128 + c); a tile-aligned lane concat of the 11 pooled blocks yields the
    # full fc1a input, so ONE GEMM replaces the previous 11-step accumulation chain.
    fc1_in = jnp.concatenate([pooled[s * two_n:(s + 1) * two_n] for s in range(l_out)],
                             axis=1).astype(w1a_ref.dtype)                      # (2N, 1408)
    ya = leaky(jnp.dot(fc1_in, w1a_ref[...], preferred_element_type=f32)
               + biases_ref[:, 384:896])                                        # (2N, 512)
    y = leaky(jnp.dot(ya.astype(w1b_ref.dtype), w1b_ref[...],
                      preferred_element_type=f32) + biases_ref[:, 896:1152])    # (2N, 256)

    # ---- Siamese L1 distance, vectorized (no per-instance loop, no scratch).
    # Sublane-rotate branch-2 rows onto branch-1 rows; rows 0..N-1 of d are the distances.
    d = jnp.sum(jnp.abs(y - pltpu.roll(y, shift=n_inst, axis=0)),
                axis=1, keepdims=True)                                          # (2N, 1)
    # Scatter d[i, 0] -> dist[0, i] lane-dense: broadcast + identity mask + sublane sum.
    row = jax.lax.broadcasted_iota(jnp.int32, (two_n, n_inst), 0)
    col = jax.lax.broadcasted_iota(jnp.int32, (two_n, n_inst), 1)
    dist = jnp.sum(jnp.where(row == col, d, 0.0), axis=0, keepdims=True)        # (1, N)

    # ---- fc2: Linear(1,1) + Sigmoid  ->  H, instances lane-dense.
    h = jax.nn.sigmoid(dist * scal_ref[0] + scal_ref[1])                        # (1, N)

    # ---- gated attention head: D = 64 on sublanes, instances on lanes.
    wv = att_ref[0:64, :]
    bv = att_ref[64:128, :]
    wu = att_ref[128:192, :]
    bu = att_ref[192:256, :]
    ww = att_ref[256:320, :]
    a_v = jnp.tanh(wv * h + bv)                                                 # (64, N)
    a_u = jax.nn.sigmoid(wu * h + bu)                                           # (64, N)
    logits = jnp.sum(a_v * a_u * ww, axis=0, keepdims=True) + scal_ref[2]       # (1, N)

    # softmax over the N instances (torch dim=1 after the transpose)
    logits = logits - jnp.max(logits, axis=1, keepdims=True)
    e = jnp.exp(logits)
    attn = e / jnp.sum(e, axis=1, keepdims=True)                                # (1, N)

    # M = A @ H (1, 1); classifier: Linear(1,1) + Sigmoid
    m_feat = jnp.sum(attn * h, axis=1, keepdims=True)                           # (1, 1)
    yprob_ref[...] = jax.nn.sigmoid(m_feat * scal_ref[3] + scal_ref[4])
    a_ref[...] = attn


# ---------------------------------------------------------------------------
# Wrapper: small im2col prep (inside the same jit), then one gridded pallas_call
# ---------------------------------------------------------------------------
def _conv1_patches(x):
    """x: (B, 2N, 3, W) -> (B, 8*V*2N, 9) im2col taps, rows ordered (g, v, b), w = 8v + g."""
    bsz, two_n, hh, width = x.shape
    assert hh == 3, "cnn1 kernel covers the full height of 3"
    w_out = (width - 3) // 2 + 1
    assert w_out % 8 == 0, "conv1 output width must be a multiple of 8"
    v_cnt = w_out // 8
    col = 2 * jnp.arange(w_out)[:, None] + jnp.arange(3)[None, :]       # (w_out, 3)
    p = x[:, :, :, col]                          # (B, 2N, 3, w_out, 3) = [B, b, kh, w, kw]
    p = p.transpose(0, 3, 1, 2, 4)               # (B, w_out, 2N, 3, 3) = [B, w, b, kh, kw]
    p = p.reshape(bsz, v_cnt, 8, two_n, 9)       # w = 8v + g  ->  [B, v, g, b, k]
    p = p.transpose(0, 2, 1, 3, 4)               # [B, g, v, b, k]
    return p.reshape(bsz, 8 * v_cnt * two_n, 9)


def gated_attention_forward_batched(x1s, x2s, params):
    """x1s, x2s: (B, N, 1, 3, W).  Returns (Y_prob (B,1,1), Y_hat (B,1,1), A (B,1,N))."""
    bsz, n_inst = x1s.shape[0], x1s.shape[1]
    two_n = 2 * n_inst
    # The two Siamese branches share weights -> batch them into one 2N-row trunk pass.
    x = jnp.concatenate([x1s, x2s], axis=1).astype(jnp.float32)[:, :, 0]   # (B, 2N, 3, W)
    patches = _conv1_patches(x)                                            # (B, 8*V*2N, 9)
    rows = patches.shape[1]
    v_cnt = rows // (8 * two_n)
    l_out = v_cnt - 1
    assert params["fc1a_w"].shape[0] == l_out * 128, "input width inconsistent with fc1(1408)"

    def const_spec(shape):
        return pl.BlockSpec(shape, lambda *_: (0,) * len(shape))   # resident across the grid

    in_specs = [
        pl.BlockSpec((None, rows, 9), lambda b: (b, 0, 0)),        # per-bag im2col patches
        const_spec(params["conv1_w"].shape),
        const_spec(params["conv2_w"].shape),
        const_spec(params["fc1a_w"].shape),
        const_spec(params["fc1b_w"].shape),
        const_spec(params["biases"].shape),
        const_spec(params["att"].shape),
        pl.BlockSpec(memory_space=pltpu.MemorySpace.SMEM),         # 5 true scalars
    ]
    out_specs = (pl.BlockSpec((None, 1, 1), lambda b: (b, 0, 0)),
                 pl.BlockSpec((None, 1, n_inst), lambda b: (b, 0, 0)))
    out_shape = (jax.ShapeDtypeStruct((bsz, 1, 1), jnp.float32),
                 jax.ShapeDtypeStruct((bsz, 1, n_inst), jnp.float32))

    c2_rows = (2 * v_cnt - 1) * two_n
    flops = bsz * 2 * (rows * 9 * 256
                       + c2_rows * 1024 * 128
                       + two_n * (l_out * 128) * 512
                       + two_n * 512 * 256)
    transcendentals = bsz * (130 * n_inst + 2)
    weight_bytes = sum(int(params[k].size) * params[k].dtype.itemsize
                       for k in ("conv1_w", "conv2_w", "fc1a_w", "fc1b_w",
                                 "biases", "att", "scalars"))
    bytes_accessed = weight_bytes + int(patches.size) * 4 + bsz * 4 * (2 + n_inst)

    kernel = functools.partial(_gated_attention_kernel, n_inst=n_inst)
    y_prob, a = pl.pallas_call(
        kernel,
        grid=(bsz,),
        out_shape=out_shape,
        in_specs=in_specs,
        out_specs=out_specs,
        compiler_params=pltpu.CompilerParams(dimension_semantics=("parallel",)),
        cost_estimate=pl.CostEstimate(flops=int(flops),
                                      transcendentals=int(transcendentals),
                                      bytes_accessed=int(bytes_accessed)),
    )(patches, params["conv1_w"], params["conv2_w"], params["fc1a_w"], params["fc1b_w"],
      params["biases"], params["att"], params["scalars"])

    y_hat = (y_prob >= 0.5).astype(jnp.float32)
    return y_prob, y_hat, a


def gated_attention_forward(x1s, x2s, params):
    """Original module semantics (one bag): x1s, x2s (N, 1, 3, W) -> ((1,1), (1,1), (1,N))."""
    y_prob, y_hat, a = gated_attention_forward_batched(x1s[None], x2s[None], params)
    return y_prob[0], y_hat[0], a[0]


# ---------------------------------------------------------------------------
# Deterministic parameter init (PyTorch default-style uniform bounds) with all layout
# permutations baked in once at init time, and small params packed into few arrays.
# ---------------------------------------------------------------------------
def init_params(key):
    ks = jax.random.split(key, 18)
    wdt = jnp.bfloat16 if _BF16_GEMM_WEIGHTS else jnp.float32

    def u(k, fan_in, shape):
        bound = 1.0 / float(fan_in) ** 0.5
        return jax.random.uniform(k, shape, jnp.float32, -bound, bound)

    p = {}
    # cnn1: Conv2d(1,256,(3,3)) weight (256,1,3,3) -> GEMM B (9,256), rows k = kh*3+kw
    p["conv1_w"] = u(ks[0], 9, (256, 1, 3, 3)).reshape(256, 9).T
    conv1_b = u(ks[1], 9, (256,))
    # cnn2: Conv1d(256,128,4) weight (128,256,4) -> (1024,128), rows k = kt*256 + ci
    p["conv2_w"] = u(ks[2], 1024, (128, 256, 4)).transpose(2, 1, 0).reshape(1024, 128).astype(wdt)
    conv2_b = u(ks[3], 1024, (128,))
    # fc1a: Linear(1408,512); torch flatten k = c*11 + s  ->  rows k' = s*128 + c
    p["fc1a_w"] = (u(ks[4], 1408, (512, 1408)).T
                   .reshape(128, 11, 512).transpose(1, 0, 2).reshape(1408, 512).astype(wdt))
    fc1a_b = u(ks[5], 1408, (512,))
    # fc1b: Linear(512,256)
    p["fc1b_w"] = u(ks[6], 512, (256, 512)).T.astype(wdt)
    fc1b_b = u(ks[7], 512, (256,))
    # fc2 / attention / classifier scalars and small vectors
    fc2_w = u(ks[8], 1, (1,))
    fc2_b = u(ks[9], 1, (1,))
    att_v_w = u(ks[10], 1, (64,))
    att_v_b = u(ks[11], 1, (64,))
    att_u_w = u(ks[12], 1, (64,))
    att_u_b = u(ks[13], 1, (64,))
    att_w_w = u(ks[14], 64, (64,))
    att_w_b = u(ks[15], 64, (1,))
    cls_w = u(ks[16], 1, (1,))
    cls_b = u(ks[17], 1, (1,))

    # Packed small parameters: one bias row, one attention-vector column, one SMEM scalar array.
    p["biases"] = jnp.concatenate([conv1_b, conv2_b, fc1a_b, fc1b_b]).reshape(1, 1152)
    p["att"] = jnp.concatenate([att_v_w, att_v_b, att_u_w, att_u_b, att_w_w]).reshape(320, 1)
    p["scalars"] = jnp.concatenate([fc2_w, fc2_b, att_w_b, cls_w, cls_b,
                                    jnp.zeros((3,), jnp.float32)])
    return p
    # TODO(synk): nn.Dropout(0.3) layers are inference-mode identities (no RNG path).


if __name__ == "__main__":
    key = jax.random.PRNGKey(0)
    kx1, kx2, kp = jax.random.split(key, 3)

    # (3, 193) is the smallest spatial size consistent with fc1's 1408-wide flatten.
    BAGS, N_INST, HEIGHT, WIDTH = 4, 4, 3, 193
    x1s = jax.random.normal(kx1, (BAGS, N_INST, 1, HEIGHT, WIDTH), jnp.float32)
    x2s = jax.random.normal(kx2, (BAGS, N_INST, 1, HEIGHT, WIDTH), jnp.float32)
    params = init_params(kp)

    # Batched path: one pallas_call, grid over bags, weights resident across the grid.
    fwd_batched = jax.jit(gated_attention_forward_batched)
    y_prob, y_hat, a = fwd_batched(x1s, x2s, params)
    jax.block_until_ready((y_prob, y_hat, a))

    assert y_prob.shape == (BAGS, 1, 1) and y_hat.shape == (BAGS, 1, 1)
    assert a.shape == (BAGS, 1, N_INST)
    assert bool(jnp.isfinite(y_prob).all()) and bool(jnp.isfinite(a).all())
    assert bool(jnp.all((y_prob > 0.0) & (y_prob < 1.0)))
    assert bool(jnp.allclose(jnp.sum(a, axis=-1), 1.0, atol=1e-5))

    # Single-bag path (original module semantics).
    fwd = jax.jit(gated_attention_forward)
    yp1, yh1, a1 = fwd(x1s[0], x2s[0], params)
    jax.block_until_ready((yp1, yh1, a1))
    assert yp1.shape == (1, 1) and yh1.shape == (1, 1) and a1.shape == (1, N_INST)
    assert bool(jnp.isfinite(yp1).all()) and bool(jnp.isfinite(a1).all())

    print("KERNEL_OK")
</pallas_src>

<mosaic_0001>
module attributes {stable_mosaic.version = 11 : i64} {
  func.func @_gated_attention_kernel(%arg0: i32, %arg1: memref<1x768x9xf32, #tpu.memory_space<vmem>>, %arg2: memref<9x256xf32, #tpu.memory_space<vmem>>, %arg3: memref<1024x128xbf16, #tpu.memory_space<vmem>>, %arg4: memref<1408x512xbf16, #tpu.memory_space<vmem>>, %arg5: memref<512x256xbf16, #tpu.memory_space<vmem>>, %arg6: memref<1x1152xf32, #tpu.memory_space<vmem>>, %arg7: memref<320x1xf32, #tpu.memory_space<vmem>>, %arg8: memref<8xf32, #tpu.memory_space<smem>>, %arg9: memref<1x1x1xf32, #tpu.memory_space<vmem>>, %arg10: memref<1x1x4xf32, #tpu.memory_space<vmem>>) attributes {dimension_semantics = [#tpu.dimension_semantics<parallel>], iteration_bounds = array<i64: 4>, scalar_prefetch = 0 : i64, scratch_operands = 0 : i64, tpu.core_type = #tpu.core_type<tc>, window_params = [{transform_indices = @transform_0, window_bounds = array<i64: 1, 768, 9>}, {pipeline_mode = #tpu.pipeline_mode<synchronous>, transform_indices = @transform_1, window_bounds = array<i64: 9, 256>}, {pipeline_mode = #tpu.pipeline_mode<synchronous>, transform_indices = @transform_2, window_bounds = array<i64: 1024, 128>}, {pipeline_mode = #tpu.pipeline_mode<synchronous>, transform_indices = @transform_3, window_bounds = array<i64: 1408, 512>}, {pipeline_mode = #tpu.pipeline_mode<synchronous>, transform_indices = @transform_4, window_bounds = array<i64: 512, 256>}, {pipeline_mode = #tpu.pipeline_mode<synchronous>, transform_indices = @transform_5, window_bounds = array<i64: 1, 1152>}, {pipeline_mode = #tpu.pipeline_mode<synchronous>, transform_indices = @transform_6, window_bounds = array<i64: 320, 1>}, {transform_indices = @transform_7, window_bounds = array<i64: 8>}, {transform_indices = @transform_8, window_bounds = array<i64: 1, 1, 1>}, {transform_indices = @transform_9, window_bounds = array<i64: 1, 1, 4>}]} {
    %c0 = arith.constant 0 : index
    %c0_0 = arith.constant 0 : index
    %c0_1 = arith.constant 0 : index
    %0 = vector.load %arg1[%c0, %c0_0, %c0_1] : memref<1x768x9xf32, #tpu.memory_space<vmem>>, vector<1x768x9xf32>
    %1 = vector.shape_cast %0 : vector<1x768x9xf32> to vector<768x9xf32>
    %c0_2 = arith.constant 0 : index
    %c0_3 = arith.constant 0 : index
    %2 = vector.load %arg2[%c0_2, %c0_3] : memref<9x256xf32, #tpu.memory_space<vmem>>, vector<9x256xf32>
    %cst = arith.constant dense<0.000000e+00> : vector<768x256xf32>
    %3 = tpu.matmul %1, %2, %cst {dimension_numbers = #tpu.dot_dimension_numbers<[1], [0], [0], [1], [0, 0, 1, 1], [], []>} : vector<768x9xf32>, vector<9x256xf32>, vector<768x256xf32> -> vector<768x256xf32>
    %c0_4 = arith.constant 0 : index
    %c0_5 = arith.constant 0 : index
    %4 = vector.load %arg6[%c0_4, %c0_5] : memref<1x1152xf32, #tpu.memory_space<vmem>>, vector<1x256xf32>
    %5 = vector.extract_strided_slice %3 {offsets = [0, 0], sizes = [96, 256], strides = [1, 1]} : vector<768x256xf32> to vector<96x256xf32>
    %6 = vector.extract_strided_slice %3 {offsets = [96, 0], sizes = [96, 256], strides = [1, 1]} : vector<768x256xf32> to vector<96x256xf32>
    %7 = arith.maximumf %5, %6 : vector<96x256xf32>
    %8 = vector.broadcast %4 : vector<1x256xf32> to vector<96x256xf32>
    %9 = arith.addf %7, %8 : vector<96x256xf32>
    %cst_6 = arith.constant 0.000000e+00 : f32
    %10 = vector.broadcast %cst_6 : f32 to vector<96x256xf32>
    %11 = arith.cmpf oge, %9, %10 : vector<96x256xf32>
    %cst_7 = arith.constant 0.00999999977 : f32
    %12 = vector.broadcast %cst_7 : f32 to vector<96x256xf32>
    %13 = arith.mulf %12, %9 : vector<96x256xf32>
    %14 = arith.select %11, %9, %13 : vector<96x256xi1>, vector<96x256xf32>
    %15 = vector.extract_strided_slice %3 {offsets = [192, 0], sizes = [96, 256], strides = [1, 1]} : vector<768x256xf32> to vector<96x256xf32>
    %16 = vector.extract_strided_slice %3 {offsets = [288, 0], sizes = [96, 256], strides = [1, 1]} : vector<768x256xf32> to vector<96x256xf32>
    %17 = arith.maximumf %15, %16 : vector<96x256xf32>
    %18 = vector.broadcast %4 : vector<1x256xf32> to vector<96x256xf32>
    %19 = arith.addf %17, %18 : vector<96x256xf32>
    %cst_8 = arith.constant 0.000000e+00 : f32
    %20 = vector.broadcast %cst_8 : f32 to vector<96x256xf32>
    %21 = arith.cmpf oge, %19, %20 : vector<96x256xf32>
    %cst_9 = arith.constant 0.00999999977 : f32
    %22 = vector.broadcast %cst_9 : f32 to vector<96x256xf32>
    %23 = arith.mulf %22, %19 : vector<96x256xf32>
    %24 = arith.select %21, %19, %23 : vector<96x256xi1>, vector<96x256xf32>
    %25 = vector.extract_strided_slice %3 {offsets = [384, 0], sizes = [96, 256], strides = [1, 1]} : vector<768x256xf32> to vector<96x256xf32>
    %26 = vector.extract_strided_slice %3 {offsets = [480, 0], sizes = [96, 256], strides = [1, 1]} : vector<768x256xf32> to vector<96x256xf32>
    %27 = arith.maximumf %25, %26 : vector<96x256xf32>
    %28 = vector.broadcast %4 : vector<1x256xf32> to vector<96x256xf32>
    %29 = arith.addf %27, %28 : vector<96x256xf32>
    %cst_10 = arith.constant 0.000000e+00 : f32
    %30 = vector.broadcast %cst_10 : f32 to vector<96x256xf32>
    %31 = arith.cmpf oge, %29, %30 : vector<96x256xf32>
    %cst_11 = arith.constant 0.00999999977 : f32
    %32 = vector.broadcast %cst_11 : f32 to vector<96x256xf32>
    %33 = arith.mulf %32, %29 : vector<96x256xf32>
    %34 = arith.select %31, %29, %33 : vector<96x256xi1>, vector<96x256xf32>
    %35 = vector.extract_strided_slice %3 {offsets = [576, 0], sizes = [96, 256], strides = [1, 1]} : vector<768x256xf32> to vector<96x256xf32>
    %36 = vector.extract_strided_slice %3 {offsets = [672, 0], sizes = [96, 256], strides = [1, 1]} : vector<768x256xf32> to vector<96x256xf32>
    %37 = arith.maximumf %35, %36 : vector<96x256xf32>
    %38 = vector.broadcast %4 : vector<1x256xf32> to vector<96x256xf32>
    %39 = arith.addf %37, %38 : vector<96x256xf32>
    %cst_12 = arith.constant 0.000000e+00 : f32
    %40 = vector.broadcast %cst_12 : f32 to vector<96x256xf32>
    %41 = arith.cmpf oge, %39, %40 : vector<96x256xf32>
    %cst_13 = arith.constant 0.00999999977 : f32
    %42 = vector.broadcast %cst_13 : f32 to vector<96x256xf32>
    %43 = arith.mulf %42, %39 : vector<96x256xf32>
    %44 = arith.select %41, %39, %43 : vector<96x256xi1>, vector<96x256xf32>
    %45 = tpu.concatenate %14, %24, %34, %44 in 1 : vector<96x256xf32>, vector<96x256xf32>, vector<96x256xf32>, vector<96x256xf32> -> vector<96x1024xf32>
    %46 = vector.extract_strided_slice %34 {offsets = [0, 0], sizes = [88, 256], strides = [1, 1]} : vector<96x256xf32> to vector<88x256xf32>
    %47 = vector.extract_strided_slice %44 {offsets = [0, 0], sizes = [88, 256], strides = [1, 1]} : vector<96x256xf32> to vector<88x256xf32>
    %48 = vector.extract_strided_slice %14 {offsets = [8, 0], sizes = [88, 256], strides = [1, 1]} : vector<96x256xf32> to vector<88x256xf32>
    %49 = vector.extract_strided_slice %24 {offsets = [8, 0], sizes = [88, 256], strides = [1, 1]} : vector<96x256xf32> to vector<88x256xf32>
    %50 = tpu.concatenate %46, %47, %48, %49 in 1 : vector<88x256xf32>, vector<88x256xf32>, vector<88x256xf32>, vector<88x256xf32> -> vector<88x1024xf32>
    %51 = tpu.concatenate %45, %50 in 0 : vector<96x1024xf32>, vector<88x1024xf32> -> vector<184x1024xf32>
    %52 = arith.truncf %51 : vector<184x1024xf32> to vector<184x1024xbf16>
    %c0_14 = arith.constant 0 : index
    %c0_15 = arith.constant 0 : index
    %53 = vector.load %arg3[%c0_14, %c0_15] : memref<1024x128xbf16, #tpu.memory_space<vmem>>, vector<1024x128xbf16>
    %cst_16 = arith.constant dense<0.000000e+00> : vector<184x128xf32>
    %54 = tpu.matmul %52, %53, %cst_16 {dimension_numbers = #tpu.dot_dimension_numbers<[1], [0], [0], [1], [0, 0, 1, 1], [], []>} : vector<184x1024xbf16>, vector<1024x128xbf16>, vector<184x128xf32> -> vector<184x128xf32>
    %c0_17 = arith.constant 0 : index
    %c256 = arith.constant 256 : index
    %55 = vector.load %arg6[%c0_17, %c256] : memref<1x1152xf32, #tpu.memory_space<vmem>>, vector<1x128xf32>
    %56 = vector.extract_strided_slice %54 {offsets = [0, 0], sizes = [88, 128], strides = [1, 1]} : vector<184x128xf32> to vector<88x128xf32>
    %57 = vector.extract_strided_slice %54 {offsets = [96, 0], sizes = [88, 128], strides = [1, 1]} : vector<184x128xf32> to vector<88x128xf32>
    %58 = arith.maximumf %56, %57 : vector<88x128xf32>
    %59 = vector.extract_strided_slice %54 {offsets = [8, 0], sizes = [88, 128], strides = [1, 1]} : vector<184x128xf32> to vector<88x128xf32>
    %60 = arith.maximumf %58, %59 : vector<88x128xf32>
    %61 = vector.broadcast %55 : vector<1x128xf32> to vector<88x128xf32>
    %62 = arith.addf %60, %61 : vector<88x128xf32>
    %cst_18 = arith.constant 0.000000e+00 : f32
    %63 = vector.broadcast %cst_18 : f32 to vector<88x128xf32>
    %64 = arith.cmpf oge, %62, %63 : vector<88x128xf32>
    %cst_19 = arith.constant 0.00999999977 : f32
    %65 = vector.broadcast %cst_19 : f32 to vector<88x128xf32>
    %66 = arith.mulf %65, %62 : vector<88x128xf32>
    %67 = arith.select %64, %62, %66 : vector<88x128xi1>, vector<88x128xf32>
    %68 = vector.extract_strided_slice %67 {offsets = [0, 0], sizes = [8, 128], strides = [1, 1]} : vector<88x128xf32> to vector<8x128xf32>
    %69 = vector.extract_strided_slice %67 {offsets = [8, 0], sizes = [8, 128], strides = [1, 1]} : vector<88x128xf32> to vector<8x128xf32>
    %70 = vector.extract_strided_slice %67 {offsets = [16, 0], sizes = [8, 128], strides = [1, 1]} : vector<88x128xf32> to vector<8x128xf32>
    %71 = vector.extract_strided_slice %67 {offsets = [24, 0], sizes = [8, 128], strides = [1, 1]} : vector<88x128xf32> to vector<8x128xf32>
    %72 = vector.extract_strided_slice %67 {offsets = [32, 0], sizes = [8, 128], strides = [1, 1]} : vector<88x128xf32> to vector<8x128xf32>
    %73 = vector.extract_strided_slice %67 {offsets = [40, 0], sizes = [8, 128], strides = [1, 1]} : vector<88x128xf32> to vector<8x128xf32>
    %74 = vector.extract_strided_slice %67 {offsets = [48, 0], sizes = [8, 128], strides = [1, 1]} : vector<88x128xf32> to vector<8x128xf32>
    %75 = vector.extract_strided_slice %67 {offsets = [56, 0], sizes = [8, 128], strides = [1, 1]} : vector<88x128xf32> to vector<8x128xf32>
    %76 = vector.extract_strided_slice %67 {offsets = [64, 0], sizes = [8, 128], strides = [1, 1]} : vector<88x128xf32> to vector<8x128xf32>
    %77 = vector.extract_strided_slice %67 {offsets = [72, 0], sizes = [8, 128], strides = [1, 1]} : vector<88x128xf32> to vector<8x128xf32>
    %78 = vector.extract_strided_slice %67 {offsets = [80, 0], sizes = [8, 128], strides = [1, 1]} : vector<88x128xf32> to vector<8x128xf32>
    %79 = tpu.concatenate %68, %69, %70, %71, %72, %73, %74, %75, %76, %77, %78 in 1 : vector<8x128xf32>, vector<8x128xf32>, vector<8x128xf32>, vector<8x128xf32>, vector<8x128xf32>, vector<8x128xf32>, vector<8x128xf32>, vector<8x128xf32>, vector<8x128xf32>, vector<8x128xf32>, vector<8x128xf32> -> vector<8x1408xf32>
    %80 = arith.truncf %79 : vector<8x1408xf32> to vector<8x1408xbf16>
    %c0_20 = arith.constant 0 : index
    %c0_21 = arith.constant 0 : index
    %81 = vector.load %arg4[%c0_20, %c0_21] : memref<1408x512xbf16, #tpu.memory_space<vmem>>, vector<1408x512xbf16>
    %cst_22 = arith.constant dense<0.000000e+00> : vector<8x512xf32>
    %82 = tpu.matmul %80, %81, %cst_22 {dimension_numbers = #tpu.dot_dimension_numbers<[1], [0], [0], [1], [0, 0, 1, 1], [], []>} : vector<8x1408xbf16>, vector<1408x512xbf16>, vector<8x512xf32> -> vector<8x512xf32>
    %c0_23 = arith.constant 0 : index
    %c384 = arith.constant 384 : index
    %83 = vector.load %arg6[%c0_23, %c384] : memref<1x1152xf32, #tpu.memory_space<vmem>>, vector<1x512xf32>
    %84 = vector.broadcast %83 : vector<1x512xf32> to vector<8x512xf32>
    %85 = arith.addf %82, %84 : vector<8x512xf32>
    %cst_24 = arith.constant 0.000000e+00 : f32
    %86 = vector.broadcast %cst_24 : f32 to vector<8x512xf32>
    %87 = arith.cmpf oge, %85, %86 : vector<8x512xf32>
    %cst_25 = arith.constant 0.00999999977 : f32
    %88 = vector.broadcast %cst_25 : f32 to vector<8x512xf32>
    %89 = arith.mulf %88, %85 : vector<8x512xf32>
    %90 = arith.select %87, %85, %89 : vector<8x512xi1>, vector<8x512xf32>
    %91 = arith.truncf %90 : vector<8x512xf32> to vector<8x512xbf16>
    %c0_26 = arith.constant 0 : index
    %c0_27 = arith.constant 0 : index
    %92 = vector.load %arg5[%c0_26, %c0_27] : memref<512x256xbf16, #tpu.memory_space<vmem>>, vector<512x256xbf16>
    %cst_28 = arith.constant dense<0.000000e+00> : vector<8x256xf32>
    %93 = tpu.matmul %91, %92, %cst_28 {dimension_numbers = #tpu.dot_dimension_numbers<[1], [0], [0], [1], [0, 0, 1, 1], [], []>} : vector<8x512xbf16>, vector<512x256xbf16>, vector<8x256xf32> -> vector<8x256xf32>
    %c0_29 = arith.constant 0 : index
    %c896 = arith.constant 896 : index
    %94 = vector.load %arg6[%c0_29, %c896] : memref<1x1152xf32, #tpu.memory_space<vmem>>, vector<1x256xf32>
    %95 = vector.broadcast %94 : vector<1x256xf32> to vector<8x256xf32>
    %96 = arith.addf %93, %95 : vector<8x256xf32>
    %cst_30 = arith.constant 0.000000e+00 : f32
    %97 = vector.broadcast %cst_30 : f32 to vector<8x256xf32>
    %98 = arith.cmpf oge, %96, %97 : vector<8x256xf32>
    %cst_31 = arith.constant 0.00999999977 : f32
    %99 = vector.broadcast %cst_31 : f32 to vector<8x256xf32>
    %100 = arith.mulf %99, %96 : vector<8x256xf32>
    %101 = arith.select %98, %96, %100 : vector<8x256xi1>, vector<8x256xf32>
    %c4_i32 = arith.constant 4 : i32
    %102 = tpu.dynamic_rotate %101 by %c4_i32 dim 0 : vector<8x256xf32>, i32 -> vector<8x256xf32>
    %103 = arith.subf %101, %102 : vector<8x256xf32>
    %104 = math.absf %103 : vector<8x256xf32>
    %cst_32 = arith.constant dense<0.000000e+00> : vector<8xf32>
    %105 = vector.multi_reduction <add>, %104, %cst_32 [1] : vector<8x256xf32> to vector<8xf32>
    %106 = vector.shape_cast %105 : vector<8xf32> to vector<8x1xf32>
    %107 = tpu.iota {dimensions = array<i32: 0>} : vector<8x4xi32>
    %108 = tpu.iota {dimensions = array<i32: 1>} : vector<8x4xi32>
    %109 = arith.cmpi eq, %107, %108 : vector<8x4xi32>
    %cst_33 = arith.constant 0.000000e+00 : f32
    %110 = vector.shape_cast %106 : vector<8x1xf32> to vector<8x1xf32>
    %111 = vector.broadcast %110 : vector<8x1xf32> to vector<8x4xf32>
    %112 = vector.broadcast %cst_33 : f32 to vector<8x4xf32>
    %113 = arith.select %109, %111, %112 : vector<8x4xi1>, vector<8x4xf32>
    %cst_34 = arith.constant dense<0.000000e+00> : vector<4xf32>
    %114 = vector.multi_reduction <add>, %113, %cst_34 [0] : vector<8x4xf32> to vector<4xf32>
    %115 = vector.shape_cast %114 : vector<4xf32> to vector<1x4xf32>
    %c0_35 = arith.constant 0 : index
    %116 = memref.load %arg8[%c0_35] : memref<8xf32, #tpu.memory_space<smem>>
    %117 = vector.broadcast %116 : f32 to vector<1x4xf32>
    %118 = arith.mulf %115, %117 : vector<1x4xf32>
    %c1 = arith.constant 1 : index
    %119 = memref.load %arg8[%c1] : memref<8xf32, #tpu.memory_space<smem>>
    %120 = vector.broadcast %119 : f32 to vector<1x4xf32>
    %121 = arith.addf %118, %120 : vector<1x4xf32>
    %122 = arith.negf %121 : vector<1x4xf32>
    %123 = math.exp %122 : vector<1x4xf32>
    %cst_36 = arith.constant 1.000000e+00 : f32
    %124 = vector.broadcast %cst_36 : f32 to vector<1x4xf32>
    %125 = arith.addf %124, %123 : vector<1x4xf32>
    %126 = arith.divf %124, %125 : vector<1x4xf32>
    %c0_37 = arith.constant 0 : index
    %c0_38 = arith.constant 0 : index
    %127 = vector.load %arg7[%c0_37, %c0_38] : memref<320x1xf32, #tpu.memory_space<vmem>>, vector<64x1xf32>
    %c64 = arith.constant 64 : index
    %c0_39 = arith.constant 0 : index
    %128 = vector.load %arg7[%c64, %c0_39] : memref<320x1xf32, #tpu.memory_space<vmem>>, vector<64x1xf32>
    %c128 = arith.constant 128 : index
    %c0_40 = arith.constant 0 : index
    %129 = vector.load %arg7[%c128, %c0_40] : memref<320x1xf32, #tpu.memory_space<vmem>>, vector<64x1xf32>
    %c192 = arith.constant 192 : index
    %c0_41 = arith.constant 0 : index
    %130 = vector.load %arg7[%c192, %c0_41] : memref<320x1xf32, #tpu.memory_space<vmem>>, vector<64x1xf32>
    %c256_42 = arith.constant 256 : index
    %c0_43 = arith.constant 0 : index
    %131 = vector.load %arg7[%c256_42, %c0_43] : memref<320x1xf32, #tpu.memory_space<vmem>>, vector<64x1xf32>
    %132 = vector.broadcast %127 : vector<64x1xf32> to vector<64x4xf32>
    %133 = vector.broadcast %126 : vector<1x4xf32> to vector<64x4xf32>
    %134 = arith.mulf %132, %133 : vector<64x4xf32>
    %135 = vector.broadcast %128 : vector<64x1xf32> to vector<64x4xf32>
    %136 = arith.addf %134, %135 : vector<64x4xf32>
    %137 = math.tanh %136 : vector<64x4xf32>
    %138 = vector.broadcast %129 : vector<64x1xf32> to vector<64x4xf32>
    %139 = vector.broadcast %126 : vector<1x4xf32> to vector<64x4xf32>
    %140 = arith.mulf %138, %139 : vector<64x4xf32>
    %141 = vector.broadcast %130 : vector<64x1xf32> to vector<64x4xf32>
    %142 = arith.addf %140, %141 : vector<64x4xf32>
    %143 = arith.negf %142 : vector<64x4xf32>
    %144 = math.exp %143 : vector<64x4xf32>
    %cst_44 = arith.constant 1.000000e+00 : f32
    %145 = vector.broadcast %cst_44 : f32 to vector<64x4xf32>
    %146 = arith.addf %145, %144 : vector<64x4xf32>
    %147 = arith.divf %145, %146 : vector<64x4xf32>
    %148 = arith.mulf %137, %147 : vector<64x4xf32>
    %149 = vector.broadcast %131 : vector<64x1xf32> to vector<64x4xf32>
    %150 = arith.mulf %148, %149 : vector<64x4xf32>
    %cst_45 = arith.constant dense<0.000000e+00> : vector<4xf32>
    %151 = vector.multi_reduction <add>, %150, %cst_45 [0] : vector<64x4xf32> to vector<4xf32>
    %152 = vector.shape_cast %151 : vector<4xf32> to vector<1x4xf32>
    %c2 = arith.constant 2 : index
    %153 = memref.load %arg8[%c2] : memref<8xf32, #tpu.memory_space<smem>>
    %154 = vector.broadcast %153 : f32 to vector<1x4xf32>
    %155 = arith.addf %152, %154 : vector<1x4xf32>
    %cst_46 = arith.constant dense<0xFF800000> : vector<1xf32>
    %156 = vector.multi_reduction <maximumf>, %155, %cst_46 [1] : vector<1x4xf32> to vector<1xf32>
    %157 = vector.shape_cast %156 : vector<1xf32> to vector<1x1xf32>
    %158 = vector.broadcast %157 : vector<1x1xf32> to vector<1x4xf32>
    %159 = arith.subf %155, %158 : vector<1x4xf32>
    %160 = math.exp %159 : vector<1x4xf32>
    %cst_47 = arith.constant dense<0.000000e+00> : vector<1xf32>
    %161 = vector.multi_reduction <add>, %160, %cst_47 [1] : vector<1x4xf32> to vector<1xf32>
    %162 = vector.shape_cast %161 : vector<1xf32> to vector<1x1xf32>
    %163 = vector.broadcast %162 : vector<1x1xf32> to vector<1x4xf32>
    %164 = arith.divf %160, %163 : vector<1x4xf32>
    %165 = arith.mulf %164, %126 : vector<1x4xf32>
    %cst_48 = arith.constant dense<0.000000e+00> : vector<1xf32>
    %166 = vector.multi_reduction <add>, %165, %cst_48 [1] : vector<1x4xf32> to vector<1xf32>
    %167 = vector.shape_cast %166 : vector<1xf32> to vector<1x1xf32>
    %c3 = arith.constant 3 : index
    %168 = memref.load %arg8[%c3] : memref<8xf32, #tpu.memory_space<smem>>
    %169 = vector.broadcast %168 : f32 to vector<1x1xf32>
    %170 = arith.mulf %167, %169 : vector<1x1xf32>
    %c4 = arith.constant 4 : index
    %171 = memref.load %arg8[%c4] : memref<8xf32, #tpu.memory_space<smem>>
    %172 = vector.broadcast %171 : f32 to vector<1x1xf32>
    %173 = arith.addf %170, %172 : vector<1x1xf32>
    %174 = arith.negf %173 : vector<1x1xf32>
    %175 = math.exp %174 : vector<1x1xf32>
    %cst_49 = arith.constant 1.000000e+00 : f32
    %176 = vector.broadcast %cst_49 : f32 to vector<1x1xf32>
    %177 = arith.addf %176, %175 : vector<1x1xf32>
    %178 = arith.divf %176, %177 : vector<1x1xf32>
    %c0_50 = arith.constant 0 : index
    %c0_51 = arith.constant 0 : index
    %c0_52 = arith.constant 0 : index
    %179 = vector.load %arg9[%c0_50, %c0_51, %c0_52] : memref<1x1x1xf32, #tpu.memory_space<vmem>>, vector<1x1x1xf32>
    %180 = vector.shape_cast %179 : vector<1x1x1xf32> to vector<1x1xf32>
    %181 = vector.shape_cast %178 : vector<1x1xf32> to vector<1x1x1xf32>
    tpu.vector_store %arg9[%c0_50, %c0_51, %c0_52], %181 {strides = array<i32>} : memref<1x1x1xf32, #tpu.memory_space<vmem>>, vector<1x1x1xf32>,
    %c0_53 = arith.constant 0 : index
    %c0_54 = arith.constant 0 : index
    %c0_55 = arith.constant 0 : index
    %182 = vector.load %arg10[%c0_53, %c0_54, %c0_55] : memref<1x1x4xf32, #tpu.memory_space<vmem>>, vector<1x1x4xf32>
    %183 = vector.shape_cast %182 : vector<1x1x4xf32> to vector<1x4xf32>
    %184 = vector.shape_cast %164 : vector<1x4xf32> to vector<1x1x4xf32>
    tpu.vector_store %arg10[%c0_53, %c0_54, %c0_55], %184 {strides = array<i32>} : memref<1x1x4xf32, #tpu.memory_space<vmem>>, vector<1x1x4xf32>,
    return
  }
  func.func @transform_0(%arg0: i32) -> (i32, i32, i32) {
    %c0_i32 = arith.constant 0 : i32
    %c0_i32_0 = arith.constant 0 : i32
    %c0_i32_1 = arith.constant 0 : i32
    return %arg0, %c0_i32, %c0_i32_0 : i32, i32, i32
  }
  func.func @transform_1(%arg0: i32) -> (i32, i32) {
    %c0_i32 = arith.constant 0 : i32
    %c0_i32_0 = arith.constant 0 : i32
    %c0_i32_1 = arith.constant 0 : i32
    return %c0_i32, %c0_i32_0 : i32, i32
  }
  func.func @transform_2(%arg0: i32) -> (i32, i32) {
    %c0_i32 = arith.constant 0 : i32
    %c0_i32_0 = arith.constant 0 : i32
    %c0_i32_1 = arith.constant 0 : i32
    return %c0_i32, %c0_i32_0 : i32, i32
  }
  func.func @transform_3(%arg0: i32) -> (i32, i32) {
    %c0_i32 = arith.constant 0 : i32
    %c0_i32_0 = arith.constant 0 : i32
    %c0_i32_1 = arith.constant 0 : i32
    return %c0_i32, %c0_i32_0 : i32, i32
  }
  func.func @transform_4(%arg0: i32) -> (i32, i32) {
    %c0_i32 = arith.constant 0 : i32
    %c0_i32_0 = arith.constant 0 : i32
    %c0_i32_1 = arith.constant 0 : i32
    return %c0_i32, %c0_i32_0 : i32, i32
  }
  func.func @transform_5(%arg0: i32) -> (i32, i32) {
    %c0_i32 = arith.constant 0 : i32
    %c0_i32_0 = arith.constant 0 : i32
    %c0_i32_1 = arith.constant 0 : i32
    return %c0_i32, %c0_i32_0 : i32, i32
  }
  func.func @transform_6(%arg0: i32) -> (i32, i32) {
    %c0_i32 = arith.constant 0 : i32
    %c0_i32_0 = arith.constant 0 : i32
    %c0_i32_1 = arith.constant 0 : i32
    return %c0_i32, %c0_i32_0 : i32, i32
  }
  func.func @transform_7(%arg0: i32) -> i32 {
    %c0_i32 = arith.constant 0 : i32
    %c0_i32_0 = arith.constant 0 : i32
    return %c0_i32 : i32
  }
  func.func @transform_8(%arg0: i32) -> (i32, i32, i32) {
    %c0_i32 = arith.constant 0 : i32
    %c0_i32_0 = arith.constant 0 : i32
    %c0_i32_1 = arith.constant 0 : i32
    return %arg0, %c0_i32, %c0_i32_0 : i32, i32, i32
  }
  func.func @transform_9(%arg0: i32) -> (i32, i32, i32) {
    %c0_i32 = arith.constant 0 : i32
    %c0_i32_0 = arith.constant 0 : i32
    %c0_i32_1 = arith.constant 0 : i32
    return %arg0, %c0_i32, %c0_i32_0 : i32, i32, i32
  }
}

</mosaic_0001>

<llo_original>
// kernel: gated_attention_forward_batched.1
$region0: #{gated_attention_forward_batched.1}
  #allocation0 [shape = 'u32[]', space=smem, size = 0x4, offset = 0x4, fixed_abs, tag = 'smem constant byte address 0x4 - core index']
  #allocation1 [shape = 'u32[72,128]{1,0:T(1,128)}', space=vmem, size = 0x9000, scoped, tag = 'internal scratch']
  %s0 = inlined_call_operand.vmem [shape: f32[4,768,9], index: 0, kind: input, shape index: {}]
  %s1 = inlined_call_operand.vmem [shape: f32[9,256], index: 1, kind: input, shape index: {}]
  %s2 = inlined_call_operand.vmem [shape: bf16[1024,128], index: 2, kind: input, shape index: {}]
  %s3 = inlined_call_operand.vmem [shape: bf16[1408,512], index: 3, kind: input, shape index: {}]
  %s4 = inlined_call_operand.vmem [shape: bf16[512,256], index: 4, kind: input, shape index: {}]
  %s5 = inlined_call_operand.vmem [shape: f32[1,1152], index: 5, kind: input, shape index: {}]
  %s6 = inlined_call_operand.vmem [shape: f32[320,1], index: 6, kind: input, shape index: {}]
  %s7 = inlined_call_operand.vmem [shape: f32[8], index: 7, kind: input, shape index: {}]
  %s8 = inlined_call_operand.vmem [shape: f32[4,1,1], index: 8, kind: output, shape index: {0}]
  %s9 = inlined_call_operand.hbm [shape: f32[4,1,4], index: 9, kind: output, shape index: {1}]
  %10 = xla_tuple %s8, %s9
  %s11 = sld [smem:[#allocation0]]
  $region77: #{gated_attention_forward_batched.1} parent=0
    _
  %s13 = ssub.s32 1, %s11
  %s14 = scalar_select 0, %s13, %s11
  $region1: #{gated_attention_forward_batched.1} parent=0
    #allocation2 [shape = 'u8[512]{0}', space=smem, size = 0x200, scoped, tag = 'input window, operand 7, single buffered']
    #allocation3 [shape = 's32[2]{0}', space=sflag, size = 0x8, scoped, tag = 'scoped memory for gated_attention_forward_batched.1']
    #allocation4 [shape = 's32[2]{0}', space=sflag, size = 0x8, scoped, tag = 'scoped memory for gated_attention_forward_batched.1']
    #allocation5 [shape = 'u8[1024]{0}', space=vmem, size = 0x400, scoped, tag = 'output window, operand 1']
    %15 = vsyncpa [#allocation4], 0
    %16 = vsyncpa [#allocation3], 0
    %s17 = scalar_lea.sflag [#allocation3], 1
    %18 = vsyncpa %s17, 0
    loop: start=0, step=1, limit=6
    $region2: #{gated_attention_forward_batched.1} parent=1 // loop_pre_header
      _
    $region3: #{gated_attention_forward_batched.1} parent=1 // loop_header
      %s20 = sphi 0, %s24
      %p21 = scmp.ge.s32.totalorder %s20, 6
      %s30 = sphi 0, %s32
      %s33 = sphi 0, %s30
      %s34 = sphi 0, %s33
      %s50 = sphi 0, %s34
      %s54 = sphi 0, %s54
      %s56 = sphi 0, %s54
      %s57 = sphi 0, %s56
      %s71 = sphi 0, %s57
      %s75 = sphi 0, %s75
      %s77 = sphi 0, %s75
      %s78 = sphi 0, %s77
      %s92 = sphi 0, %s78
      %s96 = sphi 0, %s96
      %s98 = sphi 0, %s96
      %s99 = sphi 0, %s98
      %s113 = sphi 0, %s99
      %s117 = sphi 0, %s117
      %s119 = sphi 0, %s117
      %s120 = sphi 0, %s119
      %s134 = sphi 0, %s120
      %s138 = sphi 0, %s138
      %s140 = sphi 0, %s138
      %s141 = sphi 0, %s140
      %s155 = sphi 0, %s141
      %s159 = sphi 0, %s159
      %s161 = sphi 0, %s159
      %s162 = sphi 0, %s161
      %s176 = sphi 0, %s162
      %s180 = sphi 0, %s180
      %s182 = sphi 0, %s180
      %s183 = sphi 0, %s182
      %s197 = sphi 0, %s183
      %s203 = sphi 0, %s205
      %s206 = sphi 0, %s203
      %s207 = sphi 0, %s206
      %s223 = sphi 0, %s207
      %s229 = sphi 0, %s231
      %s232 = sphi 0, %s229
      %s233 = sphi 0, %s232
      %s249 = sphi 0, %s233
    $region4: #{gated_attention_forward_batched.1} parent=1 // loop_header_branch
      %23 = sbr.rel (%p21) target = $region8
    $region5: #{gated_attention_forward_batched.1} parent=1 // loop_body
      %s25 = ssub.s32 %s20, 1
      %s26 = ssub.s32 %s20, 2
      %s27 = sadd.s32 %s20, 1
      %s28 = ssub.s32 %s20, %s27
      %p29 = scmp.eq.s32.totalorder %s28, 0
      %s31 = sadd.s32 %s30, 1
      %s32 = scalar_select %p29, %s30, %s31
      %p35 = pneg %p29
      %p36 = scmp.eq.s32.totalorder %s20, 3
      %p37 = por %p35, %p36
      %p38 = scmp.ne.s32.totalorder %s30, %s33
      %p39 = scmp.eq.s32.totalorder %s20, 0
      %p40 = por %p38, %p39
      %p41 = scmp.ne.s32.totalorder %s30, %s33
      %p42 = scmp.eq.s32.totalorder %s25, 3
      %p43 = por %p41, %p42
      %p44 = scmp.ne.s32.totalorder %s33, %s34
      %p45 = scmp.eq.s32.totalorder %s25, 0
      %p46 = por %p44, %p45
      %p47 = scmp.ne.s32.totalorder %s33, %s34
      %p48 = scmp.eq.s32.totalorder %s26, 3
      %p49 = por %p47, %p48
      %p51 = scmp.ne.s32.totalorder %s34, %s50
      %p52 = scmp.eq.s32.totalorder %s26, 0
      %p53 = por %p51, %p52
      %s55 = sadd.s32 %s54, 1
      %p58 = scmp.eq.s32.totalorder %s20, 3
      %p59 = scmp.ne.s32.totalorder %s54, %s56
      %p60 = scmp.eq.s32.totalorder %s20, 0
      %p61 = por %p59, %p60
      %p62 = scmp.ne.s32.totalorder %s54, %s56
      %p63 = scmp.eq.s32.totalorder %s25, 3
      %p64 = por %p62, %p63
      %p65 = scmp.ne.s32.totalorder %s56, %s57
      %p66 = scmp.eq.s32.totalorder %s25, 0
      %p67 = por %p65, %p66
      %p68 = scmp.ne.s32.totalorder %s56, %s57
      %p69 = scmp.eq.s32.totalorder %s26, 3
      %p70 = por %p68, %p69
      %p72 = scmp.ne.s32.totalorder %s57, %s71
      %p73 = scmp.eq.s32.totalorder %s26, 0
      %p74 = por %p72, %p73
      %s76 = sadd.s32 %s75, 1
      %p79 = scmp.eq.s32.totalorder %s20, 3
      %p80 = scmp.ne.s32.totalorder %s75, %s77
      %p81 = scmp.eq.s32.totalorder %s20, 0
      %p82 = por %p80, %p81
      %p83 = scmp.ne.s32.totalorder %s75, %s77
      %p84 = scmp.eq.s32.totalorder %s25, 3
      %p85 = por %p83, %p84
      %p86 = scmp.ne.s32.totalorder %s77, %s78
      %p87 = scmp.eq.s32.totalorder %s25, 0
      %p88 = por %p86, %p87
      %p89 = scmp.ne.s32.totalorder %s77, %s78
      %p90 = scmp.eq.s32.totalorder %s26, 3
      %p91 = por %p89, %p90
      %p93 = scmp.ne.s32.totalorder %s78, %s92
      %p94 = scmp.eq.s32.totalorder %s26, 0
      %p95 = por %p93, %p94
      %s97 = sadd.s32 %s96, 1
      %p100 = scmp.eq.s32.totalorder %s20, 3
      %p101 = scmp.ne.s32.totalorder %s96, %s98
      %p102 = scmp.eq.s32.totalorder %s20, 0
      %p103 = por %p101, %p102
      %p104 = scmp.ne.s32.totalorder %s96, %s98
      %p105 = scmp.eq.s32.totalorder %s25, 3
      %p106 = por %p104, %p105
      %p107 = scmp.ne.s32.totalorder %s98, %s99
      %p108 = scmp.eq.s32.totalorder %s25, 0
      %p109 = por %p107, %p108
      %p110 = scmp.ne.s32.totalorder %s98, %s99
      %p111 = scmp.eq.s32.totalorder %s26, 3
      %p112 = por %p110, %p111
      %p114 = scmp.ne.s32.totalorder %s99, %s113
      %p115 = scmp.eq.s32.totalorder %s26, 0
      %p116 = por %p114, %p115
      %s118 = sadd.s32 %s117, 1
      %p121 = scmp.eq.s32.totalorder %s20, 3
      %p122 = scmp.ne.s32.totalorder %s117, %s119
      %p123 = scmp.eq.s32.totalorder %s20, 0
      %p124 = por %p122, %p123
      %p125 = scmp.ne.s32.totalorder %s117, %s119
      %p126 = scmp.eq.s32.totalorder %s25, 3
      %p127 = por %p125, %p126
      %p128 = scmp.ne.s32.totalorder %s119, %s120
      %p129 = scmp.eq.s32.totalorder %s25, 0
      %p130 = por %p128, %p129
      %p131 = scmp.ne.s32.totalorder %s119, %s120
      %p132 = scmp.eq.s32.totalorder %s26, 3
      %p133 = por %p131, %p132
      %p135 = scmp.ne.s32.totalorder %s120, %s134
      %p136 = scmp.eq.s32.totalorder %s26, 0
      %p137 = por %p135, %p136
      %s139 = sadd.s32 %s138, 1
      %p142 = scmp.eq.s32.totalorder %s20, 3
      %p143 = scmp.ne.s32.totalorder %s138, %s140
      %p144 = scmp.eq.s32.totalorder %s20, 0
      %p145 = por %p143, %p144
      %p146 = scmp.ne.s32.totalorder %s138, %s140
      %p147 = scmp.eq.s32.totalorder %s25, 3
      %p148 = por %p146, %p147
      %p149 = scmp.ne.s32.totalorder %s140, %s141
      %p150 = scmp.eq.s32.totalorder %s25, 0
      %p151 = por %p149, %p150
      %p152 = scmp.ne.s32.totalorder %s140, %s141
      %p153 = scmp.eq.s32.totalorder %s26, 3
      %p154 = por %p152, %p153
      %p156 = scmp.ne.s32.totalorder %s141, %s155
      %p157 = scmp.eq.s32.totalorder %s26, 0
      %p158 = por %p156, %p157
      %s160 = sadd.s32 %s159, 1
      %p163 = scmp.eq.s32.totalorder %s20, 3
      %p164 = scmp.ne.s32.totalorder %s159, %s161
      %p165 = scmp.eq.s32.totalorder %s20, 0
      %p166 = por %p164, %p165
      %p167 = scmp.ne.s32.totalorder %s159, %s161
      %p168 = scmp.eq.s32.totalorder %s25, 3
      %p169 = por %p167, %p168
      %p170 = scmp.ne.s32.totalorder %s161, %s162
      %p171 = scmp.eq.s32.totalorder %s25, 0
      %p172 = por %p170, %p171
      %p173 = scmp.ne.s32.totalorder %s161, %s162
      %p174 = scmp.eq.s32.totalorder %s26, 3
      %p175 = por %p173, %p174
      %p177 = scmp.ne.s32.totalorder %s162, %s176
      %p178 = scmp.eq.s32.totalorder %s26, 0
      %p179 = por %p177, %p178
      %s181 = sadd.s32 %s180, 1
      %p184 = scmp.eq.s32.totalorder %s20, 3
      %p185 = scmp.ne.s32.totalorder %s180, %s182
      %p186 = scmp.eq.s32.totalorder %s20, 0
      %p187 = por %p185, %p186
      %p188 = scmp.ne.s32.totalorder %s180, %s182
      %p189 = scmp.eq.s32.totalorder %s25, 3
      %p190 = por %p188, %p189
      %p191 = scmp.ne.s32.totalorder %s182, %s183
      %p192 = scmp.eq.s32.totalorder %s25, 0
      %p193 = por %p191, %p192
      %p194 = scmp.ne.s32.totalorder %s182, %s183
      %p195 = scmp.eq.s32.totalorder %s26, 3
      %p196 = por %p194, %p195
      %p198 = scmp.ne.s32.totalorder %s183, %s197
      %p199 = scmp.eq.s32.totalorder %s26, 0
      %p200 = por %p198, %p199
      %s201 = ssub.s32 %s20, %s27
      %p202 = scmp.eq.s32.totalorder %s201, 0
      %s204 = sadd.s32 %s203, 1
      %s205 = scalar_select %p202, %s203, %s204
      %p208 = pneg %p202
      %p209 = scmp.eq.s32.totalorder %s20, 3
      %p210 = por %p208, %p209
      %p211 = scmp.ne.s32.totalorder %s203, %s206
      %p212 = scmp.eq.s32.totalorder %s20, 0
      %p213 = por %p211, %p212
      %p214 = scmp.ne.s32.totalorder %s203, %s206
      %p215 = scmp.eq.s32.totalorder %s25, 3
      %p216 = por %p214, %p215
      %p217 = scmp.ne.s32.totalorder %s206, %s207
      %p218 = scmp.eq.s32.totalorder %s25, 0
      %p219 = por %p217, %p218
      %p220 = scmp.ne.s32.totalorder %s206, %s207
      %p221 = scmp.eq.s32.totalorder %s26, 3
      %p222 = por %p220, %p221
      %p224 = scmp.ne.s32.totalorder %s207, %s223
      %p225 = scmp.eq.s32.totalorder %s26, 0
      %p226 = por %p224, %p225
      %s227 = ssub.s32 %s20, %s27
      %p228 = scmp.eq.s32.totalorder %s227, 0
      %s230 = sadd.s32 %s229, 1
      %s231 = scalar_select %p228, %s229, %s230
      %p234 = pneg %p228
      %p235 = scmp.eq.s32.totalorder %s20, 3
      %p236 = por %p234, %p235
      %p237 = scmp.ne.s32.totalorder %s229, %s232
      %p238 = scmp.eq.s32.totalorder %s20, 0
      %p239 = por %p237, %p238
      %p240 = scmp.ne.s32.totalorder %s229, %s232
      %p241 = scmp.eq.s32.totalorder %s25, 3
      %p242 = por %p240, %p241
      %p243 = scmp.ne.s32.totalorder %s232, %s233
      %p244 = scmp.eq.s32.totalorder %s25, 0
      %p245 = por %p243, %p244
      %p246 = scmp.ne.s32.totalorder %s232, %s233
      %p247 = scmp.eq.s32.totalorder %s26, 3
      %p248 = por %p246, %p247
      %p250 = scmp.ne.s32.totalorder %s233, %s249
      %p251 = scmp.eq.s32.totalorder %s26, 0
      %p252 = por %p250, %p251
      %p253 = scmp.le.s32.totalorder 1, %s20
      %p254 = scmp.lt.s32.totalorder %s20, 5
      %p255 = pnand %p253, %p254
      %p256 = pneg %p255
      // Predicated region
      $region9: #{gated_attention_forward_batched.1} parent=5 // pred_check
        _
      $region10: #{gated_attention_forward_batched.1} parent=5 // pred_check_branch
        %258 = sbr.rel (%p255) target = $region12
      $region11: #{gated_attention_forward_batched.1} parent=5 // pred_region
        %s259 = ssub.s32 %s20, 1
        // Predicated region
        $region13: #{gated_attention_forward_batched.1} parent=11 // pred_check
          %p260 = pneg %p67
        $region14: #{gated_attention_forward_batched.1} parent=11 // pred_check_branch
          %262 = sbr.rel (%p260) target = $region16
        $region15: #{gated_attention_forward_batched.1} parent=11 // pred_region
          _
        $region16: #{gated_attention_forward_batched.1} parent=11 // pred_fallthru
          _
        // Predicated region
        $region17: #{gated_attention_forward_batched.1} parent=11 // pred_check
          %p263 = pneg %p88
        $region18: #{gated_attention_forward_batched.1} parent=11 // pred_check_branch
          %265 = sbr.rel (%p263) target = $region20
        $region19: #{gated_attention_forward_batched.1} parent=11 // pred_region
          _
        $region20: #{gated_attention_forward_batched.1} parent=11 // pred_fallthru
          _
        // Predicated region
        $region21: #{gated_attention_forward_batched.1} parent=11 // pred_check
          %p266 = pneg %p109
        $region22: #{gated_attention_forward_batched.1} parent=11 // pred_check_branch
          %268 = sbr.rel (%p266) target = $region24
        $region23: #{gated_attention_forward_batched.1} parent=11 // pred_region
          _
        $region24: #{gated_attention_forward_batched.1} parent=11 // pred_fallthru
          _
        // Predicated region
        $region25: #{gated_attention_forward_batched.1} parent=11 // pred_check
          %p269 = pneg %p130
        $region26: #{gated_attention_forward_batched.1} parent=11 // pred_check_branch
          %271 = sbr.rel (%p269) target = $region28
        $region27: #{gated_attention_forward_batched.1} parent=11 // pred_region
          _
        $region28: #{gated_attention_forward_batched.1} parent=11 // pred_fallthru
          _
        // Predicated region
        $region29: #{gated_attention_forward_batched.1} parent=11 // pred_check
          %p272 = pneg %p151
        $region30: #{gated_attention_forward_batched.1} parent=11 // pred_check_branch
          %274 = sbr.rel (%p272) target = $region32
        $region31: #{gated_attention_forward_batched.1} parent=11 // pred_region
          _
        $region32: #{gated_attention_forward_batched.1} parent=11 // pred_fallthru
          _
        // Predicated region
        $region33: #{gated_attention_forward_batched.1} parent=11 // pred_check
          %p275 = pneg %p172
        $region34: #{gated_attention_forward_batched.1} parent=11 // pred_check_branch
          %277 = sbr.rel (%p275) target = $region36
        $region35: #{gated_attention_forward_batched.1} parent=11 // pred_region
          _
        $region36: #{gated_attention_forward_batched.1} parent=11 // pred_fallthru
          _
        // Predicated region
        $region37: #{gated_attention_forward_batched.1} parent=11 // pred_check
          %p278 = pneg %p193
        $region38: #{gated_attention_forward_batched.1} parent=11 // pred_check_branch
          %280 = sbr.rel (%p278) target = $region40
        $region39: #{gated_attention_forward_batched.1} parent=11 // pred_region
          %282 = vsyncadd [#allocation4], 0
          %s284 = sshll.u32 %s7, 4
          %s285 = int_to_ptr.vmem [resolvable:$true] %s284
          %287 = dma.vmem_to_smem %s285, 16, [#allocation2], [#allocation4]
        $region40: #{gated_attention_forward_batched.1} parent=11 // pred_fallthru
          _
      $region12: #{gated_attention_forward_batched.1} parent=5 // pred_fallthru
        _
      %p288 = scmp.lt.s32.totalorder %s20, 4
      // Predicated region
      $region41: #{gated_attention_forward_batched.1} parent=5 // pred_check
        %p289 = pneg %p288
      $region42: #{gated_attention_forward_batched.1} parent=5 // pred_check_branch
        %291 = sbr.rel (%p289) target = $region44
      $region43: #{gated_attention_forward_batched.1} parent=5 // pred_region
        // Predicated region
        $region45: #{gated_attention_forward_batched.1} parent=43 // pred_check
          %p292 = pneg %p40
        $region46: #{gated_attention_forward_batched.1} parent=43 // pred_check_branch
          %294 = sbr.rel (%p292) target = $region48
        $region47: #{gated_attention_forward_batched.1} parent=43 // pred_region
          %p295 = scmp.lt.s32.totalorder %s20, 3
          %s296 = scalar_select %p295, %s20, 3
          %s297 = smul.addr %s296, 96
          %s298 = smul.addr %s297, 8
          %s299 = scalar_lea.vmem %s0, %s298
        $region48: #{gated_attention_forward_batched.1} parent=43 // pred_fallthru
          _
      $region44: #{gated_attention_forward_batched.1} parent=5 // pred_fallthru
        _
      %p300 = scmp.le.s32.totalorder 1, %s20
      %p301 = scmp.lt.s32.totalorder %s20, 5
      %p302 = pnand %p300, %p301
      %p303 = pneg %p302
      // Predicated region
      $region49: #{gated_attention_forward_batched.1} parent=5 // pred_check
        _
      $region50: #{gated_attention_forward_batched.1} parent=5 // pred_check_branch
        %305 = sbr.rel (%p302) target = $region52
      $region51: #{gated_attention_forward_batched.1} parent=5 // pred_region
        %s306 = ssub.s32 %s20, 1
        // Predicated region
        $region53: #{gated_attention_forward_batched.1} parent=51 // pred_check
          %p307 = pneg %p193
        $region54: #{gated_attention_forward_batched.1} parent=51 // pred_check_branch
          %309 = sbr.rel (%p307) target = $region56
        $region55: #{gated_attention_forward_batched.1} parent=51 // pred_region
          %311 = dma.done [#allocation4], 16
        $region56: #{gated_attention_forward_batched.1} parent=51 // pred_fallthru
          _
        %312 = sfence
        %p313 = scmp.lt.s32.totalorder %s25, 3
        %s314 = scalar_select %p313, %s25, 3
        %s315 = smul.addr %s314, 96
        %s316 = smul.addr %s315, 8
        %s317 = scalar_lea.vmem %s0, %s316
        %p318 = pneg %p46
        %p319 = pneg %p43
        %p320 = pneg %p67
        %p321 = pneg %p64
        %p322 = pneg %p88
        %p323 = pneg %p85
        %p324 = pneg %p109
        %p325 = pneg %p106
        %p326 = pneg %p130
        %p327 = pneg %p127
        %p328 = pneg %p151
        %p329 = pneg %p148
        %p330 = pneg %p172
        %p331 = pneg %p169
        %p332 = pneg %p193
        %p333 = pneg %p190
        %p334 = pneg %p219
        %p335 = pneg %p216
        %p336 = scmp.lt.s32.totalorder %s25, 3
        %s337 = scalar_select %p336, %s25, 3
        %s338 = scalar_lea.vmem %s8, %s337
        %p339 = pneg %p245
        %p340 = pneg %p242
        %s341 = sand.u32 %s232, 1
        %s342 = scalar_lea.sflag [#allocation3], %s341
        %s343 = sand.u32 %s232, 1
        %s344 = scalar_lea.vmem [#allocation5], %s343
        %p345 = scmp.lt.s32.totalorder %s25, 3
        %s346 = scalar_select %p345, %s25, 3
        %s347 = smul.addr %s346, 96
        %s348 = smul.addr %s347, 8
        %s349 = scalar_lea.vmem %s0, %s348
        %p350 = scmp.lt.s32.totalorder %s25, 3
        %s351 = scalar_select %p350, %s25, 3
        %s352 = scalar_lea.vmem %s8, %s351
        %v353 = vld [vmem:[%s349] sm:$0xff]
        %v354 = vld [vmem:[%s349 + $0x8] sm:$0xff]
        %v355 = vld [vmem:[%s349 + $0x10] sm:$0xff]
        %v356 = vld [vmem:[%s349 + $0x18] sm:$0xff]
        %v357 = vld [vmem:[%s349 + $0x20] sm:$0xff]
        %v358 = vld [vmem:[%s349 + $0x28] sm:$0xff]
        %v359 = vld [vmem:[%s349 + $0x30] sm:$0xff]
        %v360 = vld [vmem:[%s349 + $0x38] sm:$0xff]
        %v361 = vld [vmem:[%s349 + $0x40] sm:$0xff]
        %v362 = vld [vmem:[%s349 + $0x48] sm:$0xff]
        %v363 = vld [vmem:[%s349 + $0x50] sm:$0xff]
        %v364 = vld [vmem:[%s349 + $0x58] sm:$0xff]
        %v365 = vld [vmem:[%s349 + $0x60] sm:$0xff]
        %v366 = vld [vmem:[%s349 + $0x68] sm:$0xff]
        %v367 = vld [vmem:[%s349 + $0x70] sm:$0xff]
        %v368 = vld [vmem:[%s349 + $0x78] sm:$0xff]
        %v369 = vld [vmem:[%s349 + $0x80] sm:$0xff]
        %v370 = vld [vmem:[%s349 + $0x88] sm:$0xff]
        %v371 = vld [vmem:[%s349 + $0x90] sm:$0xff]
        %v372 = vld [vmem:[%s349 + $0x98] sm:$0xff]
        %v373 = vld [vmem:[%s349 + $0xa0] sm:$0xff]
        %v374 = vld [vmem:[%s349 + $0xa8] sm:$0xff]
        %v375 = vld [vmem:[%s349 + $0xb0] sm:$0xff]
        %v376 = vld [vmem:[%s349 + $0xb8] sm:$0xff]
        %v377 = vld [vmem:[%s349 + $0xc0] sm:$0xff]
        %v378 = vld [vmem:[%s349 + $0xc8] sm:$0xff]
        %v379 = vld [vmem:[%s349 + $0xd0] sm:$0xff]
        %v380 = vld [vmem:[%s349 + $0xd8] sm:$0xff]
        %v381 = vld [vmem:[%s349 + $0xe0] sm:$0xff]
        %v382 = vld [vmem:[%s349 + $0xe8] sm:$0xff]
        %v383 = vld [vmem:[%s349 + $0xf0] sm:$0xff]
        %v384 = vld [vmem:[%s349 + $0xf8] sm:$0xff]
        %v385 = vld [vmem:[%s349 + $0x100] sm:$0xff]
        %v386 = vld [vmem:[%s349 + $0x108] sm:$0xff]
        %v387 = vld [vmem:[%s349 + $0x110] sm:$0xff]
        %v388 = vld [vmem:[%s349 + $0x118] sm:$0xff]
        %v389 = vld [vmem:[%s349 + $0x120] sm:$0xff]
        %v390 = vld [vmem:[%s349 + $0x128] sm:$0xff]
        %v391 = vld [vmem:[%s349 + $0x130] sm:$0xff]
        %v392 = vld [vmem:[%s349 + $0x138] sm:$0xff]
        %v393 = vld [vmem:[%s349 + $0x140] sm:$0xff]
        %v394 = vld [vmem:[%s349 + $0x148] sm:$0xff]
        %v395 = vld [vmem:[%s349 + $0x150] sm:$0xff]
        %v396 = vld [vmem:[%s349 + $0x158] sm:$0xff]
        %v397 = vld [vmem:[%s349 + $0x160] sm:$0xff]
        %v398 = vld [vmem:[%s349 + $0x168] sm:$0xff]
        %v399 = vld [vmem:[%s349 + $0x170] sm:$0xff]
        %v400 = vld [vmem:[%s349 + $0x178] sm:$0xff]
        %v401 = vld [vmem:[%s349 + $0x180] sm:$0xff]
        %v402 = vld [vmem:[%s349 + $0x188] sm:$0xff]
        %v403 = vld [vmem:[%s349 + $0x190] sm:$0xff]
        %v404 = vld [vmem:[%s349 + $0x198] sm:$0xff]
        %v405 = vld [vmem:[%s349 + $0x1a0] sm:$0xff]
        %v406 = vld [vmem:[%s349 + $0x1a8] sm:$0xff]
        %v407 = vld [vmem:[%s349 + $0x1b0] sm:$0xff]
        %v408 = vld [vmem:[%s349 + $0x1b8] sm:$0xff]
        %v409 = vld [vmem:[%s349 + $0x1c0] sm:$0xff]
        %v410 = vld [vmem:[%s349 + $0x1c8] sm:$0xff]
        %v411 = vld [vmem:[%s349 + $0x1d0] sm:$0xff]
        %v412 = vld [vmem:[%s349 + $0x1d8] sm:$0xff]
        %v413 = vld [vmem:[%s349 + $0x1e0] sm:$0xff]
        %v414 = vld [vmem:[%s349 + $0x1e8] sm:$0xff]
        %v415 = vld [vmem:[%s349 + $0x1f0] sm:$0xff]
        %v416 = vld [vmem:[%s349 + $0x1f8] sm:$0xff]
        %v417 = vld [vmem:[%s349 + $0x200] sm:$0xff]
        %v418 = vld [vmem:[%s349 + $0x208] sm:$0xff]
        %v419 = vld [vmem:[%s349 + $0x210] sm:$0xff]
        %v420 = vld [vmem:[%s349 + $0x218] sm:$0xff]
        %v421 = vld [vmem:[%s349 + $0x220] sm:$0xff]
        %v422 = vld [vmem:[%s349 + $0x228] sm:$0xff]
        %v423 = vld [vmem:[%s349 + $0x230] sm:$0xff]
        %v424 = vld [vmem:[%s349 + $0x238] sm:$0xff]
        %v425 = vld [vmem:[%s349 + $0x240] sm:$0xff]
        %v426 = vld [vmem:[%s349 + $0x248] sm:$0xff]
        %v427 = vld [vmem:[%s349 + $0x250] sm:$0xff]
        %v428 = vld [vmem:[%s349 + $0x258] sm:$0xff]
        %v429 = vld [vmem:[%s349 + $0x260] sm:$0xff]
        %v430 = vld [vmem:[%s349 + $0x268] sm:$0xff]
        %v431 = vld [vmem:[%s349 + $0x270] sm:$0xff]
        %v432 = vld [vmem:[%s349 + $0x278] sm:$0xff]
        %v433 = vld [vmem:[%s349 + $0x280] sm:$0xff]
        %v434 = vld [vmem:[%s349 + $0x288] sm:$0xff]
        %v435 = vld [vmem:[%s349 + $0x290] sm:$0xff]
        %v436 = vld [vmem:[%s349 + $0x298] sm:$0xff]
        %v437 = vld [vmem:[%s349 + $0x2a0] sm:$0xff]
        %v438 = vld [vmem:[%s349 + $0x2a8] sm:$0xff]
        %v439 = vld [vmem:[%s349 + $0x2b0] sm:$0xff]
        %v440 = vld [vmem:[%s349 + $0x2b8] sm:$0xff]
        %v441 = vld [vmem:[%s349 + $0x2c0] sm:$0xff]
        %v442 = vld [vmem:[%s349 + $0x2c8] sm:$0xff]
        %v443 = vld [vmem:[%s349 + $0x2d0] sm:$0xff]
        %v444 = vld [vmem:[%s349 + $0x2d8] sm:$0xff]
        %v445 = vld [vmem:[%s349 + $0x2e0] sm:$0xff]
        %v446 = vld [vmem:[%s349 + $0x2e8] sm:$0xff]
        %v447 = vld [vmem:[%s349 + $0x2f0] sm:$0xff]
        %v448 = vld [vmem:[%s349 + $0x2f8] sm:$0xff]
        %v449 = vld [vmem:[%s1] sm:$0xff]
        %v450 = vld [vmem:[%s1 + $0x8] sm:$0xff]
        %v451 = vld [vmem:[%s1 + $0x10] sm:$0x1]
        %v452 = vld [vmem:[%s1 + $0x18] sm:$0x1]
        %vm453 = vcmask 72704
        %v455 = vsel %vm453, %v353, 0
        %v458 = vsel %vm453, %v354, 0
        %v461 = vsel %vm453, %v355, 0
        %v464 = vsel %vm453, %v356, 0
        %v467 = vsel %vm453, %v357, 0
        %v470 = vsel %vm453, %v358, 0
        %v473 = vsel %vm453, %v359, 0
        %v476 = vsel %vm453, %v360, 0
        %v479 = vsel %vm453, %v361, 0
        %v482 = vsel %vm453, %v362, 0
        %v485 = vsel %vm453, %v363, 0
        %v488 = vsel %vm453, %v364, 0
        %v491 = vsel %vm453, %v365, 0
        %v494 = vsel %vm453, %v366, 0
        %v497 = vsel %vm453, %v367, 0
        %v500 = vsel %vm453, %v368, 0
        %v503 = vsel %vm453, %v369, 0
        %v506 = vsel %vm453, %v370, 0
        %v509 = vsel %vm453, %v371, 0
        %v512 = vsel %vm453, %v372, 0
        %v515 = vsel %vm453, %v373, 0
        %v518 = vsel %vm453, %v374, 0
        %v521 = vsel %vm453, %v375, 0
        %v524 = vsel %vm453, %v376, 0
        %v527 = vsel %vm453, %v377, 0
        %v530 = vsel %vm453, %v378, 0
        %v533 = vsel %vm453, %v379, 0
        %v536 = vsel %vm453, %v380, 0
        %v539 = vsel %vm453, %v381, 0
        %v542 = vsel %vm453, %v382, 0
        %v545 = vsel %vm453, %v383, 0
        %v548 = vsel %vm453, %v384, 0
        %v551 = vsel %vm453, %v385, 0
        %v554 = vsel %vm453, %v386, 0
        %v557 = vsel %vm453, %v387, 0
        %v560 = vsel %vm453, %v388, 0
        %v563 = vsel %vm453, %v389, 0
        %v566 = vsel %vm453, %v390, 0
        %v569 = vsel %vm453, %v391, 0
        %v572 = vsel %vm453, %v392, 0
        %v575 = vsel %vm453, %v393, 0
        %v578 = vsel %vm453, %v394, 0
        %v581 = vsel %vm453, %v395, 0
        %v584 = vsel %vm453, %v396, 0
        %v587 = vsel %vm453, %v397, 0
        %v590 = vsel %vm453, %v398, 0
        %v593 = vsel %vm453, %v399, 0
        %v596 = vsel %vm453, %v400, 0
        %v599 = vsel %vm453, %v401, 0
        %v602 = vsel %vm453, %v402, 0
        %v605 = vsel %vm453, %v403, 0
        %v608 = vsel %vm453, %v404, 0
        %v611 = vsel %vm453, %v405, 0
        %v614 = vsel %vm453, %v406, 0
        %v617 = vsel %vm453, %v407, 0
        %v620 = vsel %vm453, %v408, 0
        %v623 = vsel %vm453, %v409, 0
        %v626 = vsel %vm453, %v410, 0
        %v629 = vsel %vm453, %v411, 0
        %v632 = vsel %vm453, %v412, 0
        %v635 = vsel %vm453, %v413, 0
        %v638 = vsel %vm453, %v414, 0
        %v641 = vsel %vm453, %v415, 0
        %v644 = vsel %vm453, %v416, 0
        %v647 = vsel %vm453, %v417, 0
        %v650 = vsel %vm453, %v418, 0
        %v653 = vsel %vm453, %v419, 0
        %v656 = vsel %vm453, %v420, 0
        %v659 = vsel %vm453, %v421, 0
        %v662 = vsel %vm453, %v422, 0
        %v665 = vsel %vm453, %v423, 0
        %v668 = vsel %vm453, %v424, 0
        %v671 = vsel %vm453, %v425, 0
        %v674 = vsel %vm453, %v426, 0
        %v677 = vsel %vm453, %v427, 0
        %v680 = vsel %vm453, %v428, 0
        %v683 = vsel %vm453, %v429, 0
        %v686 = vsel %vm453, %v430, 0
        %v689 = vsel %vm453, %v431, 0
        %v692 = vsel %vm453, %v432, 0
        %v695 = vsel %vm453, %v433, 0
        %v698 = vsel %vm453, %v434, 0
        %v701 = vsel %vm453, %v435, 0
        %v704 = vsel %vm453, %v436, 0
        %v707 = vsel %vm453, %v437, 0
        %v710 = vsel %vm453, %v438, 0
        %v713 = vsel %vm453, %v439, 0
        %v716 = vsel %vm453, %v440, 0
        %v719 = vsel %vm453, %v441, 0
        %v722 = vsel %vm453, %v442, 0
        %v725 = vsel %vm453, %v443, 0
        %v728 = vsel %vm453, %v444, 0
        %v731 = vsel %vm453, %v445, 0
        %v734 = vsel %vm453, %v446, 0
        %v737 = vsel %vm453, %v447, 0
        %v740 = vsel %vm453, %v448, 0
        %vm742 = vcmask 1040384
        %v744 = vsel %vm742, %v451, 0
        %v747 = vsel %vm742, %v452, 0
        %749 = vmatpush.msra.mxu0 0.0
        %750 = vmatpush.msra.mxu0 0.0
        %751 = vmatpush.msra.mxu0 0.0
        %752 = vmatpush.msra.mxu0 0.0
        %753 = vmatpush.msra.mxu0 0.0
        %754 = vmatpush.msra.mxu0 0.0
        %755 = vmatpush.msra.mxu0 0.0
        %756 = vmatpush.msra.mxu0 0.0
        %757 = vmatpush.msra.mxu0 0.0
        %758 = vmatpush.msra.mxu0 0.0
        %759 = vmatpush.msra.mxu0 0.0
        %760 = vmatpush.msra.mxu0 0.0
        %761 = vmatpush.msra.mxu0 0.0
        %762 = vmatpush.msra.mxu0 0.0
        %763 = vmatpush.msra.mxu0 %v744
        %764 = vmatpush.msra.mxu0 %v449
        %765 = vmatmul.f32.gmra.mxu0 %v455
        %v766 = vpop.f32.mrf.mxu0
        %v767 = vadd.f32 0.0, %v766
        %768 = vmatmul.f32.gmra.mxu0 %v458
        %v769 = vpop.f32.mrf.mxu0
        %v770 = vadd.f32 0.0, %v769
        %771 = vmatmul.f32.gmra.mxu0 %v461
        %v772 = vpop.f32.mrf.mxu0
        %v773 = vadd.f32 0.0, %v772
        %774 = vmatmul.f32.gmra.mxu0 %v464
        %v775 = vpop.f32.mrf.mxu0
        %v776 = vadd.f32 0.0, %v775
        %777 = vmatmul.f32.gmra.mxu0 %v467
        %v778 = vpop.f32.mrf.mxu0
        %v779 = vadd.f32 0.0, %v778
        %780 = vmatmul.f32.gmra.mxu0 %v470
        %v781 = vpop.f32.mrf.mxu0
        %v782 = vadd.f32 0.0, %v781
        %783 = vmatmul.f32.gmra.mxu0 %v473
        %v784 = vpop.f32.mrf.mxu0
        %v785 = vadd.f32 0.0, %v784
        %786 = vmatmul.f32.gmra.mxu0 %v476
        %v787 = vpop.f32.mrf.mxu0
        %v788 = vadd.f32 0.0, %v787
        %789 = vmatmul.f32.gmra.mxu0 %v479
        %v790 = vpop.f32.mrf.mxu0
        %v791 = vadd.f32 0.0, %v790
        %792 = vmatmul.f32.gmra.mxu0 %v482
        %v793 = vpop.f32.mrf.mxu0
        %v794 = vadd.f32 0.0, %v793
        %795 = vmatmul.f32.gmra.mxu0 %v485
        %v796 = vpop.f32.mrf.mxu0
        %v797 = vadd.f32 0.0, %v796
        %798 = vmatmul.f32.gmra.mxu0 %v488
        %v799 = vpop.f32.mrf.mxu0
        %v800 = vadd.f32 0.0, %v799
        %801 = vmatmul.f32.gmra.mxu0 %v491
        %v802 = vpop.f32.mrf.mxu0
        %v803 = vadd.f32 0.0, %v802
        %804 = vmatmul.f32.gmra.mxu0 %v494
        %v805 = vpop.f32.mrf.mxu0
        %v806 = vadd.f32 0.0, %v805
        %807 = vmatmul.f32.gmra.mxu0 %v497
        %v808 = vpop.f32.mrf.mxu0
        %v809 = vadd.f32 0.0, %v808
        %810 = vmatmul.f32.gmra.mxu0 %v500
        %v811 = vpop.f32.mrf.mxu0
        %v812 = vadd.f32 0.0, %v811
        %813 = vmatmul.f32.gmra.mxu0 %v503
        %v814 = vpop.f32.mrf.mxu0
        %v815 = vadd.f32 0.0, %v814
        %816 = vmatmul.f32.gmra.mxu0 %v506
        %v817 = vpop.f32.mrf.mxu0
        %v818 = vadd.f32 0.0, %v817
        %819 = vmatmul.f32.gmra.mxu0 %v509
        %v820 = vpop.f32.mrf.mxu0
        %v821 = vadd.f32 0.0, %v820
        %822 = vmatmul.f32.gmra.mxu0 %v512
        %v823 = vpop.f32.mrf.mxu0
        %v824 = vadd.f32 0.0, %v823
        %825 = vmatmul.f32.gmra.mxu0 %v515
        %v826 = vpop.f32.mrf.mxu0
        %v827 = vadd.f32 0.0, %v826
        %828 = vmatmul.f32.gmra.mxu0 %v518
        %v829 = vpop.f32.mrf.mxu0
        %v830 = vadd.f32 0.0, %v829
        %831 = vmatmul.f32.gmra.mxu0 %v521
        %v832 = vpop.f32.mrf.mxu0
        %v833 = vadd.f32 0.0, %v832
        %834 = vmatmul.f32.gmra.mxu0 %v524
        %v835 = vpop.f32.mrf.mxu0
        %v836 = vadd.f32 0.0, %v835
        %837 = vmatmul.f32.gmra.mxu0 %v527
        %v838 = vpop.f32.mrf.mxu0
        %v839 = vadd.f32 0.0, %v838
        %840 = vmatmul.f32.gmra.mxu0 %v530
        %v841 = vpop.f32.mrf.mxu0
        %v842 = vadd.f32 0.0, %v841
        %843 = vmatmul.f32.gmra.mxu0 %v533
        %v844 = vpop.f32.mrf.mxu0
        %v845 = vadd.f32 0.0, %v844
        %846 = vmatmul.f32.gmra.mxu0 %v536
        %v847 = vpop.f32.mrf.mxu0
        %v848 = vadd.f32 0.0, %v847
        %849 = vmatmul.f32.gmra.mxu0 %v539
        %v850 = vpop.f32.mrf.mxu0
        %v851 = vadd.f32 0.0, %v850
        %852 = vmatmul.f32.gmra.mxu0 %v542
        %v853 = vpop.f32.mrf.mxu0
        %v854 = vadd.f32 0.0, %v853
        %855 = vmatmul.f32.gmra.mxu0 %v545
        %v856 = vpop.f32.mrf.mxu0
        %v857 = vadd.f32 0.0, %v856
        %858 = vmatmul.f32.gmra.mxu0 %v548
        %v859 = vpop.f32.mrf.mxu0
        %v860 = vadd.f32 0.0, %v859
        %861 = vmatmul.f32.gmra.mxu0 %v551
        %v862 = vpop.f32.mrf.mxu0
        %v863 = vadd.f32 0.0, %v862
        %864 = vmatmul.f32.gmra.mxu0 %v554
        %v865 = vpop.f32.mrf.mxu0
        %v866 = vadd.f32 0.0, %v865
        %867 = vmatmul.f32.gmra.mxu0 %v557
        %v868 = vpop.f32.mrf.mxu0
        %v869 = vadd.f32 0.0, %v868
        %870 = vmatmul.f32.gmra.mxu0 %v560
        %v871 = vpop.f32.mrf.mxu0
        %v872 = vadd.f32 0.0, %v871
        %873 = vmatmul.f32.gmra.mxu0 %v563
        %v874 = vpop.f32.mrf.mxu0
        %v875 = vadd.f32 0.0, %v874
        %876 = vmatmul.f32.gmra.mxu0 %v566
        %v877 = vpop.f32.mrf.mxu0
        %v878 = vadd.f32 0.0, %v877
        %879 = vmatmul.f32.gmra.mxu0 %v569
        %v880 = vpop.f32.mrf.mxu0
        %v881 = vadd.f32 0.0, %v880
        %882 = vmatmul.f32.gmra.mxu0 %v572
        %v883 = vpop.f32.mrf.mxu0
        %v884 = vadd.f32 0.0, %v883
        %885 = vmatmul.f32.gmra.mxu0 %v575
        %v886 = vpop.f32.mrf.mxu0
        %v887 = vadd.f32 0.0, %v886
        %888 = vmatmul.f32.gmra.mxu0 %v578
        %v889 = vpop.f32.mrf.mxu0
        %v890 = vadd.f32 0.0, %v889
        %891 = vmatmul.f32.gmra.mxu0 %v581
        %v892 = vpop.f32.mrf.mxu0
        %v893 = vadd.f32 0.0, %v892
        %894 = vmatmul.f32.gmra.mxu0 %v584
        %v895 = vpop.f32.mrf.mxu0
        %v896 = vadd.f32 0.0, %v895
        %897 = vmatmul.f32.gmra.mxu0 %v587
        %v898 = vpop.f32.mrf.mxu0
        %v899 = vadd.f32 0.0, %v898
        %900 = vmatmul.f32.gmra.mxu0 %v590
        %v901 = vpop.f32.mrf.mxu0
        %v902 = vadd.f32 0.0, %v901
        %903 = vmatmul.f32.gmra.mxu0 %v593
        %v904 = vpop.f32.mrf.mxu0
        %v905 = vadd.f32 0.0, %v904
        %906 = vmatmul.f32.gmra.mxu0 %v596
        %v907 = vpop.f32.mrf.mxu0
        %v908 = vadd.f32 0.0, %v907
        %909 = vmatmul.f32.gmra.mxu0 %v599
        %v910 = vpop.f32.mrf.mxu0
        %v911 = vadd.f32 0.0, %v910
        %912 = vmatmul.f32.gmra.mxu0 %v602
        %v913 = vpop.f32.mrf.mxu0
        %v914 = vadd.f32 0.0, %v913
        %915 = vmatmul.f32.gmra.mxu0 %v605
        %v916 = vpop.f32.mrf.mxu0
        %v917 = vadd.f32 0.0, %v916
        %918 = vmatmul.f32.gmra.mxu0 %v608
        %v919 = vpop.f32.mrf.mxu0
        %v920 = vadd.f32 0.0, %v919
        %921 = vmatmul.f32.gmra.mxu0 %v611
        %v922 = vpop.f32.mrf.mxu0
        %v923 = vadd.f32 0.0, %v922
        %924 = vmatmul.f32.gmra.mxu0 %v614
        %v925 = vpop.f32.mrf.mxu0
        %v926 = vadd.f32 0.0, %v925
        %927 = vmatmul.f32.gmra.mxu0 %v617
        %v928 = vpop.f32.mrf.mxu0
        %v929 = vadd.f32 0.0, %v928
        %930 = vmatmul.f32.gmra.mxu0 %v620
        %v931 = vpop.f32.mrf.mxu0
        %v932 = vadd.f32 0.0, %v931
        %933 = vmatmul.f32.gmra.mxu0 %v623
        %v934 = vpop.f32.mrf.mxu0
        %v935 = vadd.f32 0.0, %v934
        %936 = vmatmul.f32.gmra.mxu0 %v626
        %v937 = vpop.f32.mrf.mxu0
        %v938 = vadd.f32 0.0, %v937
        %939 = vmatmul.f32.gmra.mxu0 %v629
        %v940 = vpop.f32.mrf.mxu0
        %v941 = vadd.f32 0.0, %v940
        %942 = vmatmul.f32.gmra.mxu0 %v632
        %v943 = vpop.f32.mrf.mxu0
        %v944 = vadd.f32 0.0, %v943
        %945 = vmatmul.f32.gmra.mxu0 %v635
        %v946 = vpop.f32.mrf.mxu0
        %v947 = vadd.f32 0.0, %v946
        %948 = vmatmul.f32.gmra.mxu0 %v638
        %v949 = vpop.f32.mrf.mxu0
        %v950 = vadd.f32 0.0, %v949
        %951 = vmatmul.f32.gmra.mxu0 %v641
        %v952 = vpop.f32.mrf.mxu0
        %v953 = vadd.f32 0.0, %v952
        %954 = vmatmul.f32.gmra.mxu0 %v644
        %v955 = vpop.f32.mrf.mxu0
        %v956 = vadd.f32 0.0, %v955
        %957 = vmatmul.f32.gmra.mxu0 %v647
        %v958 = vpop.f32.mrf.mxu0
        %v959 = vadd.f32 0.0, %v958
        %960 = vmatmul.f32.gmra.mxu0 %v650
        %v961 = vpop.f32.mrf.mxu0
        %v962 = vadd.f32 0.0, %v961
        %963 = vmatmul.f32.gmra.mxu0 %v653
        %v964 = vpop.f32.mrf.mxu0
        %v965 = vadd.f32 0.0, %v964
        %966 = vmatmul.f32.gmra.mxu0 %v656
        %v967 = vpop.f32.mrf.mxu0
        %v968 = vadd.f32 0.0, %v967
        %969 = vmatmul.f32.gmra.mxu0 %v659
        %v970 = vpop.f32.mrf.mxu0
        %v971 = vadd.f32 0.0, %v970
        %972 = vmatmul.f32.gmra.mxu0 %v662
        %v973 = vpop.f32.mrf.mxu0
        %v974 = vadd.f32 0.0, %v973
        %975 = vmatmul.f32.gmra.mxu0 %v665
        %v976 = vpop.f32.mrf.mxu0
        %v977 = vadd.f32 0.0, %v976
        %978 = vmatmul.f32.gmra.mxu0 %v668
        %v979 = vpop.f32.mrf.mxu0
        %v980 = vadd.f32 0.0, %v979
        %981 = vmatmul.f32.gmra.mxu0 %v671
        %v982 = vpop.f32.mrf.mxu0
        %v983 = vadd.f32 0.0, %v982
        %984 = vmatmul.f32.gmra.mxu0 %v674
        %v985 = vpop.f32.mrf.mxu0
        %v986 = vadd.f32 0.0, %v985
        %987 = vmatmul.f32.gmra.mxu0 %v677
        %v988 = vpop.f32.mrf.mxu0
        %v989 = vadd.f32 0.0, %v988
        %990 = vmatmul.f32.gmra.mxu0 %v680
        %v991 = vpop.f32.mrf.mxu0
        %v992 = vadd.f32 0.0, %v991
        %993 = vmatmul.f32.gmra.mxu0 %v683
        %v994 = vpop.f32.mrf.mxu0
        %v995 = vadd.f32 0.0, %v994
        %996 = vmatmul.f32.gmra.mxu0 %v686
        %v997 = vpop.f32.mrf.mxu0
        %v998 = vadd.f32 0.0, %v997
        %999 = vmatmul.f32.gmra.mxu0 %v689
        %v1000 = vpop.f32.mrf.mxu0
        %v1001 = vadd.f32 0.0, %v1000
        %1002 = vmatmul.f32.gmra.mxu0 %v692
        %v1003 = vpop.f32.mrf.mxu0
        %v1004 = vadd.f32 0.0, %v1003
        %1005 = vmatmul.f32.gmra.mxu0 %v695
        %v1006 = vpop.f32.mrf.mxu0
        %v1007 = vadd.f32 0.0, %v1006
        %1008 = vmatmul.f32.gmra.mxu0 %v698
        %v1009 = vpop.f32.mrf.mxu0
        %v1010 = vadd.f32 0.0, %v1009
        %1011 = vmatmul.f32.gmra.mxu0 %v701
        %v1012 = vpop.f32.mrf.mxu0
        %v1013 = vadd.f32 0.0, %v1012
        %1014 = vmatmul.f32.gmra.mxu0 %v704
        %v1015 = vpop.f32.mrf.mxu0
        %v1016 = vadd.f32 0.0, %v1015
        %1017 = vmatmul.f32.gmra.mxu0 %v707
        %v1018 = vpop.f32.mrf.mxu0
        %v1019 = vadd.f32 0.0, %v1018
        %1020 = vmatmul.f32.gmra.mxu0 %v710
        %v1021 = vpop.f32.mrf.mxu0
        %v1022 = vadd.f32 0.0, %v1021
        %1023 = vmatmul.f32.gmra.mxu0 %v713
        %v1024 = vpop.f32.mrf.mxu0
        %v1025 = vadd.f32 0.0, %v1024
        %1026 = vmatmul.f32.gmra.mxu0 %v716
        %v1027 = vpop.f32.mrf.mxu0
        %v1028 = vadd.f32 0.0, %v1027
        %1029 = vmatmul.f32.gmra.mxu0 %v719
        %v1030 = vpop.f32.mrf.mxu0
        %v1031 = vadd.f32 0.0, %v1030
        %1032 = vmatmul.f32.gmra.mxu0 %v722
        %v1033 = vpop.f32.mrf.mxu0
        %v1034 = vadd.f32 0.0, %v1033
        %1035 = vmatmul.f32.gmra.mxu0 %v725
        %v1036 = vpop.f32.mrf.mxu0
        %v1037 = vadd.f32 0.0, %v1036
        %1038 = vmatmul.f32.gmra.mxu0 %v728
        %v1039 = vpop.f32.mrf.mxu0
        %v1040 = vadd.f32 0.0, %v1039
        %1041 = vmatmul.f32.gmra.mxu0 %v731
        %v1042 = vpop.f32.mrf.mxu0
        %v1043 = vadd.f32 0.0, %v1042
        %1044 = vmatmul.f32.gmra.mxu0 %v734
        %v1045 = vpop.f32.mrf.mxu0
        %v1046 = vadd.f32 0.0, %v1045
        %1047 = vmatmul.f32.gmra.mxu0 %v737
        %v1048 = vpop.f32.mrf.mxu0
        %v1049 = vadd.f32 0.0, %v1048
        %1050 = vmatmul.f32.gmra.mxu0 %v740
        %v1051 = vpop.f32.mrf.mxu0
        %v1052 = vadd.f32 0.0, %v1051
        %1053 = vdwg.mxu0
        %1054 = vmatpush.msra.mxu0 0.0
        %1055 = vmatpush.msra.mxu0 0.0
        %1056 = vmatpush.msra.mxu0 0.0
        %1057 = vmatpush.msra.mxu0 0.0
        %1058 = vmatpush.msra.mxu0 0.0
        %1059 = vmatpush.msra.mxu0 0.0
        %1060 = vmatpush.msra.mxu0 0.0
        %1061 = vmatpush.msra.mxu0 0.0
        %1062 = vmatpush.msra.mxu0 0.0
        %1063 = vmatpush.msra.mxu0 0.0
        %1064 = vmatpush.msra.mxu0 0.0
        %1065 = vmatpush.msra.mxu0 0.0
        %1066 = vmatpush.msra.mxu0 0.0
        %1067 = vmatpush.msra.mxu0 0.0
        %1068 = vmatpush.msra.mxu0 %v747
        %1069 = vmatpush.msra.mxu0 %v450
        %1070 = vmatmul.f32.gmra.mxu0 %v455
        %v1071 = vpop.f32.mrf.mxu0
        %v1072 = vadd.f32 0.0, %v1071
        %1073 = vmatmul.f32.gmra.mxu0 %v458
        %v1074 = vpop.f32.mrf.mxu0
        %v1075 = vadd.f32 0.0, %v1074
        %1076 = vmatmul.f32.gmra.mxu0 %v461
        %v1077 = vpop.f32.mrf.mxu0
        %v1078 = vadd.f32 0.0, %v1077
        %1079 = vmatmul.f32.gmra.mxu0 %v464
        %v1080 = vpop.f32.mrf.mxu0
        %v1081 = vadd.f32 0.0, %v1080
        %1082 = vmatmul.f32.gmra.mxu0 %v467
        %v1083 = vpop.f32.mrf.mxu0
        %v1084 = vadd.f32 0.0, %v1083
        %1085 = vmatmul.f32.gmra.mxu0 %v470
        %v1086 = vpop.f32.mrf.mxu0
        %v1087 = vadd.f32 0.0, %v1086
        %1088 = vmatmul.f32.gmra.mxu0 %v473
        %v1089 = vpop.f32.mrf.mxu0
        %v1090 = vadd.f32 0.0, %v1089
        %1091 = vmatmul.f32.gmra.mxu0 %v476
        %v1092 = vpop.f32.mrf.mxu0
        %v1093 = vadd.f32 0.0, %v1092
        %1094 = vmatmul.f32.gmra.mxu0 %v479
        %v1095 = vpop.f32.mrf.mxu0
        %v1096 = vadd.f32 0.0, %v1095
        %1097 = vmatmul.f32.gmra.mxu0 %v482
        %v1098 = vpop.f32.mrf.mxu0
        %v1099 = vadd.f32 0.0, %v1098
        %1100 = vmatmul.f32.gmra.mxu0 %v485
        %v1101 = vpop.f32.mrf.mxu0
        %v1102 = vadd.f32 0.0, %v1101
        %1103 = vmatmul.f32.gmra.mxu0 %v488
        %v1104 = vpop.f32.mrf.mxu0
        %v1105 = vadd.f32 0.0, %v1104
        %1106 = vmatmul.f32.gmra.mxu0 %v491
        %v1107 = vpop.f32.mrf.mxu0
        %v1108 = vadd.f32 0.0, %v1107
        %1109 = vmatmul.f32.gmra.mxu0 %v494
        %v1110 = vpop.f32.mrf.mxu0
        %v1111 = vadd.f32 0.0, %v1110
        %1112 = vmatmul.f32.gmra.mxu0 %v497
        %v1113 = vpop.f32.mrf.mxu0
        %v1114 = vadd.f32 0.0, %v1113
        %1115 = vmatmul.f32.gmra.mxu0 %v500
        %v1116 = vpop.f32.mrf.mxu0
        %v1117 = vadd.f32 0.0, %v1116
        %1118 = vmatmul.f32.gmra.mxu0 %v503
        %v1119 = vpop.f32.mrf.mxu0
        %v1120 = vadd.f32 0.0, %v1119
        %1121 = vmatmul.f32.gmra.mxu0 %v506
        %v1122 = vpop.f32.mrf.mxu0
        %v1123 = vadd.f32 0.0, %v1122
        %1124 = vmatmul.f32.gmra.mxu0 %v509
        %v1125 = vpop.f32.mrf.mxu0
        %v1126 = vadd.f32 0.0, %v1125
        %1127 = vmatmul.f32.gmra.mxu0 %v512
        %v1128 = vpop.f32.mrf.mxu0
        %v1129 = vadd.f32 0.0, %v1128
        %1130 = vmatmul.f32.gmra.mxu0 %v515
        %v1131 = vpop.f32.mrf.mxu0
        %v1132 = vadd.f32 0.0, %v1131
        %1133 = vmatmul.f32.gmra.mxu0 %v518
        %v1134 = vpop.f32.mrf.mxu0
        %v1135 = vadd.f32 0.0, %v1134
        %1136 = vmatmul.f32.gmra.mxu0 %v521
        %v1137 = vpop.f32.mrf.mxu0
        %v1138 = vadd.f32 0.0, %v1137
        %1139 = vmatmul.f32.gmra.mxu0 %v524
        %v1140 = vpop.f32.mrf.mxu0
        %v1141 = vadd.f32 0.0, %v1140
        %1142 = vmatmul.f32.gmra.mxu0 %v527
        %v1143 = vpop.f32.mrf.mxu0
        %v1144 = vadd.f32 0.0, %v1143
        %1145 = vmatmul.f32.gmra.mxu0 %v530
        %v1146 = vpop.f32.mrf.mxu0
        %v1147 = vadd.f32 0.0, %v1146
        %1148 = vmatmul.f32.gmra.mxu0 %v533
        %v1149 = vpop.f32.mrf.mxu0
        %v1150 = vadd.f32 0.0, %v1149
        %1151 = vmatmul.f32.gmra.mxu0 %v536
        %v1152 = vpop.f32.mrf.mxu0
        %v1153 = vadd.f32 0.0, %v1152
        %1154 = vmatmul.f32.gmra.mxu0 %v539
        %v1155 = vpop.f32.mrf.mxu0
        %v1156 = vadd.f32 0.0, %v1155
        %1157 = vmatmul.f32.gmra.mxu0 %v542
        %v1158 = vpop.f32.mrf.mxu0
        %v1159 = vadd.f32 0.0, %v1158
        %1160 = vmatmul.f32.gmra.mxu0 %v545
        %v1161 = vpop.f32.mrf.mxu0
        %v1162 = vadd.f32 0.0, %v1161
        %1163 = vmatmul.f32.gmra.mxu0 %v548
        %v1164 = vpop.f32.mrf.mxu0
        %v1165 = vadd.f32 0.0, %v1164
        %1166 = vmatmul.f32.gmra.mxu0 %v551
        %v1167 = vpop.f32.mrf.mxu0
        %v1168 = vadd.f32 0.0, %v1167
        %1169 = vmatmul.f32.gmra.mxu0 %v554
        %v1170 = vpop.f32.mrf.mxu0
        %v1171 = vadd.f32 0.0, %v1170
        %1172 = vmatmul.f32.gmra.mxu0 %v557
        %v1173 = vpop.f32.mrf.mxu0
        %v1174 = vadd.f32 0.0, %v1173
        %1175 = vmatmul.f32.gmra.mxu0 %v560
        %v1176 = vpop.f32.mrf.mxu0
        %v1177 = vadd.f32 0.0, %v1176
        %1178 = vmatmul.f32.gmra.mxu0 %v563
        %v1179 = vpop.f32.mrf.mxu0
        %v1180 = vadd.f32 0.0, %v1179
        %1181 = vmatmul.f32.gmra.mxu0 %v566
        %v1182 = vpop.f32.mrf.mxu0
        %v1183 = vadd.f32 0.0, %v1182
        %1184 = vmatmul.f32.gmra.mxu0 %v569
        %v1185 = vpop.f32.mrf.mxu0
        %v1186 = vadd.f32 0.0, %v1185
        %1187 = vmatmul.f32.gmra.mxu0 %v572
        %v1188 = vpop.f32.mrf.mxu0
        %v1189 = vadd.f32 0.0, %v1188
        %1190 = vmatmul.f32.gmra.mxu0 %v575
        %v1191 = vpop.f32.mrf.mxu0
        %v1192 = vadd.f32 0.0, %v1191
        %1193 = vmatmul.f32.gmra.mxu0 %v578
        %v1194 = vpop.f32.mrf.mxu0
        %v1195 = vadd.f32 0.0, %v1194
        %1196 = vmatmul.f32.gmra.mxu0 %v581
        %v1197 = vpop.f32.mrf.mxu0
        %v1198 = vadd.f32 0.0, %v1197
        %1199 = vmatmul.f32.gmra.mxu0 %v584
        %v1200 = vpop.f32.mrf.mxu0
        %v1201 = vadd.f32 0.0, %v1200
        %1202 = vmatmul.f32.gmra.mxu0 %v587
        %v1203 = vpop.f32.mrf.mxu0
        %v1204 = vadd.f32 0.0, %v1203
        %1205 = vmatmul.f32.gmra.mxu0 %v590
        %v1206 = vpop.f32.mrf.mxu0
        %v1207 = vadd.f32 0.0, %v1206
        %1208 = vmatmul.f32.gmra.mxu0 %v593
        %v1209 = vpop.f32.mrf.mxu0
        %v1210 = vadd.f32 0.0, %v1209
        %1211 = vmatmul.f32.gmra.mxu0 %v596
        %v1212 = vpop.f32.mrf.mxu0
        %v1213 = vadd.f32 0.0, %v1212
        %1214 = vmatmul.f32.gmra.mxu0 %v599
        %v1215 = vpop.f32.mrf.mxu0
        %v1216 = vadd.f32 0.0, %v1215
        %1217 = vmatmul.f32.gmra.mxu0 %v602
        %v1218 = vpop.f32.mrf.mxu0
        %v1219 = vadd.f32 0.0, %v1218
        %1220 = vmatmul.f32.gmra.mxu0 %v605
        %v1221 = vpop.f32.mrf.mxu0
        %v1222 = vadd.f32 0.0, %v1221
        %1223 = vmatmul.f32.gmra.mxu0 %v608
        %v1224 = vpop.f32.mrf.mxu0
        %v1225 = vadd.f32 0.0, %v1224
        %1226 = vmatmul.f32.gmra.mxu0 %v611
        %v1227 = vpop.f32.mrf.mxu0
        %v1228 = vadd.f32 0.0, %v1227
        %1229 = vmatmul.f32.gmra.mxu0 %v614
        %v1230 = vpop.f32.mrf.mxu0
        %v1231 = vadd.f32 0.0, %v1230
        %1232 = vmatmul.f32.gmra.mxu0 %v617
        %v1233 = vpop.f32.mrf.mxu0
        %v1234 = vadd.f32 0.0, %v1233
        %1235 = vmatmul.f32.gmra.mxu0 %v620
        %v1236 = vpop.f32.mrf.mxu0
        %v1237 = vadd.f32 0.0, %v1236
        %1238 = vmatmul.f32.gmra.mxu0 %v623
        %v1239 = vpop.f32.mrf.mxu0
        %v1240 = vadd.f32 0.0, %v1239
        %1241 = vmatmul.f32.gmra.mxu0 %v626
        %v1242 = vpop.f32.mrf.mxu0
        %v1243 = vadd.f32 0.0, %v1242
        %1244 = vmatmul.f32.gmra.mxu0 %v629
        %v1245 = vpop.f32.mrf.mxu0
        %v1246 = vadd.f32 0.0, %v1245
        %1247 = vmatmul.f32.gmra.mxu0 %v632
        %v1248 = vpop.f32.mrf.mxu0
        %v1249 = vadd.f32 0.0, %v1248
        %1250 = vmatmul.f32.gmra.mxu0 %v635
        %v1251 = vpop.f32.mrf.mxu0
        %v1252 = vadd.f32 0.0, %v1251
        %1253 = vmatmul.f32.gmra.mxu0 %v638
        %v1254 = vpop.f32.mrf.mxu0
        %v1255 = vadd.f32 0.0, %v1254
        %1256 = vmatmul.f32.gmra.mxu0 %v641
        %v1257 = vpop.f32.mrf.mxu0
        %v1258 = vadd.f32 0.0, %v1257
        %1259 = vmatmul.f32.gmra.mxu0 %v644
        %v1260 = vpop.f32.mrf.mxu0
        %v1261 = vadd.f32 0.0, %v1260
        %1262 = vmatmul.f32.gmra.mxu0 %v647
        %v1263 = vpop.f32.mrf.mxu0
        %v1264 = vadd.f32 0.0, %v1263
        %1265 = vmatmul.f32.gmra.mxu0 %v650
        %v1266 = vpop.f32.mrf.mxu0
        %v1267 = vadd.f32 0.0, %v1266
        %1268 = vmatmul.f32.gmra.mxu0 %v653
        %v1269 = vpop.f32.mrf.mxu0
        %v1270 = vadd.f32 0.0, %v1269
        %1271 = vmatmul.f32.gmra.mxu0 %v656
        %v1272 = vpop.f32.mrf.mxu0
        %v1273 = vadd.f32 0.0, %v1272
        %1274 = vmatmul.f32.gmra.mxu0 %v659
        %v1275 = vpop.f32.mrf.mxu0
        %v1276 = vadd.f32 0.0, %v1275
        %1277 = vmatmul.f32.gmra.mxu0 %v662
        %v1278 = vpop.f32.mrf.mxu0
        %v1279 = vadd.f32 0.0, %v1278
        %1280 = vmatmul.f32.gmra.mxu0 %v665
        %v1281 = vpop.f32.mrf.mxu0
        %v1282 = vadd.f32 0.0, %v1281
        %1283 = vmatmul.f32.gmra.mxu0 %v668
        %v1284 = vpop.f32.mrf.mxu0
        %v1285 = vadd.f32 0.0, %v1284
        %1286 = vmatmul.f32.gmra.mxu0 %v671
        %v1287 = vpop.f32.mrf.mxu0
        %v1288 = vadd.f32 0.0, %v1287
        %1289 = vmatmul.f32.gmra.mxu0 %v674
        %v1290 = vpop.f32.mrf.mxu0
        %v1291 = vadd.f32 0.0, %v1290
        %1292 = vmatmul.f32.gmra.mxu0 %v677
        %v1293 = vpop.f32.mrf.mxu0
        %v1294 = vadd.f32 0.0, %v1293
        %1295 = vmatmul.f32.gmra.mxu0 %v680
        %v1296 = vpop.f32.mrf.mxu0
        %v1297 = vadd.f32 0.0, %v1296
        %1298 = vmatmul.f32.gmra.mxu0 %v683
        %v1299 = vpop.f32.mrf.mxu0
        %v1300 = vadd.f32 0.0, %v1299
        %1301 = vmatmul.f32.gmra.mxu0 %v686
        %v1302 = vpop.f32.mrf.mxu0
        %v1303 = vadd.f32 0.0, %v1302
        %1304 = vmatmul.f32.gmra.mxu0 %v689
        %v1305 = vpop.f32.mrf.mxu0
        %v1306 = vadd.f32 0.0, %v1305
        %1307 = vmatmul.f32.gmra.mxu0 %v692
        %v1308 = vpop.f32.mrf.mxu0
        %v1309 = vadd.f32 0.0, %v1308
        %1310 = vmatmul.f32.gmra.mxu0 %v695
        %v1311 = vpop.f32.mrf.mxu0
        %v1312 = vadd.f32 0.0, %v1311
        %1313 = vmatmul.f32.gmra.mxu0 %v698
        %v1314 = vpop.f32.mrf.mxu0
        %v1315 = vadd.f32 0.0, %v1314
        %1316 = vmatmul.f32.gmra.mxu0 %v701
        %v1317 = vpop.f32.mrf.mxu0
        %v1318 = vadd.f32 0.0, %v1317
        %1319 = vmatmul.f32.gmra.mxu0 %v704
        %v1320 = vpop.f32.mrf.mxu0
        %v1321 = vadd.f32 0.0, %v1320
        %1322 = vmatmul.f32.gmra.mxu0 %v707
        %v1323 = vpop.f32.mrf.mxu0
        %v1324 = vadd.f32 0.0, %v1323
        %1325 = vmatmul.f32.gmra.mxu0 %v710
        %v1326 = vpop.f32.mrf.mxu0
        %v1327 = vadd.f32 0.0, %v1326
        %1328 = vmatmul.f32.gmra.mxu0 %v713
        %v1329 = vpop.f32.mrf.mxu0
        %v1330 = vadd.f32 0.0, %v1329
        %1331 = vmatmul.f32.gmra.mxu0 %v716
        %v1332 = vpop.f32.mrf.mxu0
        %v1333 = vadd.f32 0.0, %v1332
        %1334 = vmatmul.f32.gmra.mxu0 %v719
        %v1335 = vpop.f32.mrf.mxu0
        %v1336 = vadd.f32 0.0, %v1335
        %1337 = vmatmul.f32.gmra.mxu0 %v722
        %v1338 = vpop.f32.mrf.mxu0
        %v1339 = vadd.f32 0.0, %v1338
        %1340 = vmatmul.f32.gmra.mxu0 %v725
        %v1341 = vpop.f32.mrf.mxu0
        %v1342 = vadd.f32 0.0, %v1341
        %1343 = vmatmul.f32.gmra.mxu0 %v728
        %v1344 = vpop.f32.mrf.mxu0
        %v1345 = vadd.f32 0.0, %v1344
        %1346 = vmatmul.f32.gmra.mxu0 %v731
        %v1347 = vpop.f32.mrf.mxu0
        %v1348 = vadd.f32 0.0, %v1347
        %1349 = vmatmul.f32.gmra.mxu0 %v734
        %v1350 = vpop.f32.mrf.mxu0
        %v1351 = vadd.f32 0.0, %v1350
        %1352 = vmatmul.f32.gmra.mxu0 %v737
        %v1353 = vpop.f32.mrf.mxu0
        %v1354 = vadd.f32 0.0, %v1353
        %1355 = vmatmul.f32.gmra.mxu0 %v740
        %v1356 = vpop.f32.mrf.mxu0
        %v1357 = vadd.f32 0.0, %v1356
        %1358 = vdwg.mxu0
        %v1359 = vld [vmem:[%s5] sm:$0x3]
        %v1360 = vmax.f32 %v767, %v803
        %v1361 = vmax.f32 %v1072, %v1108
        %v1362 = vmax.f32 %v770, %v806
        %v1363 = vmax.f32 %v1075, %v1111
        %v1364 = vmax.f32 %v773, %v809
        %v1365 = vmax.f32 %v1078, %v1114
        %v1366 = vmax.f32 %v776, %v812
        %v1367 = vmax.f32 %v1081, %v1117
        %v1368 = vmax.f32 %v779, %v815
        %v1369 = vmax.f32 %v1084, %v1120
        %v1370 = vmax.f32 %v782, %v818
        %v1371 = vmax.f32 %v1087, %v1123
        %v1372 = vmax.f32 %v785, %v821
        %v1373 = vmax.f32 %v1090, %v1126
        %v1374 = vmax.f32 %v788, %v824
        %v1375 = vmax.f32 %v1093, %v1129
        %v1376 = vmax.f32 %v791, %v827
        %v1377 = vmax.f32 %v1096, %v1132
        %v1378 = vmax.f32 %v794, %v830
        %v1379 = vmax.f32 %v1099, %v1135
        %v1380 = vmax.f32 %v797, %v833
        %v1381 = vmax.f32 %v1102, %v1138
        %v1382 = vmax.f32 %v800, %v836
        %v1383 = vmax.f32 %v1105, %v1141
        %v1385 = vperm.slane %v1359, 0
        %v1386 = vperm.slane %v1359, 1
        %v1389 = vadd.f32 %v1360, %v1385
        %v1390 = vadd.f32 %v1361, %v1386
        %v1391 = vadd.f32 %v1362, %v1385
        %v1392 = vadd.f32 %v1363, %v1386
        %v1393 = vadd.f32 %v1364, %v1385
        %v1394 = vadd.f32 %v1365, %v1386
        %v1395 = vadd.f32 %v1366, %v1385
        %v1396 = vadd.f32 %v1367, %v1386
        %v1397 = vadd.f32 %v1368, %v1385
        %v1398 = vadd.f32 %v1369, %v1386
        %v1399 = vadd.f32 %v1370, %v1385
        %v1400 = vadd.f32 %v1371, %v1386
        %v1401 = vadd.f32 %v1372, %v1385
        %v1402 = vadd.f32 %v1373, %v1386
        %v1403 = vadd.f32 %v1374, %v1385
        %v1404 = vadd.f32 %v1375, %v1386
        %v1405 = vadd.f32 %v1376, %v1385
        %v1406 = vadd.f32 %v1377, %v1386
        %v1407 = vadd.f32 %v1378, %v1385
        %v1408 = vadd.f32 %v1379, %v1386
        %v1409 = vadd.f32 %v1380, %v1385
        %v1410 = vadd.f32 %v1381, %v1386
        %v1411 = vadd.f32 %v1382, %v1385
        %v1412 = vadd.f32 %v1383, %v1386
        %vm1413 = vcmp.ge.f32.partialorder %v1389, 0.0
        %vm1414 = vcmp.ge.f32.partialorder %v1390, 0.0
        %vm1415 = vcmp.ge.f32.partialorder %v1391, 0.0
        %vm1416 = vcmp.ge.f32.partialorder %v1392, 0.0
        %vm1417 = vcmp.ge.f32.partialorder %v1393, 0.0
        %vm1418 = vcmp.ge.f32.partialorder %v1394, 0.0
        %vm1419 = vcmp.ge.f32.partialorder %v1395, 0.0
        %vm1420 = vcmp.ge.f32.partialorder %v1396, 0.0
        %vm1421 = vcmp.ge.f32.partialorder %v1397, 0.0
        %vm1422 = vcmp.ge.f32.partialorder %v1398, 0.0
        %vm1423 = vcmp.ge.f32.partialorder %v1399, 0.0
        %vm1424 = vcmp.ge.f32.partialorder %v1400, 0.0
        %vm1425 = vcmp.ge.f32.partialorder %v1401, 0.0
        %vm1426 = vcmp.ge.f32.partialorder %v1402, 0.0
        %vm1427 = vcmp.ge.f32.partialorder %v1403, 0.0
        %vm1428 = vcmp.ge.f32.partialorder %v1404, 0.0
        %vm1429 = vcmp.ge.f32.partialorder %v1405, 0.0
        %vm1430 = vcmp.ge.f32.partialorder %v1406, 0.0
        %vm1431 = vcmp.ge.f32.partialorder %v1407, 0.0
        %vm1432 = vcmp.ge.f32.partialorder %v1408, 0.0
        %vm1433 = vcmp.ge.f32.partialorder %v1409, 0.0
        %vm1434 = vcmp.ge.f32.partialorder %v1410, 0.0
        %vm1435 = vcmp.ge.f32.partialorder %v1411, 0.0
        %vm1436 = vcmp.ge.f32.partialorder %v1412, 0.0
        %v1437 = vmul.f32 %v1389, 0.01
        %v1438 = vmul.f32 %v1390, 0.01
        %v1439 = vmul.f32 %v1391, 0.01
        %v1440 = vmul.f32 %v1392, 0.01
        %v1441 = vmul.f32 %v1393, 0.01
        %v1442 = vmul.f32 %v1394, 0.01
        %v1443 = vmul.f32 %v1395, 0.01
        %v1444 = vmul.f32 %v1396, 0.01
        %v1445 = vmul.f32 %v1397, 0.01
        %v1446 = vmul.f32 %v1398, 0.01
        %v1447 = vmul.f32 %v1399, 0.01
        %v1448 = vmul.f32 %v1400, 0.01
        %v1449 = vmul.f32 %v1401, 0.01
        %v1450 = vmul.f32 %v1402, 0.01
        %v1451 = vmul.f32 %v1403, 0.01
        %v1452 = vmul.f32 %v1404, 0.01
        %v1453 = vmul.f32 %v1405, 0.01
        %v1454 = vmul.f32 %v1406, 0.01
        %v1455 = vmul.f32 %v1407, 0.01
        %v1456 = vmul.f32 %v1408, 0.01
        %v1457 = vmul.f32 %v1409, 0.01
        %v1458 = vmul.f32 %v1410, 0.01
        %v1459 = vmul.f32 %v1411, 0.01
        %v1460 = vmul.f32 %v1412, 0.01
        %v1461 = vsel %vm1413, %v1389, %v1437
        %v1462 = vsel %vm1414, %v1390, %v1438
        %v1463 = vsel %vm1415, %v1391, %v1439
        %v1464 = vsel %vm1416, %v1392, %v1440
        %v1465 = vsel %vm1417, %v1393, %v1441
        %v1466 = vsel %vm1418, %v1394, %v1442
        %v1467 = vsel %vm1419, %v1395, %v1443
        %v1468 = vsel %vm1420, %v1396, %v1444
        %v1469 = vsel %vm1421, %v1397, %v1445
        %v1470 = vsel %vm1422, %v1398, %v1446
        %v1471 = vsel %vm1423, %v1399, %v1447
        %v1472 = vsel %vm1424, %v1400, %v1448
        %v1473 = vsel %vm1425, %v1401, %v1449
        %v1474 = vsel %vm1426, %v1402, %v1450
        %v1475 = vsel %vm1427, %v1403, %v1451
        %v1476 = vsel %vm1428, %v1404, %v1452
        %v1477 = vsel %vm1429, %v1405, %v1453
        %v1478 = vsel %vm1430, %v1406, %v1454
        %v1479 = vsel %vm1431, %v1407, %v1455
        %v1480 = vsel %vm1432, %v1408, %v1456
        %v1481 = vsel %vm1433, %v1409, %v1457
        %v1482 = vsel %vm1434, %v1410, %v1458
        %v1483 = vsel %vm1435, %v1411, %v1459
        %v1484 = vsel %vm1436, %v1412, %v1460
        %v1485 = vmax.f32 %v839, %v875
        %v1486 = vmax.f32 %v1144, %v1180
        %v1487 = vmax.f32 %v842, %v878
        %v1488 = vmax.f32 %v1147, %v1183
        %v1489 = vmax.f32 %v845, %v881
        %v1490 = vmax.f32 %v1150, %v1186
        %v1491 = vmax.f32 %v848, %v884
        %v1492 = vmax.f32 %v1153, %v1189
        %v1493 = vmax.f32 %v851, %v887
        %v1494 = vmax.f32 %v1156, %v1192
        %v1495 = vmax.f32 %v854, %v890
        %v1496 = vmax.f32 %v1159, %v1195
        %v1497 = vmax.f32 %v857, %v893
        %v1498 = vmax.f32 %v1162, %v1198
        %v1499 = vmax.f32 %v860, %v896
        %v1500 = vmax.f32 %v1165, %v1201
        %v1501 = vmax.f32 %v863, %v899
        %v1502 = vmax.f32 %v1168, %v1204
        %v1503 = vmax.f32 %v866, %v902
        %v1504 = vmax.f32 %v1171, %v1207
        %v1505 = vmax.f32 %v869, %v905
        %v1506 = vmax.f32 %v1174, %v1210
        %v1507 = vmax.f32 %v872, %v908
        %v1508 = vmax.f32 %v1177, %v1213
        %v1509 = vadd.f32 %v1485, %v1385
        %v1510 = vadd.f32 %v1486, %v1386
        %v1511 = vadd.f32 %v1487, %v1385
        %v1512 = vadd.f32 %v1488, %v1386
        %v1513 = vadd.f32 %v1489, %v1385
        %v1514 = vadd.f32 %v1490, %v1386
        %v1515 = vadd.f32 %v1491, %v1385
        %v1516 = vadd.f32 %v1492, %v1386
        %v1517 = vadd.f32 %v1493, %v1385
        %v1518 = vadd.f32 %v1494, %v1386
        %v1519 = vadd.f32 %v1495, %v1385
        %v1520 = vadd.f32 %v1496, %v1386
        %v1521 = vadd.f32 %v1497, %v1385
        %v1522 = vadd.f32 %v1498, %v1386
        %v1523 = vadd.f32 %v1499, %v1385
        %v1524 = vadd.f32 %v1500, %v1386
        %v1525 = vadd.f32 %v1501, %v1385
        %v1526 = vadd.f32 %v1502, %v1386
        %v1527 = vadd.f32 %v1503, %v1385
        %v1528 = vadd.f32 %v1504, %v1386
        %v1529 = vadd.f32 %v1505, %v1385
        %v1530 = vadd.f32 %v1506, %v1386
        %v1531 = vadd.f32 %v1507, %v1385
        %v1532 = vadd.f32 %v1508, %v1386
        %vm1533 = vcmp.ge.f32.partialorder %v1509, 0.0
        %vm1534 = vcmp.ge.f32.partialorder %v1510, 0.0
        %vm1535 = vcmp.ge.f32.partialorder %v1511, 0.0
        %vm1536 = vcmp.ge.f32.partialorder %v1512, 0.0
        %vm1537 = vcmp.ge.f32.partialorder %v1513, 0.0
        %vm1538 = vcmp.ge.f32.partialorder %v1514, 0.0
        %vm1539 = vcmp.ge.f32.partialorder %v1515, 0.0
        %vm1540 = vcmp.ge.f32.partialorder %v1516, 0.0
        %vm1541 = vcmp.ge.f32.partialorder %v1517, 0.0
        %vm1542 = vcmp.ge.f32.partialorder %v1518, 0.0
        %vm1543 = vcmp.ge.f32.partialorder %v1519, 0.0
        %vm1544 = vcmp.ge.f32.partialorder %v1520, 0.0
        %vm1545 = vcmp.ge.f32.partialorder %v1521, 0.0
        %vm1546 = vcmp.ge.f32.partialorder %v1522, 0.0
        %vm1547 = vcmp.ge.f32.partialorder %v1523, 0.0
        %vm1548 = vcmp.ge.f32.partialorder %v1524, 0.0
        %vm1549 = vcmp.ge.f32.partialorder %v1525, 0.0
        %vm1550 = vcmp.ge.f32.partialorder %v1526, 0.0
        %vm1551 = vcmp.ge.f32.partialorder %v1527, 0.0
        %vm1552 = vcmp.ge.f32.partialorder %v1528, 0.0
        %vm1553 = vcmp.ge.f32.partialorder %v1529, 0.0
        %vm1554 = vcmp.ge.f32.partialorder %v1530, 0.0
        %vm1555 = vcmp.ge.f32.partialorder %v1531, 0.0
        %vm1556 = vcmp.ge.f32.partialorder %v1532, 0.0
        %v1557 = vmul.f32 %v1509, 0.01
        %v1558 = vmul.f32 %v1510, 0.01
        %v1559 = vmul.f32 %v1511, 0.01
        %v1560 = vmul.f32 %v1512, 0.01
        %v1561 = vmul.f32 %v1513, 0.01
        %v1562 = vmul.f32 %v1514, 0.01
        %v1563 = vmul.f32 %v1515, 0.01
        %v1564 = vmul.f32 %v1516, 0.01
        %v1565 = vmul.f32 %v1517, 0.01
        %v1566 = vmul.f32 %v1518, 0.01
        %v1567 = vmul.f32 %v1519, 0.01
        %v1568 = vmul.f32 %v1520, 0.01
        %v1569 = vmul.f32 %v1521, 0.01
        %v1570 = vmul.f32 %v1522, 0.01
        %v1571 = vmul.f32 %v1523, 0.01
        %v1572 = vmul.f32 %v1524, 0.01
        %v1573 = vmul.f32 %v1525, 0.01
        %v1574 = vmul.f32 %v1526, 0.01
        %v1575 = vmul.f32 %v1527, 0.01
        %v1576 = vmul.f32 %v1528, 0.01
        %v1577 = vmul.f32 %v1529, 0.01
        %v1578 = vmul.f32 %v1530, 0.01
        %v1579 = vmul.f32 %v1531, 0.01
        %v1580 = vmul.f32 %v1532, 0.01
        %v1581 = vsel %vm1533, %v1509, %v1557
        %v1582 = vsel %vm1534, %v1510, %v1558
        %v1583 = vsel %vm1535, %v1511, %v1559
        %v1584 = vsel %vm1536, %v1512, %v1560
        %v1585 = vsel %vm1537, %v1513, %v1561
        %v1586 = vsel %vm1538, %v1514, %v1562
        %v1587 = vsel %vm1539, %v1515, %v1563
        %v1588 = vsel %vm1540, %v1516, %v1564
        %v1589 = vsel %vm1541, %v1517, %v1565
        %v1590 = vsel %vm1542, %v1518, %v1566
        %v1591 = vsel %vm1543, %v1519, %v1567
        %v1592 = vsel %vm1544, %v1520, %v1568
        %v1593 = vsel %vm1545, %v1521, %v1569
        %v1594 = vsel %vm1546, %v1522, %v1570
        %v1595 = vsel %vm1547, %v1523, %v1571
        %v1596 = vsel %vm1548, %v1524, %v1572
        %v1597 = vsel %vm1549, %v1525, %v1573
        %v1598 = vsel %vm1550, %v1526, %v1574
        %v1599 = vsel %vm1551, %v1527, %v1575
        %v1600 = vsel %vm1552, %v1528, %v1576
        %v1601 = vsel %vm1553, %v1529, %v1577
        %v1602 = vsel %vm1554, %v1530, %v1578
        %v1603 = vsel %vm1555, %v1531, %v1579
        %v1604 = vsel %vm1556, %v1532, %v1580
        %v1605 = vmax.f32 %v911, %v947
        %v1606 = vmax.f32 %v1216, %v1252
        %v1607 = vmax.f32 %v914, %v950
        %v1608 = vmax.f32 %v1219, %v1255
        %v1609 = vmax.f32 %v917, %v953
        %v1610 = vmax.f32 %v1222, %v1258
        %v1611 = vmax.f32 %v920, %v956
        %v1612 = vmax.f32 %v1225, %v1261
        %v1613 = vmax.f32 %v923, %v959
        %v1614 = vmax.f32 %v1228, %v1264
        %v1615 = vmax.f32 %v926, %v962
        %v1616 = vmax.f32 %v1231, %v1267
        %v1617 = vmax.f32 %v929, %v965
        %v1618 = vmax.f32 %v1234, %v1270
        %v1619 = vmax.f32 %v932, %v968
        %v1620 = vmax.f32 %v1237, %v1273
        %v1621 = vmax.f32 %v935, %v971
        %v1622 = vmax.f32 %v1240, %v1276
        %v1623 = vmax.f32 %v938, %v974
        %v1624 = vmax.f32 %v1243, %v1279
        %v1625 = vmax.f32 %v941, %v977
        %v1626 = vmax.f32 %v1246, %v1282
        %v1627 = vmax.f32 %v944, %v980
        %v1628 = vmax.f32 %v1249, %v1285
        %v1629 = vadd.f32 %v1605, %v1385
        %v1630 = vadd.f32 %v1606, %v1386
        %v1631 = vadd.f32 %v1607, %v1385
        %v1632 = vadd.f32 %v1608, %v1386
        %v1633 = vadd.f32 %v1609, %v1385
        %v1634 = vadd.f32 %v1610, %v1386
        %v1635 = vadd.f32 %v1611, %v1385
        %v1636 = vadd.f32 %v1612, %v1386
        %v1637 = vadd.f32 %v1613, %v1385
        %v1638 = vadd.f32 %v1614, %v1386
        %v1639 = vadd.f32 %v1615, %v1385
        %v1640 = vadd.f32 %v1616, %v1386
        %v1641 = vadd.f32 %v1617, %v1385
        %v1642 = vadd.f32 %v1618, %v1386
        %v1643 = vadd.f32 %v1619, %v1385
        %v1644 = vadd.f32 %v1620, %v1386
        %v1645 = vadd.f32 %v1621, %v1385
        %v1646 = vadd.f32 %v1622, %v1386
        %v1647 = vadd.f32 %v1623, %v1385
        %v1648 = vadd.f32 %v1624, %v1386
        %v1649 = vadd.f32 %v1625, %v1385
        %v1650 = vadd.f32 %v1626, %v1386
        %v1651 = vadd.f32 %v1627, %v1385
        %v1652 = vadd.f32 %v1628, %v1386
        %vm1653 = vcmp.ge.f32.partialorder %v1629, 0.0
        %vm1654 = vcmp.ge.f32.partialorder %v1630, 0.0
        %vm1655 = vcmp.ge.f32.partialorder %v1631, 0.0
        %vm1656 = vcmp.ge.f32.partialorder %v1632, 0.0
        %vm1657 = vcmp.ge.f32.partialorder %v1633, 0.0
        %vm1658 = vcmp.ge.f32.partialorder %v1634, 0.0
        %vm1659 = vcmp.ge.f32.partialorder %v1635, 0.0
        %vm1660 = vcmp.ge.f32.partialorder %v1636, 0.0
        %vm1661 = vcmp.ge.f32.partialorder %v1637, 0.0
        %vm1662 = vcmp.ge.f32.partialorder %v1638, 0.0
        %vm1663 = vcmp.ge.f32.partialorder %v1639, 0.0
        %vm1664 = vcmp.ge.f32.partialorder %v1640, 0.0
        %vm1665 = vcmp.ge.f32.partialorder %v1641, 0.0
        %vm1666 = vcmp.ge.f32.partialorder %v1642, 0.0
        %vm1667 = vcmp.ge.f32.partialorder %v1643, 0.0
        %vm1668 = vcmp.ge.f32.partialorder %v1644, 0.0
        %vm1669 = vcmp.ge.f32.partialorder %v1645, 0.0
        %vm1670 = vcmp.ge.f32.partialorder %v1646, 0.0
        %vm1671 = vcmp.ge.f32.partialorder %v1647, 0.0
        %vm1672 = vcmp.ge.f32.partialorder %v1648, 0.0
        %vm1673 = vcmp.ge.f32.partialorder %v1649, 0.0
        %vm1674 = vcmp.ge.f32.partialorder %v1650, 0.0
        %vm1675 = vcmp.ge.f32.partialorder %v1651, 0.0
        %vm1676 = vcmp.ge.f32.partialorder %v1652, 0.0
        %v1677 = vmul.f32 %v1629, 0.01
        %v1678 = vmul.f32 %v1630, 0.01
        %v1679 = vmul.f32 %v1631, 0.01
        %v1680 = vmul.f32 %v1632, 0.01
        %v1681 = vmul.f32 %v1633, 0.01
        %v1682 = vmul.f32 %v1634, 0.01
        %v1683 = vmul.f32 %v1635, 0.01
        %v1684 = vmul.f32 %v1636, 0.01
        %v1685 = vmul.f32 %v1637, 0.01
        %v1686 = vmul.f32 %v1638, 0.01
        %v1687 = vmul.f32 %v1639, 0.01
        %v1688 = vmul.f32 %v1640, 0.01
        %v1689 = vmul.f32 %v1641, 0.01
        %v1690 = vmul.f32 %v1642, 0.01
        %v1691 = vmul.f32 %v1643, 0.01
        %v1692 = vmul.f32 %v1644, 0.01
        %v1693 = vmul.f32 %v1645, 0.01
        %v1694 = vmul.f32 %v1646, 0.01
        %v1695 = vmul.f32 %v1647, 0.01
        %v1696 = vmul.f32 %v1648, 0.01
        %v1697 = vmul.f32 %v1649, 0.01
        %v1698 = vmul.f32 %v1650, 0.01
        %v1699 = vmul.f32 %v1651, 0.01
        %v1700 = vmul.f32 %v1652, 0.01
        %v1701 = vsel %vm1653, %v1629, %v1677
        %v1702 = vsel %vm1654, %v1630, %v1678
        %v1703 = vsel %vm1655, %v1631, %v1679
        %v1704 = vsel %vm1656, %v1632, %v1680
        %v1705 = vsel %vm1657, %v1633, %v1681
        %v1706 = vsel %vm1658, %v1634, %v1682
        %v1707 = vsel %vm1659, %v1635, %v1683
        %v1708 = vsel %vm1660, %v1636, %v1684
        %v1709 = vsel %vm1661, %v1637, %v1685
        %v1710 = vsel %vm1662, %v1638, %v1686
        %v1711 = vsel %vm1663, %v1639, %v1687
        %v1712 = vsel %vm1664, %v1640, %v1688
        %v1713 = vsel %vm1665, %v1641, %v1689
        %v1714 = vsel %vm1666, %v1642, %v1690
        %v1715 = vsel %vm1667, %v1643, %v1691
        %v1716 = vsel %vm1668, %v1644, %v1692
        %v1717 = vsel %vm1669, %v1645, %v1693
        %v1718 = vsel %vm1670, %v1646, %v1694
        %v1719 = vsel %vm1671, %v1647, %v1695
        %v1720 = vsel %vm1672, %v1648, %v1696
        %v1721 = vsel %vm1673, %v1649, %v1697
        %v1722 = vsel %vm1674, %v1650, %v1698
        %v1723 = vsel %vm1675, %v1651, %v1699
        %v1724 = vsel %vm1676, %v1652, %v1700
        %v1725 = vmax.f32 %v983, %v1019
        %v1726 = vmax.f32 %v1288, %v1324
        %v1727 = vmax.f32 %v986, %v1022
        %v1728 = vmax.f32 %v1291, %v1327
        %v1729 = vmax.f32 %v989, %v1025
        %v1730 = vmax.f32 %v1294, %v1330
        %v1731 = vmax.f32 %v992, %v1028
        %v1732 = vmax.f32 %v1297, %v1333
        %v1733 = vmax.f32 %v995, %v1031
        %v1734 = vmax.f32 %v1300, %v1336
        %v1735 = vmax.f32 %v998, %v1034
        %v1736 = vmax.f32 %v1303, %v1339
        %v1737 = vmax.f32 %v1001, %v1037
        %v1738 = vmax.f32 %v1306, %v1342
        %v1739 = vmax.f32 %v1004, %v1040
        %v1740 = vmax.f32 %v1309, %v1345
        %v1741 = vmax.f32 %v1007, %v1043
        %v1742 = vmax.f32 %v1312, %v1348
        %v1743 = vmax.f32 %v1010, %v1046
        %v1744 = vmax.f32 %v1315, %v1351
        %v1745 = vmax.f32 %v1013, %v1049
        %v1746 = vmax.f32 %v1318, %v1354
        %v1747 = vmax.f32 %v1016, %v1052
        %v1748 = vmax.f32 %v1321, %v1357
        %v1749 = vadd.f32 %v1725, %v1385
        %v1750 = vadd.f32 %v1726, %v1386
        %v1751 = vadd.f32 %v1727, %v1385
        %v1752 = vadd.f32 %v1728, %v1386
        %v1753 = vadd.f32 %v1729, %v1385
        %v1754 = vadd.f32 %v1730, %v1386
        %v1755 = vadd.f32 %v1731, %v1385
        %v1756 = vadd.f32 %v1732, %v1386
        %v1757 = vadd.f32 %v1733, %v1385
        %v1758 = vadd.f32 %v1734, %v1386
        %v1759 = vadd.f32 %v1735, %v1385
        %v1760 = vadd.f32 %v1736, %v1386
        %v1761 = vadd.f32 %v1737, %v1385
        %v1762 = vadd.f32 %v1738, %v1386
        %v1763 = vadd.f32 %v1739, %v1385
        %v1764 = vadd.f32 %v1740, %v1386
        %v1765 = vadd.f32 %v1741, %v1385
        %v1766 = vadd.f32 %v1742, %v1386
        %v1767 = vadd.f32 %v1743, %v1385
        %v1768 = vadd.f32 %v1744, %v1386
        %v1769 = vadd.f32 %v1745, %v1385
        %v1770 = vadd.f32 %v1746, %v1386
        %v1771 = vadd.f32 %v1747, %v1385
        %v1772 = vadd.f32 %v1748, %v1386
        %vm1773 = vcmp.ge.f32.partialorder %v1749, 0.0
        %vm1774 = vcmp.ge.f32.partialorder %v1750, 0.0
        %vm1775 = vcmp.ge.f32.partialorder %v1751, 0.0
        %vm1776 = vcmp.ge.f32.partialorder %v1752, 0.0
        %vm1777 = vcmp.ge.f32.partialorder %v1753, 0.0
        %vm1778 = vcmp.ge.f32.partialorder %v1754, 0.0
        %vm1779 = vcmp.ge.f32.partialorder %v1755, 0.0
        %vm1780 = vcmp.ge.f32.partialorder %v1756, 0.0
        %vm1781 = vcmp.ge.f32.partialorder %v1757, 0.0
        %vm1782 = vcmp.ge.f32.partialorder %v1758, 0.0
        %vm1783 = vcmp.ge.f32.partialorder %v1759, 0.0
        %vm1784 = vcmp.ge.f32.partialorder %v1760, 0.0
        %vm1785 = vcmp.ge.f32.partialorder %v1761, 0.0
        %vm1786 = vcmp.ge.f32.partialorder %v1762, 0.0
        %vm1787 = vcmp.ge.f32.partialorder %v1763, 0.0
        %vm1788 = vcmp.ge.f32.partialorder %v1764, 0.0
        %vm1789 = vcmp.ge.f32.partialorder %v1765, 0.0
        %vm1790 = vcmp.ge.f32.partialorder %v1766, 0.0
        %vm1791 = vcmp.ge.f32.partialorder %v1767, 0.0
        %vm1792 = vcmp.ge.f32.partialorder %v1768, 0.0
        %vm1793 = vcmp.ge.f32.partialorder %v1769, 0.0
        %vm1794 = vcmp.ge.f32.partialorder %v1770, 0.0
        %vm1795 = vcmp.ge.f32.partialorder %v1771, 0.0
        %vm1796 = vcmp.ge.f32.partialorder %v1772, 0.0
        %v1797 = vmul.f32 %v1749, 0.01
        %v1798 = vmul.f32 %v1750, 0.01
        %v1799 = vmul.f32 %v1751, 0.01
        %v1800 = vmul.f32 %v1752, 0.01
        %v1801 = vmul.f32 %v1753, 0.01
        %v1802 = vmul.f32 %v1754, 0.01
        %v1803 = vmul.f32 %v1755, 0.01
        %v1804 = vmul.f32 %v1756, 0.01
        %v1805 = vmul.f32 %v1757, 0.01
        %v1806 = vmul.f32 %v1758, 0.01
        %v1807 = vmul.f32 %v1759, 0.01
        %v1808 = vmul.f32 %v1760, 0.01
        %v1809 = vmul.f32 %v1761, 0.01
        %v1810 = vmul.f32 %v1762, 0.01
        %v1811 = vmul.f32 %v1763, 0.01
        %v1812 = vmul.f32 %v1764, 0.01
        %v1813 = vmul.f32 %v1765, 0.01
        %v1814 = vmul.f32 %v1766, 0.01
        %v1815 = vmul.f32 %v1767, 0.01
        %v1816 = vmul.f32 %v1768, 0.01
        %v1817 = vmul.f32 %v1769, 0.01
        %v1818 = vmul.f32 %v1770, 0.01
        %v1819 = vmul.f32 %v1771, 0.01
        %v1820 = vmul.f32 %v1772, 0.01
        %v1821 = vsel %vm1773, %v1749, %v1797
        %v1822 = vsel %vm1774, %v1750, %v1798
        %v1823 = vsel %vm1775, %v1751, %v1799
        %v1824 = vsel %vm1776, %v1752, %v1800
        %v1825 = vsel %vm1777, %v1753, %v1801
        %v1826 = vsel %vm1778, %v1754, %v1802
        %v1827 = vsel %vm1779, %v1755, %v1803
        %v1828 = vsel %vm1780, %v1756, %v1804
        %v1829 = vsel %vm1781, %v1757, %v1805
        %v1830 = vsel %vm1782, %v1758, %v1806
        %v1831 = vsel %vm1783, %v1759, %v1807
        %v1832 = vsel %vm1784, %v1760, %v1808
        %v1833 = vsel %vm1785, %v1761, %v1809
        %v1834 = vsel %vm1786, %v1762, %v1810
        %v1835 = vsel %vm1787, %v1763, %v1811
        %v1836 = vsel %vm1788, %v1764, %v1812
        %v1837 = vsel %vm1789, %v1765, %v1813
        %v1838 = vsel %vm1790, %v1766, %v1814
        %v1839 = vsel %vm1791, %v1767, %v1815
        %v1840 = vsel %vm1792, %v1768, %v1816
        %v1841 = vsel %vm1793, %v1769, %v1817
        %v1842 = vsel %vm1794, %v1770, %v1818
        %v1843 = vsel %vm1795, %v1771, %v1819
        %v1844 = vsel %vm1796, %v1772, %v1820
        %v1845 = vpack.c.bf16 %v1463, %v1461
        %v1846 = vpack.c.bf16 %v1464, %v1462
        %v1847 = vpack.c.bf16 %v1583, %v1581
        %v1848 = vpack.c.bf16 %v1584, %v1582
        %v1849 = vpack.c.bf16 %v1703, %v1701
        %v1850 = vpack.c.bf16 %v1704, %v1702
        %v1851 = vpack.c.bf16 %v1823, %v1821
        %v1852 = vpack.c.bf16 %v1824, %v1822
        %v1853 = vpack.c.bf16 %v1467, %v1465
        %v1854 = vpack.c.bf16 %v1468, %v1466
        %v1855 = vpack.c.bf16 %v1587, %v1585
        %v1856 = vpack.c.bf16 %v1588, %v1586
        %v1857 = vpack.c.bf16 %v1707, %v1705
        %v1858 = vpack.c.bf16 %v1708, %v1706
        %v1859 = vpack.c.bf16 %v1827, %v1825
        %v1860 = vpack.c.bf16 %v1828, %v1826
        %v1861 = vpack.c.bf16 %v1471, %v1469
        %v1862 = vpack.c.bf16 %v1472, %v1470
        %v1863 = vpack.c.bf16 %v1591, %v1589
        %v1864 = vpack.c.bf16 %v1592, %v1590
        %v1865 = vpack.c.bf16 %v1711, %v1709
        %v1866 = vpack.c.bf16 %v1712, %v1710
        %v1867 = vpack.c.bf16 %v1831, %v1829
        %v1868 = vpack.c.bf16 %v1832, %v1830
        %v1869 = vpack.c.bf16 %v1475, %v1473
        %v1870 = vpack.c.bf16 %v1476, %v1474
        %v1871 = vpack.c.bf16 %v1595, %v1593
        %v1872 = vpack.c.bf16 %v1596, %v1594
        %v1873 = vpack.c.bf16 %v1715, %v1713
        %v1874 = vpack.c.bf16 %v1716, %v1714
        %v1875 = vpack.c.bf16 %v1835, %v1833
        %v1876 = vpack.c.bf16 %v1836, %v1834
        %v1877 = vpack.c.bf16 %v1479, %v1477
        %v1878 = vpack.c.bf16 %v1480, %v1478
        %v1879 = vpack.c.bf16 %v1599, %v1597
        %v1880 = vpack.c.bf16 %v1600, %v1598
        %v1881 = vpack.c.bf16 %v1719, %v1717
        %v1882 = vpack.c.bf16 %v1720, %v1718
        %v1883 = vpack.c.bf16 %v1839, %v1837
        %v1884 = vpack.c.bf16 %v1840, %v1838
        %v1885 = vpack.c.bf16 %v1483, %v1481
        %v1886 = vpack.c.bf16 %v1484, %v1482
        %v1887 = vpack.c.bf16 %v1603, %v1601
        %v1888 = vpack.c.bf16 %v1604, %v1602
        %v1889 = vpack.c.bf16 %v1723, %v1721
        %v1890 = vpack.c.bf16 %v1724, %v1722
        %v1891 = vpack.c.bf16 %v1843, %v1841
        %v1892 = vpack.c.bf16 %v1844, %v1842
        %v1893 = vpack.c.bf16 %v1465, %v1463
        %v1894 = vpack.c.bf16 %v1466, %v1464
        %v1895 = vpack.c.bf16 %v1585, %v1583
        %v1896 = vpack.c.bf16 %v1586, %v1584
        %v1897 = vpack.c.bf16 %v1469, %v1467
        %v1898 = vpack.c.bf16 %v1470, %v1468
        %v1899 = vpack.c.bf16 %v1589, %v1587
        %v1900 = vpack.c.bf16 %v1590, %v1588
        %v1901 = vpack.c.bf16 %v1473, %v1471
        %v1902 = vpack.c.bf16 %v1474, %v1472
        %v1903 = vpack.c.bf16 %v1593, %v1591
        %v1904 = vpack.c.bf16 %v1594, %v1592
        %v1905 = vpack.c.bf16 %v1477, %v1475
        %v1906 = vpack.c.bf16 %v1478, %v1476
        %v1907 = vpack.c.bf16 %v1597, %v1595
        %v1908 = vpack.c.bf16 %v1598, %v1596
        %v1909 = vpack.c.bf16 %v1481, %v1479
        %v1910 = vpack.c.bf16 %v1482, %v1480
        %v1911 = vpack.c.bf16 %v1601, %v1599
        %v1912 = vpack.c.bf16 %v1602, %v1600
        %v1913 = vpack.c.bf16 %v1721, %v1721
        %v1914 = vpack.c.bf16 %v1722, %v1722
        %v1915 = vpack.c.bf16 %v1841, %v1841
        %v1916 = vpack.c.bf16 %v1842, %v1842
        %v1917 = vpack.c.bf16 %v1483, %v1483
        %v1918 = vpack.c.bf16 %v1484, %v1484
        %v1919 = vpack.c.bf16 %v1603, %v1603
        %v1920 = vpack.c.bf16 %v1604, %v1604
        %v1921 = vld [vmem:[%s2] sm:$0xf]
        %v1922 = vld [vmem:[%s2 + $0x4] sm:$0xf]
        %v1923 = vld [vmem:[%s2 + $0x8] sm:$0xf]
        %v1924 = vld [vmem:[%s2 + $0xc] sm:$0xf]
        %v1925 = vld [vmem:[%s2 + $0x10] sm:$0xf]
        %v1926 = vld [vmem:[%s2 + $0x14] sm:$0xf]
        %v1927 = vld [vmem:[%s2 + $0x18] sm:$0xf]
        %v1928 = vld [vmem:[%s2 + $0x1c] sm:$0xf]
        %v1929 = vld [vmem:[%s2 + $0x20] sm:$0xf]
        %v1930 = vld [vmem:[%s2 + $0x24] sm:$0xf]
        %v1931 = vld [vmem:[%s2 + $0x28] sm:$0xf]
        %v1932 = vld [vmem:[%s2 + $0x2c] sm:$0xf]
        %v1933 = vld [vmem:[%s2 + $0x30] sm:$0xf]
        %v1934 = vld [vmem:[%s2 + $0x34] sm:$0xf]
        %v1935 = vld [vmem:[%s2 + $0x38] sm:$0xf]
        %v1936 = vld [vmem:[%s2 + $0x3c] sm:$0xf]
        %v1937 = vld [vmem:[%s2 + $0x40] sm:$0xf]
        %v1938 = vld [vmem:[%s2 + $0x44] sm:$0xf]
        %v1939 = vld [vmem:[%s2 + $0x48] sm:$0xf]
        %v1940 = vld [vmem:[%s2 + $0x4c] sm:$0xf]
        %v1941 = vld [vmem:[%s2 + $0x50] sm:$0xf]
        %v1942 = vld [vmem:[%s2 + $0x54] sm:$0xf]
        %v1943 = vld [vmem:[%s2 + $0x58] sm:$0xf]
        %v1944 = vld [vmem:[%s2 + $0x5c] sm:$0xf]
        %v1945 = vld [vmem:[%s2 + $0x60] sm:$0xf]
        %v1946 = vld [vmem:[%s2 + $0x64] sm:$0xf]
        %v1947 = vld [vmem:[%s2 + $0x68] sm:$0xf]
        %v1948 = vld [vmem:[%s2 + $0x6c] sm:$0xf]
        %v1949 = vld [vmem:[%s2 + $0x70] sm:$0xf]
        %v1950 = vld [vmem:[%s2 + $0x74] sm:$0xf]
        %v1951 = vld [vmem:[%s2 + $0x78] sm:$0xf]
        %v1952 = vld [vmem:[%s2 + $0x7c] sm:$0xf]
        %v1953 = vld [vmem:[%s2 + $0x80] sm:$0xf]
        %v1954 = vld [vmem:[%s2 + $0x84] sm:$0xf]
        %v1955 = vld [vmem:[%s2 + $0x88] sm:$0xf]
        %v1956 = vld [vmem:[%s2 + $0x8c] sm:$0xf]
        %v1957 = vld [vmem:[%s2 + $0x90] sm:$0xf]
        %v1958 = vld [vmem:[%s2 + $0x94] sm:$0xf]
        %v1959 = vld [vmem:[%s2 + $0x98] sm:$0xf]
        %v1960 = vld [vmem:[%s2 + $0x9c] sm:$0xf]
        %v1961 = vld [vmem:[%s2 + $0xa0] sm:$0xf]
        %v1962 = vld [vmem:[%s2 + $0xa4] sm:$0xf]
        %v1963 = vld [vmem:[%s2 + $0xa8] sm:$0xf]
        %v1964 = vld [vmem:[%s2 + $0xac] sm:$0xf]
        %v1965 = vld [vmem:[%s2 + $0xb0] sm:$0xf]
        %v1966 = vld [vmem:[%s2 + $0xb4] sm:$0xf]
        %v1967 = vld [vmem:[%s2 + $0xb8] sm:$0xf]
        %v1968 = vld [vmem:[%s2 + $0xbc] sm:$0xf]
        %v1969 = vld [vmem:[%s2 + $0xc0] sm:$0xf]
        %v1970 = vld [vmem:[%s2 + $0xc4] sm:$0xf]
        %v1971 = vld [vmem:[%s2 + $0xc8] sm:$0xf]
        %v1972 = vld [vmem:[%s2 + $0xcc] sm:$0xf]
        %v1973 = vld [vmem:[%s2 + $0xd0] sm:$0xf]
        %v1974 = vld [vmem:[%s2 + $0xd4] sm:$0xf]
        %v1975 = vld [vmem:[%s2 + $0xd8] sm:$0xf]
        %v1976 = vld [vmem:[%s2 + $0xdc] sm:$0xf]
        %v1977 = vld [vmem:[%s2 + $0xe0] sm:$0xf]
        %v1978 = vld [vmem:[%s2 + $0xe4] sm:$0xf]
        %v1979 = vld [vmem:[%s2 + $0xe8] sm:$0xf]
        %v1980 = vld [vmem:[%s2 + $0xec] sm:$0xf]
        %v1981 = vld [vmem:[%s2 + $0xf0] sm:$0xf]
        %v1982 = vld [vmem:[%s2 + $0xf4] sm:$0xf]
        %v1983 = vld [vmem:[%s2 + $0xf8] sm:$0xf]
        %v1984 = vld [vmem:[%s2 + $0xfc] sm:$0xf]
        %v1985 = vld [vmem:[%s2 + $0x100] sm:$0xf]
        %v1986 = vld [vmem:[%s2 + $0x104] sm:$0xf]
        %v1987 = vld [vmem:[%s2 + $0x108] sm:$0xf]
        %v1988 = vld [vmem:[%s2 + $0x10c] sm:$0xf]
        %v1989 = vld [vmem:[%s2 + $0x110] sm:$0xf]
        %v1990 = vld [vmem:[%s2 + $0x114] sm:$0xf]
        %v1991 = vld [vmem:[%s2 + $0x118] sm:$0xf]
        %v1992 = vld [vmem:[%s2 + $0x11c] sm:$0xf]
        %v1993 = vld [vmem:[%s2 + $0x120] sm:$0xf]
        %v1994 = vld [vmem:[%s2 + $0x124] sm:$0xf]
        %v1995 = vld [vmem:[%s2 + $0x128] sm:$0xf]
        %v1996 = vld [vmem:[%s2 + $0x12c] sm:$0xf]
        %v1997 = vld [vmem:[%s2 + $0x130] sm:$0xf]
        %v1998 = vld [vmem:[%s2 + $0x134] sm:$0xf]
        %v1999 = vld [vmem:[%s2 + $0x138] sm:$0xf]
        %v2000 = vld [vmem:[%s2 + $0x13c] sm:$0xf]
        %v2001 = vld [vmem:[%s2 + $0x140] sm:$0xf]
        %v2002 = vld [vmem:[%s2 + $0x144] sm:$0xf]
        %v2003 = vld [vmem:[%s2 + $0x148] sm:$0xf]
        %v2004 = vld [vmem:[%s2 + $0x14c] sm:$0xf]
        %v2005 = vld [vmem:[%s2 + $0x150] sm:$0xf]
        %v2006 = vld [vmem:[%s2 + $0x154] sm:$0xf]
        %v2007 = vld [vmem:[%s2 + $0x158] sm:$0xf]
        %v2008 = vld [vmem:[%s2 + $0x15c] sm:$0xf]
        %v2009 = vld [vmem:[%s2 + $0x160] sm:$0xf]
        %v2010 = vld [vmem:[%s2 + $0x164] sm:$0xf]
        %v2011 = vld [vmem:[%s2 + $0x168] sm:$0xf]
        %v2012 = vld [vmem:[%s2 + $0x16c] sm:$0xf]
        %v2013 = vld [vmem:[%s2 + $0x170] sm:$0xf]
        %v2014 = vld [vmem:[%s2 + $0x174] sm:$0xf]
        %v2015 = vld [vmem:[%s2 + $0x178] sm:$0xf]
        %v2016 = vld [vmem:[%s2 + $0x17c] sm:$0xf]
        %v2017 = vld [vmem:[%s2 + $0x180] sm:$0xf]
        %v2018 = vld [vmem:[%s2 + $0x184] sm:$0xf]
        %v2019 = vld [vmem:[%s2 + $0x188] sm:$0xf]
        %v2020 = vld [vmem:[%s2 + $0x18c] sm:$0xf]
        %v2021 = vld [vmem:[%s2 + $0x190] sm:$0xf]
        %v2022 = vld [vmem:[%s2 + $0x194] sm:$0xf]
        %v2023 = vld [vmem:[%s2 + $0x198] sm:$0xf]
        %v2024 = vld [vmem:[%s2 + $0x19c] sm:$0xf]
        %v2025 = vld [vmem:[%s2 + $0x1a0] sm:$0xf]
        %v2026 = vld [vmem:[%s2 + $0x1a4] sm:$0xf]
        %v2027 = vld [vmem:[%s2 + $0x1a8] sm:$0xf]
        %v2028 = vld [vmem:[%s2 + $0x1ac] sm:$0xf]
        %v2029 = vld [vmem:[%s2 + $0x1b0] sm:$0xf]
        %v2030 = vld [vmem:[%s2 + $0x1b4] sm:$0xf]
        %v2031 = vld [vmem:[%s2 + $0x1b8] sm:$0xf]
        %v2032 = vld [vmem:[%s2 + $0x1bc] sm:$0xf]
        %v2033 = vld [vmem:[%s2 + $0x1c0] sm:$0xf]
        %v2034 = vld [vmem:[%s2 + $0x1c4] sm:$0xf]
        %v2035 = vld [vmem:[%s2 + $0x1c8] sm:$0xf]
        %v2036 = vld [vmem:[%s2 + $0x1cc] sm:$0xf]
        %v2037 = vld [vmem:[%s2 + $0x1d0] sm:$0xf]
        %v2038 = vld [vmem:[%s2 + $0x1d4] sm:$0xf]
        %v2039 = vld [vmem:[%s2 + $0x1d8] sm:$0xf]
        %v2040 = vld [vmem:[%s2 + $0x1dc] sm:$0xf]
        %v2041 = vld [vmem:[%s2 + $0x1e0] sm:$0xf]
        %v2042 = vld [vmem:[%s2 + $0x1e4] sm:$0xf]
        %v2043 = vld [vmem:[%s2 + $0x1e8] sm:$0xf]
        %v2044 = vld [vmem:[%s2 + $0x1ec] sm:$0xf]
        %v2045 = vld [vmem:[%s2 + $0x1f0] sm:$0xf]
        %v2046 = vld [vmem:[%s2 + $0x1f4] sm:$0xf]
        %v2047 = vld [vmem:[%s2 + $0x1f8] sm:$0xf]
        %v2048 = vld [vmem:[%s2 + $0x1fc] sm:$0xf]
        %v2177 = vunpack.c.l.b16 %v1921
        %v2178 = vunpack.c.l.b16 %v1922
        %v2179 = vunpack.c.l.b16 %v1923
        %v2180 = vunpack.c.l.b16 %v1924
        %v2181 = vunpack.c.l.b16 %v1925
        %v2182 = vunpack.c.l.b16 %v1926
        %v2183 = vunpack.c.l.b16 %v1927
        %v2184 = vunpack.c.l.b16 %v1928
        %v2185 = vunpack.c.l.b16 %v1929
        %v2186 = vunpack.c.l.b16 %v1930
        %v2187 = vunpack.c.l.b16 %v1931
        %v2188 = vunpack.c.l.b16 %v1932
        %v2189 = vunpack.c.l.b16 %v1933
        %v2190 = vunpack.c.l.b16 %v1934
        %v2191 = vunpack.c.l.b16 %v1935
        %v2192 = vunpack.c.l.b16 %v1936
        %v2193 = vunpack.c.l.b16 %v1937
        %v2194 = vunpack.c.l.b16 %v1938
        %v2195 = vunpack.c.l.b16 %v1939
        %v2196 = vunpack.c.l.b16 %v1940
        %v2197 = vunpack.c.l.b16 %v1941
        %v2198 = vunpack.c.l.b16 %v1942
        %v2199 = vunpack.c.l.b16 %v1943
        %v2200 = vunpack.c.l.b16 %v1944
        %v2201 = vunpack.c.l.b16 %v1945
        %v2202 = vunpack.c.l.b16 %v1946
        %v2203 = vunpack.c.l.b16 %v1947
        %v2204 = vunpack.c.l.b16 %v1948
        %v2205 = vunpack.c.l.b16 %v1949
        %v2206 = vunpack.c.l.b16 %v1950
        %v2207 = vunpack.c.l.b16 %v1951
        %v2208 = vunpack.c.l.b16 %v1952
        %v2209 = vunpack.c.l.b16 %v1953
        %v2210 = vunpack.c.l.b16 %v1954
        %v2211 = vunpack.c.l.b16 %v1955
        %v2212 = vunpack.c.l.b16 %v1956
        %v2213 = vunpack.c.l.b16 %v1957
        %v2214 = vunpack.c.l.b16 %v1958
        %v2215 = vunpack.c.l.b16 %v1959
        %v2216 = vunpack.c.l.b16 %v1960
        %v2217 = vunpack.c.l.b16 %v1961
        %v2218 = vunpack.c.l.b16 %v1962
        %v2219 = vunpack.c.l.b16 %v1963
        %v2220 = vunpack.c.l.b16 %v1964
        %v2221 = vunpack.c.l.b16 %v1965
        %v2222 = vunpack.c.l.b16 %v1966
        %v2223 = vunpack.c.l.b16 %v1967
        %v2224 = vunpack.c.l.b16 %v1968
        %v2225 = vunpack.c.l.b16 %v1969
        %v2226 = vunpack.c.l.b16 %v1970
        %v2227 = vunpack.c.l.b16 %v1971
        %v2228 = vunpack.c.l.b16 %v1972
        %v2229 = vunpack.c.l.b16 %v1973
        %v2230 = vunpack.c.l.b16 %v1974
        %v2231 = vunpack.c.l.b16 %v1975
        %v2232 = vunpack.c.l.b16 %v1976
        %v2233 = vunpack.c.l.b16 %v1977
        %v2234 = vunpack.c.l.b16 %v1978
        %v2235 = vunpack.c.l.b16 %v1979
        %v2236 = vunpack.c.l.b16 %v1980
        %v2237 = vunpack.c.l.b16 %v1981
        %v2238 = vunpack.c.l.b16 %v1982
        %v2239 = vunpack.c.l.b16 %v1983
        %v2240 = vunpack.c.l.b16 %v1984
        %v2241 = vunpack.c.l.b16 %v1985
        %v2242 = vunpack.c.l.b16 %v1986
        %v2243 = vunpack.c.l.b16 %v1987
        %v2244 = vunpack.c.l.b16 %v1988
        %v2245 = vunpack.c.l.b16 %v1989
        %v2246 = vunpack.c.l.b16 %v1990
        %v2247 = vunpack.c.l.b16 %v1991
        %v2248 = vunpack.c.l.b16 %v1992
        %v2249 = vunpack.c.l.b16 %v1993
        %v2250 = vunpack.c.l.b16 %v1994
        %v2251 = vunpack.c.l.b16 %v1995
        %v2252 = vunpack.c.l.b16 %v1996
        %v2253 = vunpack.c.l.b16 %v1997
        %v2254 = vunpack.c.l.b16 %v1998
        %v2255 = vunpack.c.l.b16 %v1999
        %v2256 = vunpack.c.l.b16 %v2000
        %v2257 = vunpack.c.l.b16 %v2001
        %v2258 = vunpack.c.l.b16 %v2002
        %v2259 = vunpack.c.l.b16 %v2003
        %v2260 = vunpack.c.l.b16 %v2004
        %v2261 = vunpack.c.l.b16 %v2005
        %v2262 = vunpack.c.l.b16 %v2006
        %v2263 = vunpack.c.l.b16 %v2007
        %v2264 = vunpack.c.l.b16 %v2008
        %v2265 = vunpack.c.l.b16 %v2009
        %v2266 = vunpack.c.l.b16 %v2010
        %v2267 = vunpack.c.l.b16 %v2011
        %v2268 = vunpack.c.l.b16 %v2012
        %v2269 = vunpack.c.l.b16 %v2013
        %v2270 = vunpack.c.l.b16 %v2014
        %v2271 = vunpack.c.l.b16 %v2015
        %v2272 = vunpack.c.l.b16 %v2016
        %v2273 = vunpack.c.l.b16 %v2017
        %v2274 = vunpack.c.l.b16 %v2018
        %v2275 = vunpack.c.l.b16 %v2019
        %v2276 = vunpack.c.l.b16 %v2020
        %v2277 = vunpack.c.l.b16 %v2021
        %v2278 = vunpack.c.l.b16 %v2022
        %v2279 = vunpack.c.l.b16 %v2023
        %v2280 = vunpack.c.l.b16 %v2024
        %v2281 = vunpack.c.l.b16 %v2025
        %v2282 = vunpack.c.l.b16 %v2026
        %v2283 = vunpack.c.l.b16 %v2027
        %v2284 = vunpack.c.l.b16 %v2028
        %v2285 = vunpack.c.l.b16 %v2029
        %v2286 = vunpack.c.l.b16 %v2030
        %v2287 = vunpack.c.l.b16 %v2031
        %v2288 = vunpack.c.l.b16 %v2032
        %v2289 = vunpack.c.l.b16 %v2033
        %v2290 = vunpack.c.l.b16 %v2034
        %v2291 = vunpack.c.l.b16 %v2035
        %v2292 = vunpack.c.l.b16 %v2036
        %v2293 = vunpack.c.l.b16 %v2037
        %v2294 = vunpack.c.l.b16 %v2038
        %v2295 = vunpack.c.l.b16 %v2039
        %v2296 = vunpack.c.l.b16 %v2040
        %v2297 = vunpack.c.l.b16 %v2041
        %v2298 = vunpack.c.l.b16 %v2042
        %v2299 = vunpack.c.l.b16 %v2043
        %v2300 = vunpack.c.l.b16 %v2044
        %v2301 = vunpack.c.l.b16 %v2045
        %v2302 = vunpack.c.l.b16 %v2046
        %v2303 = vunpack.c.l.b16 %v2047
        %v2304 = vunpack.c.l.b16 %v2048
        %v2305 = vpack.c.b16 %v2178, %v2177
        %v2306 = vpack.c.b16 %v2180, %v2179
        %v2307 = vpack.c.b16 %v2182, %v2181
        %v2308 = vpack.c.b16 %v2184, %v2183
        %v2309 = vpack.c.b16 %v2186, %v2185
        %v2310 = vpack.c.b16 %v2188, %v2187
        %v2311 = vpack.c.b16 %v2190, %v2189
        %v2312 = vpack.c.b16 %v2192, %v2191
        %v2313 = vpack.c.b16 %v2194, %v2193
        %v2314 = vpack.c.b16 %v2196, %v2195
        %v2315 = vpack.c.b16 %v2198, %v2197
        %v2316 = vpack.c.b16 %v2200, %v2199
        %v2317 = vpack.c.b16 %v2202, %v2201
        %v2318 = vpack.c.b16 %v2204, %v2203
        %v2319 = vpack.c.b16 %v2206, %v2205
        %v2320 = vpack.c.b16 %v2208, %v2207
        %v2321 = vpack.c.b16 %v2210, %v2209
        %v2322 = vpack.c.b16 %v2212, %v2211
        %v2323 = vpack.c.b16 %v2214, %v2213
        %v2324 = vpack.c.b16 %v2216, %v2215
        %v2325 = vpack.c.b16 %v2218, %v2217
        %v2326 = vpack.c.b16 %v2220, %v2219
        %v2327 = vpack.c.b16 %v2222, %v2221
        %v2328 = vpack.c.b16 %v2224, %v2223
        %v2329 = vpack.c.b16 %v2226, %v2225
        %v2330 = vpack.c.b16 %v2228, %v2227
        %v2331 = vpack.c.b16 %v2230, %v2229
        %v2332 = vpack.c.b16 %v2232, %v2231
        %v2333 = vpack.c.b16 %v2234, %v2233
        %v2334 = vpack.c.b16 %v2236, %v2235
        %v2335 = vpack.c.b16 %v2238, %v2237
        %v2336 = vpack.c.b16 %v2240, %v2239
        %v2337 = vpack.c.b16 %v2242, %v2241
        %v2338 = vpack.c.b16 %v2244, %v2243
        %v2339 = vpack.c.b16 %v2246, %v2245
        %v2340 = vpack.c.b16 %v2248, %v2247
        %v2341 = vpack.c.b16 %v2250, %v2249
        %v2342 = vpack.c.b16 %v2252, %v2251
        %v2343 = vpack.c.b16 %v2254, %v2253
        %v2344 = vpack.c.b16 %v2256, %v2255
        %v2345 = vpack.c.b16 %v2258, %v2257
        %v2346 = vpack.c.b16 %v2260, %v2259
        %v2347 = vpack.c.b16 %v2262, %v2261
        %v2348 = vpack.c.b16 %v2264, %v2263
        %v2349 = vpack.c.b16 %v2266, %v2265
        %v2350 = vpack.c.b16 %v2268, %v2267
        %v2351 = vpack.c.b16 %v2270, %v2269
        %v2352 = vpack.c.b16 %v2272, %v2271
        %v2353 = vpack.c.b16 %v2274, %v2273
        %v2354 = vpack.c.b16 %v2276, %v2275
        %v2355 = vpack.c.b16 %v2278, %v2277
        %v2356 = vpack.c.b16 %v2280, %v2279
        %v2357 = vpack.c.b16 %v2282, %v2281
        %v2358 = vpack.c.b16 %v2284, %v2283
        %v2359 = vpack.c.b16 %v2286, %v2285
        %v2360 = vpack.c.b16 %v2288, %v2287
        %v2361 = vpack.c.b16 %v2290, %v2289
        %v2362 = vpack.c.b16 %v2292, %v2291
        %v2363 = vpack.c.b16 %v2294, %v2293
        %v2364 = vpack.c.b16 %v2296, %v2295
        %v2365 = vpack.c.b16 %v2298, %v2297
        %v2366 = vpack.c.b16 %v2300, %v2299
        %v2367 = vpack.c.b16 %v2302, %v2301
        %v2368 = vpack.c.b16 %v2304, %v2303
        %2433 = vmatpush.bf16.msra.mxu0 %v2312
        %2434 = vmatpush.bf16.msra.mxu0 %v2311
        %2435 = vmatpush.bf16.msra.mxu0 %v2310
        %2436 = vmatpush.bf16.msra.mxu0 %v2309
        %2437 = vmatpush.bf16.msra.mxu0 %v2308
        %2438 = vmatpush.bf16.msra.mxu0 %v2307
        %2439 = vmatpush.bf16.msra.mxu0 %v2306
        %2440 = vmatpush.bf16.msra.mxu0 %v2305
        %2441 = vmatmul.bf16.gmra.mxu0 %v1845
        %v2442 = vpop.f32.mrf.mxu0
        %v2443 = vadd.f32 0.0, %v2442
        %v2444 = vpop.f32.mrf.mxu0
        %v2445 = vadd.f32 0.0, %v2444
        %2446 = vmatmul.bf16.gmra.mxu0 %v1853
        %v2447 = vpop.f32.mrf.mxu0
        %v2448 = vadd.f32 0.0, %v2447
        %v2449 = vpop.f32.mrf.mxu0
        %v2450 = vadd.f32 0.0, %v2449
        %2451 = vmatmul.bf16.gmra.mxu0 %v1861
        %v2452 = vpop.f32.mrf.mxu0
        %v2453 = vadd.f32 0.0, %v2452
        %v2454 = vpop.f32.mrf.mxu0
        %v2455 = vadd.f32 0.0, %v2454
        %2456 = vmatmul.bf16.gmra.mxu0 %v1869
        %v2457 = vpop.f32.mrf.mxu0
        %v2458 = vadd.f32 0.0, %v2457
        %v2459 = vpop.f32.mrf.mxu0
        %v2460 = vadd.f32 0.0, %v2459
        %2461 = vmatmul.bf16.gmra.mxu0 %v1877
        %v2462 = vpop.f32.mrf.mxu0
        %v2463 = vadd.f32 0.0, %v2462
        %v2464 = vpop.f32.mrf.mxu0
        %v2465 = vadd.f32 0.0, %v2464
        %2466 = vmatmul.bf16.gmra.mxu0 %v1885
        %v2467 = vpop.f32.mrf.mxu0
        %v2468 = vadd.f32 0.0, %v2467
        %v2469 = vpop.f32.mrf.mxu0
        %v2470 = vadd.f32 0.0, %v2469
        %2471 = vmatmul.bf16.gmra.mxu0 %v1849
        %v2472 = vpop.f32.mrf.mxu0
        %v2473 = vadd.f32 0.0, %v2472
        %v2474 = vpop.f32.mrf.mxu0
        %v2475 = vadd.f32 0.0, %v2474
        %2476 = vmatmul.bf16.gmra.mxu0 %v1857
        %v2477 = vpop.f32.mrf.mxu0
        %v2478 = vadd.f32 0.0, %v2477
        %v2479 = vpop.f32.mrf.mxu0
        %v2480 = vadd.f32 0.0, %v2479
        %2481 = vmatmul.bf16.gmra.mxu0 %v1865
        %v2482 = vpop.f32.mrf.mxu0
        %v2483 = vadd.f32 0.0, %v2482
        %v2484 = vpop.f32.mrf.mxu0
        %v2485 = vadd.f32 0.0, %v2484
        %2486 = vmatmul.bf16.gmra.mxu0 %v1873
        %v2487 = vpop.f32.mrf.mxu0
        %v2488 = vadd.f32 0.0, %v2487
        %v2489 = vpop.f32.mrf.mxu0
        %v2490 = vadd.f32 0.0, %v2489
        %2491 = vmatmul.bf16.gmra.mxu0 %v1881
        %v2492 = vpop.f32.mrf.mxu0
        %v2493 = vadd.f32 0.0, %v2492
        %v2494 = vpop.f32.mrf.mxu0
        %v2495 = vadd.f32 0.0, %v2494
        %2496 = vmatmul.bf16.gmra.mxu0 %v1913
        %v2497 = vpop.f32.mrf.mxu0
        %v2498 = vadd.f32 0.0, %v2497
        %v2499 = vpop.f32.mrf.mxu0
        %2500 = vdwg.mxu0
        %2501 = vmatpush.bf16.msra.mxu0 %v2320
        %2502 = vmatpush.bf16.msra.mxu0 %v2319
        %2503 = vmatpush.bf16.msra.mxu0 %v2318
        %2504 = vmatpush.bf16.msra.mxu0 %v2317
        %2505 = vmatpush.bf16.msra.mxu0 %v2316
        %2506 = vmatpush.bf16.msra.mxu0 %v2315
        %2507 = vmatpush.bf16.msra.mxu0 %v2314
        %2508 = vmatpush.bf16.msra.mxu0 %v2313
        %2509 = vmatmul.bf16.gmra.mxu0 %v1846
        %v2510 = vpop.f32.mrf.mxu0
        %v2511 = vadd.f32 %v2443, %v2510
        %v2512 = vpop.f32.mrf.mxu0
        %v2513 = vadd.f32 %v2445, %v2512
        %2514 = vmatmul.bf16.gmra.mxu0 %v1854
        %v2515 = vpop.f32.mrf.mxu0
        %v2516 = vadd.f32 %v2448, %v2515
        %v2517 = vpop.f32.mrf.mxu0
        %v2518 = vadd.f32 %v2450, %v2517
        %2519 = vmatmul.bf16.gmra.mxu0 %v1862
        %v2520 = vpop.f32.mrf.mxu0
        %v2521 = vadd.f32 %v2453, %v2520
        %v2522 = vpop.f32.mrf.mxu0
        %v2523 = vadd.f32 %v2455, %v2522
        %2524 = vmatmul.bf16.gmra.mxu0 %v1870
        %v2525 = vpop.f32.mrf.mxu0
        %v2526 = vadd.f32 %v2458, %v2525
        %v2527 = vpop.f32.mrf.mxu0
        %v2528 = vadd.f32 %v2460, %v2527
        %2529 = vmatmul.bf16.gmra.mxu0 %v1878
        %v2530 = vpop.f32.mrf.mxu0
        %v2531 = vadd.f32 %v2463, %v2530
        %v2532 = vpop.f32.mrf.mxu0
        %v2533 = vadd.f32 %v2465, %v2532
        %2534 = vmatmul.bf16.gmra.mxu0 %v1886
        %v2535 = vpop.f32.mrf.mxu0
        %v2536 = vadd.f32 %v2468, %v2535
        %v2537 = vpop.f32.mrf.mxu0
        %v2538 = vadd.f32 %v2470, %v2537
        %2539 = vmatmul.bf16.gmra.mxu0 %v1850
        %v2540 = vpop.f32.mrf.mxu0
        %v2541 = vadd.f32 %v2473, %v2540
        %v2542 = vpop.f32.mrf.mxu0
        %v2543 = vadd.f32 %v2475, %v2542
        %2544 = vmatmul.bf16.gmra.mxu0 %v1858
        %v2545 = vpop.f32.mrf.mxu0
        %v2546 = vadd.f32 %v2478, %v2545
        %v2547 = vpop.f32.mrf.mxu0
        %v2548 = vadd.f32 %v2480, %v2547
        %2549 = vmatmul.bf16.gmra.mxu0 %v1866
        %v2550 = vpop.f32.mrf.mxu0
        %v2551 = vadd.f32 %v2483, %v2550
        %v2552 = vpop.f32.mrf.mxu0
        %v2553 = vadd.f32 %v2485, %v2552
        %2554 = vmatmul.bf16.gmra.mxu0 %v1874
        %v2555 = vpop.f32.mrf.mxu0
        %v2556 = vadd.f32 %v2488, %v2555
        %v2557 = vpop.f32.mrf.mxu0
        %v2558 = vadd.f32 %v2490, %v2557
        %2559 = vmatmul.bf16.gmra.mxu0 %v1882
        %v2560 = vpop.f32.mrf.mxu0
        %v2561 = vadd.f32 %v2493, %v2560
        %v2562 = vpop.f32.mrf.mxu0
        %v2563 = vadd.f32 %v2495, %v2562
        %2564 = vmatmul.bf16.gmra.mxu0 %v1914
        %v2565 = vpop.f32.mrf.mxu0
        %v2566 = vadd.f32 %v2498, %v2565
        %v2567 = vpop.f32.mrf.mxu0
        %2568 = vdwg.mxu0
        %2569 = vmatpush.bf16.msra.mxu0 %v2328
        %2570 = vmatpush.bf16.msra.mxu0 %v2327
        %2571 = vmatpush.bf16.msra.mxu0 %v2326
        %2572 = vmatpush.bf16.msra.mxu0 %v2325
        %2573 = vmatpush.bf16.msra.mxu0 %v2324
        %2574 = vmatpush.bf16.msra.mxu0 %v2323
        %2575 = vmatpush.bf16.msra.mxu0 %v2322
        %2576 = vmatpush.bf16.msra.mxu0 %v2321
        %2577 = vmatmul.bf16.gmra.mxu0 %v1847
        %v2578 = vpop.f32.mrf.mxu0
        %v2579 = vadd.f32 %v2511, %v2578
        %v2580 = vpop.f32.mrf.mxu0
        %v2581 = vadd.f32 %v2513, %v2580
        %2582 = vmatmul.bf16.gmra.mxu0 %v1855
        %v2583 = vpop.f32.mrf.mxu0
        %v2584 = vadd.f32 %v2516, %v2583
        %v2585 = vpop.f32.mrf.mxu0
        %v2586 = vadd.f32 %v2518, %v2585
        %2587 = vmatmul.bf16.gmra.mxu0 %v1863
        %v2588 = vpop.f32.mrf.mxu0
        %v2589 = vadd.f32 %v2521, %v2588
        %v2590 = vpop.f32.mrf.mxu0
        %v2591 = vadd.f32 %v2523, %v2590
        %2592 = vmatmul.bf16.gmra.mxu0 %v1871
        %v2593 = vpop.f32.mrf.mxu0
        %v2594 = vadd.f32 %v2526, %v2593
        %v2595 = vpop.f32.mrf.mxu0
        %v2596 = vadd.f32 %v2528, %v2595
        %2597 = vmatmul.bf16.gmra.mxu0 %v1879
        %v2598 = vpop.f32.mrf.mxu0
        %v2599 = vadd.f32 %v2531, %v2598
        %v2600 = vpop.f32.mrf.mxu0
        %v2601 = vadd.f32 %v2533, %v2600
        %2602 = vmatmul.bf16.gmra.mxu0 %v1887
        %v2603 = vpop.f32.mrf.mxu0
        %v2604 = vadd.f32 %v2536, %v2603
        %v2605 = vpop.f32.mrf.mxu0
        %v2606 = vadd.f32 %v2538, %v2605
        %2607 = vmatmul.bf16.gmra.mxu0 %v1851
        %v2608 = vpop.f32.mrf.mxu0
        %v2609 = vadd.f32 %v2541, %v2608
        %v2610 = vpop.f32.mrf.mxu0
        %v2611 = vadd.f32 %v2543, %v2610
        %2612 = vmatmul.bf16.gmra.mxu0 %v1859
        %v2613 = vpop.f32.mrf.mxu0
        %v2614 = vadd.f32 %v2546, %v2613
        %v2615 = vpop.f32.mrf.mxu0
        %v2616 = vadd.f32 %v2548, %v2615
        %2617 = vmatmul.bf16.gmra.mxu0 %v1867
        %v2618 = vpop.f32.mrf.mxu0
        %v2619 = vadd.f32 %v2551, %v2618
        %v2620 = vpop.f32.mrf.mxu0
        %v2621 = vadd.f32 %v2553, %v2620
        %2622 = vmatmul.bf16.gmra.mxu0 %v1875
        %v2623 = vpop.f32.mrf.mxu0
        %v2624 = vadd.f32 %v2556, %v2623
        %v2625 = vpop.f32.mrf.mxu0
        %v2626 = vadd.f32 %v2558, %v2625
        %2627 = vmatmul.bf16.gmra.mxu0 %v1883
        %v2628 = vpop.f32.mrf.mxu0
        %v2629 = vadd.f32 %v2561, %v2628
        %v2630 = vpop.f32.mrf.mxu0
        %v2631 = vadd.f32 %v2563, %v2630
        %2632 = vmatmul.bf16.gmra.mxu0 %v1915
        %v2633 = vpop.f32.mrf.mxu0
        %v2634 = vadd.f32 %v2566, %v2633
        %v2635 = vpop.f32.mrf.mxu0
        %2636 = vdwg.mxu0
        %2637 = vmatpush.bf16.msra.mxu0 %v2336
        %2638 = vmatpush.bf16.msra.mxu0 %v2335
        %2639 = vmatpush.bf16.msra.mxu0 %v2334
        %2640 = vmatpush.bf16.msra.mxu0 %v2333
        %2641 = vmatpush.bf16.msra.mxu0 %v2332
        %2642 = vmatpush.bf16.msra.mxu0 %v2331
        %2643 = vmatpush.bf16.msra.mxu0 %v2330
        %2644 = vmatpush.bf16.msra.mxu0 %v2329
        %2645 = vmatmul.bf16.gmra.mxu0 %v1848
        %v2646 = vpop.f32.mrf.mxu0
        %v2647 = vadd.f32 %v2579, %v2646
        %v2648 = vpop.f32.mrf.mxu0
        %v2649 = vadd.f32 %v2581, %v2648
        %2650 = vmatmul.bf16.gmra.mxu0 %v1856
        %v2651 = vpop.f32.mrf.mxu0
        %v2652 = vadd.f32 %v2584, %v2651
        %v2653 = vpop.f32.mrf.mxu0
        %v2654 = vadd.f32 %v2586, %v2653
        %2655 = vmatmul.bf16.gmra.mxu0 %v1864
        %v2656 = vpop.f32.mrf.mxu0
        %v2657 = vadd.f32 %v2589, %v2656
        %v2658 = vpop.f32.mrf.mxu0
        %v2659 = vadd.f32 %v2591, %v2658
        %2660 = vmatmul.bf16.gmra.mxu0 %v1872
        %v2661 = vpop.f32.mrf.mxu0
        %v2662 = vadd.f32 %v2594, %v2661
        %v2663 = vpop.f32.mrf.mxu0
        %v2664 = vadd.f32 %v2596, %v2663
        %2665 = vmatmul.bf16.gmra.mxu0 %v1880
        %v2666 = vpop.f32.mrf.mxu0
        %v2667 = vadd.f32 %v2599, %v2666
        %v2668 = vpop.f32.mrf.mxu0
        %v2669 = vadd.f32 %v2601, %v2668
        %2670 = vmatmul.bf16.gmra.mxu0 %v1888
        %v2671 = vpop.f32.mrf.mxu0
        %v2672 = vadd.f32 %v2604, %v2671
        %v2673 = vpop.f32.mrf.mxu0
        %v2674 = vadd.f32 %v2606, %v2673
        %2675 = vmatmul.bf16.gmra.mxu0 %v1852
        %v2676 = vpop.f32.mrf.mxu0
        %v2677 = vadd.f32 %v2609, %v2676
        %v2678 = vpop.f32.mrf.mxu0
        %v2679 = vadd.f32 %v2611, %v2678
        %2680 = vmatmul.bf16.gmra.mxu0 %v1860
        %v2681 = vpop.f32.mrf.mxu0
        %v2682 = vadd.f32 %v2614, %v2681
        %v2683 = vpop.f32.mrf.mxu0
        %v2684 = vadd.f32 %v2616, %v2683
        %2685 = vmatmul.bf16.gmra.mxu0 %v1868
        %v2686 = vpop.f32.mrf.mxu0
        %v2687 = vadd.f32 %v2619, %v2686
        %v2688 = vpop.f32.mrf.mxu0
        %v2689 = vadd.f32 %v2621, %v2688
        %2690 = vmatmul.bf16.gmra.mxu0 %v1876
        %v2691 = vpop.f32.mrf.mxu0
        %v2692 = vadd.f32 %v2624, %v2691
        %v2693 = vpop.f32.mrf.mxu0
        %v2694 = vadd.f32 %v2626, %v2693
        %2695 = vmatmul.bf16.gmra.mxu0 %v1884
        %v2696 = vpop.f32.mrf.mxu0
        %v2697 = vadd.f32 %v2629, %v2696
        %v2698 = vpop.f32.mrf.mxu0
        %v2699 = vadd.f32 %v2631, %v2698
        %2700 = vmatmul.bf16.gmra.mxu0 %v1916
        %v2701 = vpop.f32.mrf.mxu0
        %v2702 = vadd.f32 %v2634, %v2701
        %v2703 = vpop.f32.mrf.mxu0
        %2704 = vdwg.mxu0
        %2705 = vmatpush.bf16.msra.mxu0 %v2344
        %2706 = vmatpush.bf16.msra.mxu0 %v2343
        %2707 = vmatpush.bf16.msra.mxu0 %v2342
        %2708 = vmatpush.bf16.msra.mxu0 %v2341
        %2709 = vmatpush.bf16.msra.mxu0 %v2340
        %2710 = vmatpush.bf16.msra.mxu0 %v2339
        %2711 = vmatpush.bf16.msra.mxu0 %v2338
        %2712 = vmatpush.bf16.msra.mxu0 %v2337
        %2713 = vmatmul.bf16.gmra.mxu0 %v1849
        %v2714 = vpop.f32.mrf.mxu0
        %v2715 = vadd.f32 %v2647, %v2714
        %v2716 = vpop.f32.mrf.mxu0
        %v2717 = vadd.f32 %v2649, %v2716
        %2718 = vmatmul.bf16.gmra.mxu0 %v1857
        %v2719 = vpop.f32.mrf.mxu0
        %v2720 = vadd.f32 %v2652, %v2719
        %v2721 = vpop.f32.mrf.mxu0
        %v2722 = vadd.f32 %v2654, %v2721
        %2723 = vmatmul.bf16.gmra.mxu0 %v1865
        %v2724 = vpop.f32.mrf.mxu0
        %v2725 = vadd.f32 %v2657, %v2724
        %v2726 = vpop.f32.mrf.mxu0
        %v2727 = vadd.f32 %v2659, %v2726
        %2728 = vmatmul.bf16.gmra.mxu0 %v1873
        %v2729 = vpop.f32.mrf.mxu0
        %v2730 = vadd.f32 %v2662, %v2729
        %v2731 = vpop.f32.mrf.mxu0
        %v2732 = vadd.f32 %v2664, %v2731
        %2733 = vmatmul.bf16.gmra.mxu0 %v1881
        %v2734 = vpop.f32.mrf.mxu0
        %v2735 = vadd.f32 %v2667, %v2734
        %v2736 = vpop.f32.mrf.mxu0
        %v2737 = vadd.f32 %v2669, %v2736
        %2738 = vmatmul.bf16.gmra.mxu0 %v1889
        %v2739 = vpop.f32.mrf.mxu0
        %v2740 = vadd.f32 %v2672, %v2739
        %v2741 = vpop.f32.mrf.mxu0
        %v2742 = vadd.f32 %v2674, %v2741
        %2743 = vmatmul.bf16.gmra.mxu0 %v1893
        %v2744 = vpop.f32.mrf.mxu0
        %v2745 = vadd.f32 %v2677, %v2744
        %v2746 = vpop.f32.mrf.mxu0
        %v2747 = vadd.f32 %v2679, %v2746
        %2748 = vmatmul.bf16.gmra.mxu0 %v1897
        %v2749 = vpop.f32.mrf.mxu0
        %v2750 = vadd.f32 %v2682, %v2749
        %v2751 = vpop.f32.mrf.mxu0
        %v2752 = vadd.f32 %v2684, %v2751
        %2753 = vmatmul.bf16.gmra.mxu0 %v1901
        %v2754 = vpop.f32.mrf.mxu0
        %v2755 = vadd.f32 %v2687, %v2754
        %v2756 = vpop.f32.mrf.mxu0
        %v2757 = vadd.f32 %v2689, %v2756
        %2758 = vmatmul.bf16.gmra.mxu0 %v1905
        %v2759 = vpop.f32.mrf.mxu0
        %v2760 = vadd.f32 %v2692, %v2759
        %v2761 = vpop.f32.mrf.mxu0
        %v2762 = vadd.f32 %v2694, %v2761
        %2763 = vmatmul.bf16.gmra.mxu0 %v1909
        %v2764 = vpop.f32.mrf.mxu0
        %v2765 = vadd.f32 %v2697, %v2764
        %v2766 = vpop.f32.mrf.mxu0
        %v2767 = vadd.f32 %v2699, %v2766
        %2768 = vmatmul.bf16.gmra.mxu0 %v1917
        %v2769 = vpop.f32.mrf.mxu0
        %v2770 = vadd.f32 %v2702, %v2769
        %v2771 = vpop.f32.mrf.mxu0
        %2772 = vdwg.mxu0
        %2773 = vmatpush.bf16.msra.mxu0 %v2352
        %2774 = vmatpush.bf16.msra.mxu0 %v2351
        %2775 = vmatpush.bf16.msra.mxu0 %v2350
        %2776 = vmatpush.bf16.msra.mxu0 %v2349
        %2777 = vmatpush.bf16.msra.mxu0 %v2348
        %2778 = vmatpush.bf16.msra.mxu0 %v2347
        %2779 = vmatpush.bf16.msra.mxu0 %v2346
        %2780 = vmatpush.bf16.msra.mxu0 %v2345
        %2781 = vmatmul.bf16.gmra.mxu0 %v1850
        %v2782 = vpop.f32.mrf.mxu0
        %v2783 = vadd.f32 %v2715, %v2782
        %v2784 = vpop.f32.mrf.mxu0
        %v2785 = vadd.f32 %v2717, %v2784
        %2786 = vmatmul.bf16.gmra.mxu0 %v1858
        %v2787 = vpop.f32.mrf.mxu0
        %v2788 = vadd.f32 %v2720, %v2787
        %v2789 = vpop.f32.mrf.mxu0
        %v2790 = vadd.f32 %v2722, %v2789
        %2791 = vmatmul.bf16.gmra.mxu0 %v1866
        %v2792 = vpop.f32.mrf.mxu0
        %v2793 = vadd.f32 %v2725, %v2792
        %v2794 = vpop.f32.mrf.mxu0
        %v2795 = vadd.f32 %v2727, %v2794
        %2796 = vmatmul.bf16.gmra.mxu0 %v1874
        %v2797 = vpop.f32.mrf.mxu0
        %v2798 = vadd.f32 %v2730, %v2797
        %v2799 = vpop.f32.mrf.mxu0
        %v2800 = vadd.f32 %v2732, %v2799
        %2801 = vmatmul.bf16.gmra.mxu0 %v1882
        %v2802 = vpop.f32.mrf.mxu0
        %v2803 = vadd.f32 %v2735, %v2802
        %v2804 = vpop.f32.mrf.mxu0
        %v2805 = vadd.f32 %v2737, %v2804
        %2806 = vmatmul.bf16.gmra.mxu0 %v1890
        %v2807 = vpop.f32.mrf.mxu0
        %v2808 = vadd.f32 %v2740, %v2807
        %v2809 = vpop.f32.mrf.mxu0
        %v2810 = vadd.f32 %v2742, %v2809
        %2811 = vmatmul.bf16.gmra.mxu0 %v1894
        %v2812 = vpop.f32.mrf.mxu0
        %v2813 = vadd.f32 %v2745, %v2812
        %v2814 = vpop.f32.mrf.mxu0
        %v2815 = vadd.f32 %v2747, %v2814
        %2816 = vmatmul.bf16.gmra.mxu0 %v1898
        %v2817 = vpop.f32.mrf.mxu0
        %v2818 = vadd.f32 %v2750, %v2817
        %v2819 = vpop.f32.mrf.mxu0
        %v2820 = vadd.f32 %v2752, %v2819
        %2821 = vmatmul.bf16.gmra.mxu0 %v1902
        %v2822 = vpop.f32.mrf.mxu0
        %v2823 = vadd.f32 %v2755, %v2822
        %v2824 = vpop.f32.mrf.mxu0
        %v2825 = vadd.f32 %v2757, %v2824
        %2826 = vmatmul.bf16.gmra.mxu0 %v1906
        %v2827 = vpop.f32.mrf.mxu0
        %v2828 = vadd.f32 %v2760, %v2827
        %v2829 = vpop.f32.mrf.mxu0
        %v2830 = vadd.f32 %v2762, %v2829
        %2831 = vmatmul.bf16.gmra.mxu0 %v1910
        %v2832 = vpop.f32.mrf.mxu0
        %v2833 = vadd.f32 %v2765, %v2832
        %v2834 = vpop.f32.mrf.mxu0
        %v2835 = vadd.f32 %v2767, %v2834
        %2836 = vmatmul.bf16.gmra.mxu0 %v1918
        %v2837 = vpop.f32.mrf.mxu0
        %v2838 = vadd.f32 %v2770, %v2837
        %v2839 = vpop.f32.mrf.mxu0
        %2840 = vdwg.mxu0
        %2841 = vmatpush.bf16.msra.mxu0 %v2360
        %2842 = vmatpush.bf16.msra.mxu0 %v2359
        %2843 = vmatpush.bf16.msra.mxu0 %v2358
        %2844 = vmatpush.bf16.msra.mxu0 %v2357
        %2845 = vmatpush.bf16.msra.mxu0 %v2356
        %2846 = vmatpush.bf16.msra.mxu0 %v2355
        %2847 = vmatpush.bf16.msra.mxu0 %v2354
        %2848 = vmatpush.bf16.msra.mxu0 %v2353
        %2849 = vmatmul.bf16.gmra.mxu0 %v1851
        %v2850 = vpop.f32.mrf.mxu0
        %v2851 = vadd.f32 %v2783, %v2850
        %v2852 = vpop.f32.mrf.mxu0
        %v2853 = vadd.f32 %v2785, %v2852
        %2854 = vmatmul.bf16.gmra.mxu0 %v1859
        %v2855 = vpop.f32.mrf.mxu0
        %v2856 = vadd.f32 %v2788, %v2855
        %v2857 = vpop.f32.mrf.mxu0
        %v2858 = vadd.f32 %v2790, %v2857
        %2859 = vmatmul.bf16.gmra.mxu0 %v1867
        %v2860 = vpop.f32.mrf.mxu0
        %v2861 = vadd.f32 %v2793, %v2860
        %v2862 = vpop.f32.mrf.mxu0
        %v2863 = vadd.f32 %v2795, %v2862
        %2864 = vmatmul.bf16.gmra.mxu0 %v1875
        %v2865 = vpop.f32.mrf.mxu0
        %v2866 = vadd.f32 %v2798, %v2865
        %v2867 = vpop.f32.mrf.mxu0
        %v2868 = vadd.f32 %v2800, %v2867
        %2869 = vmatmul.bf16.gmra.mxu0 %v1883
        %v2870 = vpop.f32.mrf.mxu0
        %v2871 = vadd.f32 %v2803, %v2870
        %v2872 = vpop.f32.mrf.mxu0
        %v2873 = vadd.f32 %v2805, %v2872
        %2874 = vmatmul.bf16.gmra.mxu0 %v1891
        %v2875 = vpop.f32.mrf.mxu0
        %v2876 = vadd.f32 %v2808, %v2875
        %v2877 = vpop.f32.mrf.mxu0
        %v2878 = vadd.f32 %v2810, %v2877
        %2879 = vmatmul.bf16.gmra.mxu0 %v1895
        %v2880 = vpop.f32.mrf.mxu0
        %v2881 = vadd.f32 %v2813, %v2880
        %v2882 = vpop.f32.mrf.mxu0
        %v2883 = vadd.f32 %v2815, %v2882
        %2884 = vmatmul.bf16.gmra.mxu0 %v1899
        %v2885 = vpop.f32.mrf.mxu0
        %v2886 = vadd.f32 %v2818, %v2885
        %v2887 = vpop.f32.mrf.mxu0
        %v2888 = vadd.f32 %v2820, %v2887
        %2889 = vmatmul.bf16.gmra.mxu0 %v1903
        %v2890 = vpop.f32.mrf.mxu0
        %v2891 = vadd.f32 %v2823, %v2890
        %v2892 = vpop.f32.mrf.mxu0
        %v2893 = vadd.f32 %v2825, %v2892
        %2894 = vmatmul.bf16.gmra.mxu0 %v1907
        %v2895 = vpop.f32.mrf.mxu0
        %v2896 = vadd.f32 %v2828, %v2895
        %v2897 = vpop.f32.mrf.mxu0
        %v2898 = vadd.f32 %v2830, %v2897
        %2899 = vmatmul.bf16.gmra.mxu0 %v1911
        %v2900 = vpop.f32.mrf.mxu0
        %v2901 = vadd.f32 %v2833, %v2900
        %v2902 = vpop.f32.mrf.mxu0
        %v2903 = vadd.f32 %v2835, %v2902
        %2904 = vmatmul.bf16.gmra.mxu0 %v1919
        %v2905 = vpop.f32.mrf.mxu0
        %v2906 = vadd.f32 %v2838, %v2905
        %v2907 = vpop.f32.mrf.mxu0
        %2908 = vdwg.mxu0
        %2909 = vmatpush.bf16.msra.mxu0 %v2368
        %2910 = vmatpush.bf16.msra.mxu0 %v2367
        %2911 = vmatpush.bf16.msra.mxu0 %v2366
        %2912 = vmatpush.bf16.msra.mxu0 %v2365
        %2913 = vmatpush.bf16.msra.mxu0 %v2364
        %2914 = vmatpush.bf16.msra.mxu0 %v2363
        %2915 = vmatpush.bf16.msra.mxu0 %v2362
        %2916 = vmatpush.bf16.msra.mxu0 %v2361
        %2917 = vmatmul.bf16.gmra.mxu0 %v1852
        %v2918 = vpop.f32.mrf.mxu0
        %v2919 = vadd.f32 %v2851, %v2918
        %v2920 = vpop.f32.mrf.mxu0
        %v2921 = vadd.f32 %v2853, %v2920
        %2922 = vmatmul.bf16.gmra.mxu0 %v1860
        %v2923 = vpop.f32.mrf.mxu0
        %v2924 = vadd.f32 %v2856, %v2923
        %v2925 = vpop.f32.mrf.mxu0
        %v2926 = vadd.f32 %v2858, %v2925
        %2927 = vmatmul.bf16.gmra.mxu0 %v1868
        %v2928 = vpop.f32.mrf.mxu0
        %v2929 = vadd.f32 %v2861, %v2928
        %v2930 = vpop.f32.mrf.mxu0
        %v2931 = vadd.f32 %v2863, %v2930
        %2932 = vmatmul.bf16.gmra.mxu0 %v1876
        %v2933 = vpop.f32.mrf.mxu0
        %v2934 = vadd.f32 %v2866, %v2933
        %v2935 = vpop.f32.mrf.mxu0
        %v2936 = vadd.f32 %v2868, %v2935
        %2937 = vmatmul.bf16.gmra.mxu0 %v1884
        %v2938 = vpop.f32.mrf.mxu0
        %v2939 = vadd.f32 %v2871, %v2938
        %v2940 = vpop.f32.mrf.mxu0
        %v2941 = vadd.f32 %v2873, %v2940
        %2942 = vmatmul.bf16.gmra.mxu0 %v1892
        %v2943 = vpop.f32.mrf.mxu0
        %v2944 = vadd.f32 %v2876, %v2943
        %v2945 = vpop.f32.mrf.mxu0
        %v2946 = vadd.f32 %v2878, %v2945
        %2947 = vmatmul.bf16.gmra.mxu0 %v1896
        %v2948 = vpop.f32.mrf.mxu0
        %v2949 = vadd.f32 %v2881, %v2948
        %v2950 = vpop.f32.mrf.mxu0
        %v2951 = vadd.f32 %v2883, %v2950
        %2952 = vmatmul.bf16.gmra.mxu0 %v1900
        %v2953 = vpop.f32.mrf.mxu0
        %v2954 = vadd.f32 %v2886, %v2953
        %v2955 = vpop.f32.mrf.mxu0
        %v2956 = vadd.f32 %v2888, %v2955
        %2957 = vmatmul.bf16.gmra.mxu0 %v1904
        %v2958 = vpop.f32.mrf.mxu0
        %v2959 = vadd.f32 %v2891, %v2958
        %v2960 = vpop.f32.mrf.mxu0
        %v2961 = vadd.f32 %v2893, %v2960
        %2962 = vmatmul.bf16.gmra.mxu0 %v1908
        %v2963 = vpop.f32.mrf.mxu0
        %v2964 = vadd.f32 %v2896, %v2963
        %v2965 = vpop.f32.mrf.mxu0
        %v2966 = vadd.f32 %v2898, %v2965
        %2967 = vmatmul.bf16.gmra.mxu0 %v1912
        %v2968 = vpop.f32.mrf.mxu0
        %v2969 = vadd.f32 %v2901, %v2968
        %v2970 = vpop.f32.mrf.mxu0
        %v2971 = vadd.f32 %v2903, %v2970
        %2972 = vmatmul.bf16.gmra.mxu0 %v1920
        %v2973 = vpop.f32.mrf.mxu0
        %v2974 = vadd.f32 %v2906, %v2973
        %v2975 = vpop.f32.mrf.mxu0
        %2976 = vdwg.mxu0
        %v2977 = vld [vmem:[%s5 + $0x2] sm:$0x1]
        %v2978 = vmax.f32 %v2919, %v2949
        %v2979 = vmax.f32 %v2921, %v2951
        %v2980 = vmax.f32 %v2924, %v2954
        %v2981 = vmax.f32 %v2926, %v2956
        %v2982 = vmax.f32 %v2929, %v2959
        %v2983 = vmax.f32 %v2931, %v2961
        %v2984 = vmax.f32 %v2934, %v2964
        %v2985 = vmax.f32 %v2936, %v2966
        %v2986 = vmax.f32 %v2939, %v2969
        %v2987 = vmax.f32 %v2941, %v2971
        %v2988 = vmax.f32 %v2944, %v2974
        %v2989 = vmax.f32 %v2978, %v2921
        %v2990 = vmax.f32 %v2979, %v2924
        %v2991 = vmax.f32 %v2980, %v2926
        %v2992 = vmax.f32 %v2981, %v2929
        %v2993 = vmax.f32 %v2982, %v2931
        %v2994 = vmax.f32 %v2983, %v2934
        %v2995 = vmax.f32 %v2984, %v2936
        %v2996 = vmax.f32 %v2985, %v2939
        %v2997 = vmax.f32 %v2986, %v2941
        %v2998 = vmax.f32 %v2987, %v2944
        %v2999 = vmax.f32 %v2988, %v2946
        %v3001 = vperm.slane %v2977, 0
        %v3003 = vadd.f32 %v2989, %v3001
        %v3004 = vadd.f32 %v2990, %v3001
        %v3005 = vadd.f32 %v2991, %v3001
        %v3006 = vadd.f32 %v2992, %v3001
        %v3007 = vadd.f32 %v2993, %v3001
        %v3008 = vadd.f32 %v2994, %v3001
        %v3009 = vadd.f32 %v2995, %v3001
        %v3010 = vadd.f32 %v2996, %v3001
        %v3011 = vadd.f32 %v2997, %v3001
        %v3012 = vadd.f32 %v2998, %v3001
        %v3013 = vadd.f32 %v2999, %v3001
        %vm3014 = vcmp.ge.f32.partialorder %v3003, 0.0
        %vm3015 = vcmp.ge.f32.partialorder %v3004, 0.0
        %vm3016 = vcmp.ge.f32.partialorder %v3005, 0.0
        %vm3017 = vcmp.ge.f32.partialorder %v3006, 0.0
        %vm3018 = vcmp.ge.f32.partialorder %v3007, 0.0
        %vm3019 = vcmp.ge.f32.partialorder %v3008, 0.0
        %vm3020 = vcmp.ge.f32.partialorder %v3009, 0.0
        %vm3021 = vcmp.ge.f32.partialorder %v3010, 0.0
        %vm3022 = vcmp.ge.f32.partialorder %v3011, 0.0
        %vm3023 = vcmp.ge.f32.partialorder %v3012, 0.0
        %vm3024 = vcmp.ge.f32.partialorder %v3013, 0.0
        %v3025 = vmul.f32 %v3003, 0.01
        %v3026 = vmul.f32 %v3004, 0.01
        %v3027 = vmul.f32 %v3005, 0.01
        %v3028 = vmul.f32 %v3006, 0.01
        %v3029 = vmul.f32 %v3007, 0.01
        %v3030 = vmul.f32 %v3008, 0.01
        %v3031 = vmul.f32 %v3009, 0.01
        %v3032 = vmul.f32 %v3010, 0.01
        %v3033 = vmul.f32 %v3011, 0.01
        %v3034 = vmul.f32 %v3012, 0.01
        %v3035 = vmul.f32 %v3013, 0.01
        %v3036 = vsel %vm3014, %v3003, %v3025
        %v3037 = vsel %vm3015, %v3004, %v3026
        %v3038 = vsel %vm3016, %v3005, %v3027
        %v3039 = vsel %vm3017, %v3006, %v3028
        %v3040 = vsel %vm3018, %v3007, %v3029
        %v3041 = vsel %vm3019, %v3008, %v3030
        %v3042 = vsel %vm3020, %v3009, %v3031
        %v3043 = vsel %vm3021, %v3010, %v3032
        %v3044 = vsel %vm3022, %v3011, %v3033
        %v3045 = vsel %vm3023, %v3012, %v3034
        %v3046 = vsel %vm3024, %v3013, %v3035
        %v3047 = vpack.c.bf16 %v3036, %v3036
        %v3048 = vpack.c.bf16 %v3037, %v3037
        %v3049 = vpack.c.bf16 %v3038, %v3038
        %v3050 = vpack.c.bf16 %v3039, %v3039
        %v3051 = vpack.c.bf16 %v3040, %v3040
        %v3052 = vpack.c.bf16 %v3041, %v3041
        %v3053 = vpack.c.bf16 %v3042, %v3042
        %v3054 = vpack.c.bf16 %v3043, %v3043
        %v3055 = vpack.c.bf16 %v3044, %v3044
        %v3056 = vpack.c.bf16 %v3045, %v3045
        %v3057 = vpack.c.bf16 %v3046, %v3046
        %v3058 = vld [vmem:[%s3] sm:$0xff]
        %v3059 = vld [vmem:[%s3 + $0x8] sm:$0xff]
        %v3060 = vld [vmem:[%s3 + $0x10] sm:$0xff]
        %v3061 = vld [vmem:[%s3 + $0x18] sm:$0xff]
        %v3062 = vld [vmem:[%s3 + $0x20] sm:$0xff]
        %v3063 = vld [vmem:[%s3 + $0x28] sm:$0xff]
        %v3064 = vld [vmem:[%s3 + $0x30] sm:$0xff]
        %v3065 = vld [vmem:[%s3 + $0x38] sm:$0xff]
        %v3066 = vld [vmem:[%s3 + $0x40] sm:$0xff]
        %v3067 = vld [vmem:[%s3 + $0x48] sm:$0xff]
        %v3068 = vld [vmem:[%s3 + $0x50] sm:$0xff]
        %v3069 = vld [vmem:[%s3 + $0x58] sm:$0xff]
        %v3070 = vld [vmem:[%s3 + $0x60] sm:$0xff]
        %v3071 = vld [vmem:[%s3 + $0x68] sm:$0xff]
        %v3072 = vld [vmem:[%s3 + $0x70] sm:$0xff]
        %v3073 = vld [vmem:[%s3 + $0x78] sm:$0xff]
        %v3074 = vld [vmem:[%s3 + $0x80] sm:$0xff]
        %v3075 = vld [vmem:[%s3 + $0x88] sm:$0xff]
        %v3076 = vld [vmem:[%s3 + $0x90] sm:$0xff]
        %v3077 = vld [vmem:[%s3 + $0x98] sm:$0xff]
        %v3078 = vld [vmem:[%s3 + $0xa0] sm:$0xff]
        %v3079 = vld [vmem:[%s3 + $0xa8] sm:$0xff]
        %v3080 = vld [vmem:[%s3 + $0xb0] sm:$0xff]
        %v3081 = vld [vmem:[%s3 + $0xb8] sm:$0xff]
        %v3082 = vld [vmem:[%s3 + $0xc0] sm:$0xff]
        %v3083 = vld [vmem:[%s3 + $0xc8] sm:$0xff]
        %v3084 = vld [vmem:[%s3 + $0xd0] sm:$0xff]
        %v3085 = vld [vmem:[%s3 + $0xd8] sm:$0xff]
        %v3086 = vld [vmem:[%s3 + $0xe0] sm:$0xff]
        %v3087 = vld [vmem:[%s3 + $0xe8] sm:$0xff]
        %v3088 = vld [vmem:[%s3 + $0xf0] sm:$0xff]
        %v3089 = vld [vmem:[%s3 + $0xf8] sm:$0xff]
        %v3090 = vld [vmem:[%s3 + $0x100] sm:$0xff]
        %v3091 = vld [vmem:[%s3 + $0x108] sm:$0xff]
        %v3092 = vld [vmem:[%s3 + $0x110] sm:$0xff]
        %v3093 = vld [vmem:[%s3 + $0x118] sm:$0xff]
        %v3094 = vld [vmem:[%s3 + $0x120] sm:$0xff]
        %v3095 = vld [vmem:[%s3 + $0x128] sm:$0xff]
        %v3096 = vld [vmem:[%s3 + $0x130] sm:$0xff]
        %v3097 = vld [vmem:[%s3 + $0x138] sm:$0xff]
        %v3098 = vld [vmem:[%s3 + $0x140] sm:$0xff]
        %v3099 = vld [vmem:[%s3 + $0x148] sm:$0xff]
        %v3100 = vld [vmem:[%s3 + $0x150] sm:$0xff]
        %v3101 = vld [vmem:[%s3 + $0x158] sm:$0xff]
        %v3102 = vld [vmem:[%s3 + $0x160] sm:$0xff]
        %v3103 = vld [vmem:[%s3 + $0x168] sm:$0xff]
        %v3104 = vld [vmem:[%s3 + $0x170] sm:$0xff]
        %v3105 = vld [vmem:[%s3 + $0x178] sm:$0xff]
        %v3106 = vld [vmem:[%s3 + $0x180] sm:$0xff]
        %v3107 = vld [vmem:[%s3 + $0x188] sm:$0xff]
        %v3108 = vld [vmem:[%s3 + $0x190] sm:$0xff]
        %v3109 = vld [vmem:[%s3 + $0x198] sm:$0xff]
        %v3110 = vld [vmem:[%s3 + $0x1a0] sm:$0xff]
        %v3111 = vld [vmem:[%s3 + $0x1a8] sm:$0xff]
        %v3112 = vld [vmem:[%s3 + $0x1b0] sm:$0xff]
        %v3113 = vld [vmem:[%s3 + $0x1b8] sm:$0xff]
        %v3114 = vld [vmem:[%s3 + $0x1c0] sm:$0xff]
        %v3115 = vld [vmem:[%s3 + $0x1c8] sm:$0xff]
        %v3116 = vld [vmem:[%s3 + $0x1d0] sm:$0xff]
        %v3117 = vld [vmem:[%s3 + $0x1d8] sm:$0xff]
        %v3118 = vld [vmem:[%s3 + $0x1e0] sm:$0xff]
        %v3119 = vld [vmem:[%s3 + $0x1e8] sm:$0xff]
        %v3120 = vld [vmem:[%s3 + $0x1f0] sm:$0xff]
        %v3121 = vld [vmem:[%s3 + $0x1f8] sm:$0xff]
        %v3122 = vld [vmem:[%s3 + $0x200] sm:$0xff]
        %v3123 = vld [vmem:[%s3 + $0x208] sm:$0xff]
        %v3124 = vld [vmem:[%s3 + $0x210] sm:$0xff]
        %v3125 = vld [vmem:[%s3 + $0x218] sm:$0xff]
        %v3126 = vld [vmem:[%s3 + $0x220] sm:$0xff]
        %v3127 = vld [vmem:[%s3 + $0x228] sm:$0xff]
        %v3128 = vld [vmem:[%s3 + $0x230] sm:$0xff]
        %v3129 = vld [vmem:[%s3 + $0x238] sm:$0xff]
        %v3130 = vld [vmem:[%s3 + $0x240] sm:$0xff]
        %v3131 = vld [vmem:[%s3 + $0x248] sm:$0xff]
        %v3132 = vld [vmem:[%s3 + $0x250] sm:$0xff]
        %v3133 = vld [vmem:[%s3 + $0x258] sm:$0xff]
        %v3134 = vld [vmem:[%s3 + $0x260] sm:$0xff]
        %v3135 = vld [vmem:[%s3 + $0x268] sm:$0xff]
        %v3136 = vld [vmem:[%s3 + $0x270] sm:$0xff]
        %v3137 = vld [vmem:[%s3 + $0x278] sm:$0xff]
        %v3138 = vld [vmem:[%s3 + $0x280] sm:$0xff]
        %v3139 = vld [vmem:[%s3 + $0x288] sm:$0xff]
        %v3140 = vld [vmem:[%s3 + $0x290] sm:$0xff]
        %v3141 = vld [vmem:[%s3 + $0x298] sm:$0xff]
        %v3142 = vld [vmem:[%s3 + $0x2a0] sm:$0xff]
        %v3143 = vld [vmem:[%s3 + $0x2a8] sm:$0xff]
        %v3144 = vld [vmem:[%s3 + $0x2b0] sm:$0xff]
        %v3145 = vld [vmem:[%s3 + $0x2b8] sm:$0xff]
        %v3146 = vld [vmem:[%s3 + $0x2c0] sm:$0xff]
        %v3147 = vld [vmem:[%s3 + $0x2c8] sm:$0xff]
        %v3148 = vld [vmem:[%s3 + $0x2d0] sm:$0xff]
        %v3149 = vld [vmem:[%s3 + $0x2d8] sm:$0xff]
        %v3150 = vld [vmem:[%s3 + $0x2e0] sm:$0xff]
        %v3151 = vld [vmem:[%s3 + $0x2e8] sm:$0xff]
        %v3152 = vld [vmem:[%s3 + $0x2f0] sm:$0xff]
        %v3153 = vld [vmem:[%s3 + $0x2f8] sm:$0xff]
        %v3154 = vld [vmem:[%s3 + $0x300] sm:$0xff]
        %v3155 = vld [vmem:[%s3 + $0x308] sm:$0xff]
        %v3156 = vld [vmem:[%s3 + $0x310] sm:$0xff]
        %v3157 = vld [vmem:[%s3 + $0x318] sm:$0xff]
        %v3158 = vld [vmem:[%s3 + $0x320] sm:$0xff]
        %v3159 = vld [vmem:[%s3 + $0x328] sm:$0xff]
        %v3160 = vld [vmem:[%s3 + $0x330] sm:$0xff]
        %v3161 = vld [vmem:[%s3 + $0x338] sm:$0xff]
        %v3162 = vld [vmem:[%s3 + $0x340] sm:$0xff]
        %v3163 = vld [vmem:[%s3 + $0x348] sm:$0xff]
        %v3164 = vld [vmem:[%s3 + $0x350] sm:$0xff]
        %v3165 = vld [vmem:[%s3 + $0x358] sm:$0xff]
        %v3166 = vld [vmem:[%s3 + $0x360] sm:$0xff]
        %v3167 = vld [vmem:[%s3 + $0x368] sm:$0xff]
        %v3168 = vld [vmem:[%s3 + $0x370] sm:$0xff]
        %v3169 = vld [vmem:[%s3 + $0x378] sm:$0xff]
        %v3170 = vld [vmem:[%s3 + $0x380] sm:$0xff]
        %v3171 = vld [vmem:[%s3 + $0x388] sm:$0xff]
        %v3172 = vld [vmem:[%s3 + $0x390] sm:$0xff]
        %v3173 = vld [vmem:[%s3 + $0x398] sm:$0xff]
        %v3174 = vld [vmem:[%s3 + $0x3a0] sm:$0xff]
        %v3175 = vld [vmem:[%s3 + $0x3a8] sm:$0xff]
        %v3176 = vld [vmem:[%s3 + $0x3b0] sm:$0xff]
        %v3177 = vld [vmem:[%s3 + $0x3b8] sm:$0xff]
        %v3178 = vld [vmem:[%s3 + $0x3c0] sm:$0xff]
        %v3179 = vld [vmem:[%s3 + $0x3c8] sm:$0xff]
        %v3180 = vld [vmem:[%s3 + $0x3d0] sm:$0xff]
        %v3181 = vld [vmem:[%s3 + $0x3d8] sm:$0xff]
        %v3182 = vld [vmem:[%s3 + $0x3e0] sm:$0xff]
        %v3183 = vld [vmem:[%s3 + $0x3e8] sm:$0xff]
        %v3184 = vld [vmem:[%s3 + $0x3f0] sm:$0xff]
        %v3185 = vld [vmem:[%s3 + $0x3f8] sm:$0xff]
        %v3186 = vld [vmem:[%s3 + $0x400] sm:$0xff]
        %v3187 = vld [vmem:[%s3 + $0x408] sm:$0xff]
        %v3188 = vld [vmem:[%s3 + $0x410] sm:$0xff]
        %v3189 = vld [vmem:[%s3 + $0x418] sm:$0xff]
        %v3190 = vld [vmem:[%s3 + $0x420] sm:$0xff]
        %v3191 = vld [vmem:[%s3 + $0x428] sm:$0xff]
        %v3192 = vld [vmem:[%s3 + $0x430] sm:$0xff]
        %v3193 = vld [vmem:[%s3 + $0x438] sm:$0xff]
        %v3194 = vld [vmem:[%s3 + $0x440] sm:$0xff]
        %v3195 = vld [vmem:[%s3 + $0x448] sm:$0xff]
        %v3196 = vld [vmem:[%s3 + $0x450] sm:$0xff]
        %v3197 = vld [vmem:[%s3 + $0x458] sm:$0xff]
        %v3198 = vld [vmem:[%s3 + $0x460] sm:$0xff]
        %v3199 = vld [vmem:[%s3 + $0x468] sm:$0xff]
        %v3200 = vld [vmem:[%s3 + $0x470] sm:$0xff]
        %v3201 = vld [vmem:[%s3 + $0x478] sm:$0xff]
        %v3202 = vld [vmem:[%s3 + $0x480] sm:$0xff]
        %v3203 = vld [vmem:[%s3 + $0x488] sm:$0xff]
        %v3204 = vld [vmem:[%s3 + $0x490] sm:$0xff]
        %v3205 = vld [vmem:[%s3 + $0x498] sm:$0xff]
        %v3206 = vld [vmem:[%s3 + $0x4a0] sm:$0xff]
        %v3207 = vld [vmem:[%s3 + $0x4a8] sm:$0xff]
        %v3208 = vld [vmem:[%s3 + $0x4b0] sm:$0xff]
        %v3209 = vld [vmem:[%s3 + $0x4b8] sm:$0xff]
        %v3210 = vld [vmem:[%s3 + $0x4c0] sm:$0xff]
        %v3211 = vld [vmem:[%s3 + $0x4c8] sm:$0xff]
        %v3212 = vld [vmem:[%s3 + $0x4d0] sm:$0xff]
        %v3213 = vld [vmem:[%s3 + $0x4d8] sm:$0xff]
        %v3214 = vld [vmem:[%s3 + $0x4e0] sm:$0xff]
        %v3215 = vld [vmem:[%s3 + $0x4e8] sm:$0xff]
        %v3216 = vld [vmem:[%s3 + $0x4f0] sm:$0xff]
        %v3217 = vld [vmem:[%s3 + $0x4f8] sm:$0xff]
        %v3218 = vld [vmem:[%s3 + $0x500] sm:$0xff]
        %v3219 = vld [vmem:[%s3 + $0x508] sm:$0xff]
        %v3220 = vld [vmem:[%s3 + $0x510] sm:$0xff]
        %v3221 = vld [vmem:[%s3 + $0x518] sm:$0xff]
        %v3222 = vld [vmem:[%s3 + $0x520] sm:$0xff]
        %v3223 = vld [vmem:[%s3 + $0x528] sm:$0xff]
        %v3224 = vld [vmem:[%s3 + $0x530] sm:$0xff]
        %v3225 = vld [vmem:[%s3 + $0x538] sm:$0xff]
        %v3226 = vld [vmem:[%s3 + $0x540] sm:$0xff]
        %v3227 = vld [vmem:[%s3 + $0x548] sm:$0xff]
        %v3228 = vld [vmem:[%s3 + $0x550] sm:$0xff]
        %v3229 = vld [vmem:[%s3 + $0x558] sm:$0xff]
        %v3230 = vld [vmem:[%s3 + $0x560] sm:$0xff]
        %v3231 = vld [vmem:[%s3 + $0x568] sm:$0xff]
        %v3232 = vld [vmem:[%s3 + $0x570] sm:$0xff]
        %v3233 = vld [vmem:[%s3 + $0x578] sm:$0xff]
        %v3234 = vld [vmem:[%s3 + $0x580] sm:$0xff]
        %v3235 = vld [vmem:[%s3 + $0x588] sm:$0xff]
        %v3236 = vld [vmem:[%s3 + $0x590] sm:$0xff]
        %v3237 = vld [vmem:[%s3 + $0x598] sm:$0xff]
        %v3238 = vld [vmem:[%s3 + $0x5a0] sm:$0xff]
        %v3239 = vld [vmem:[%s3 + $0x5a8] sm:$0xff]
        %v3240 = vld [vmem:[%s3 + $0x5b0] sm:$0xff]
        %v3241 = vld [vmem:[%s3 + $0x5b8] sm:$0xff]
        %v3242 = vld [vmem:[%s3 + $0x5c0] sm:$0xff]
        %v3243 = vld [vmem:[%s3 + $0x5c8] sm:$0xff]
        %v3244 = vld [vmem:[%s3 + $0x5d0] sm:$0xff]
        %v3245 = vld [vmem:[%s3 + $0x5d8] sm:$0xff]
        %v3246 = vld [vmem:[%s3 + $0x5e0] sm:$0xff]
        %v3247 = vld [vmem:[%s3 + $0x5e8] sm:$0xff]
        %v3248 = vld [vmem:[%s3 + $0x5f0] sm:$0xff]
        %v3249 = vld [vmem:[%s3 + $0x5f8] sm:$0xff]
        %v3250 = vld [vmem:[%s3 + $0x600] sm:$0xff]
        %v3251 = vld [vmem:[%s3 + $0x608] sm:$0xff]
        %v3252 = vld [vmem:[%s3 + $0x610] sm:$0xff]
        %v3253 = vld [vmem:[%s3 + $0x618] sm:$0xff]
        %v3254 = vld [vmem:[%s3 + $0x620] sm:$0xff]
        %v3255 = vld [vmem:[%s3 + $0x628] sm:$0xff]
        %v3256 = vld [vmem:[%s3 + $0x630] sm:$0xff]
        %v3257 = vld [vmem:[%s3 + $0x638] sm:$0xff]
        %v3258 = vld [vmem:[%s3 + $0x640] sm:$0xff]
        %v3259 = vld [vmem:[%s3 + $0x648] sm:$0xff]
        %v3260 = vld [vmem:[%s3 + $0x650] sm:$0xff]
        %v3261 = vld [vmem:[%s3 + $0x658] sm:$0xff]
        %v3262 = vld [vmem:[%s3 + $0x660] sm:$0xff]
        %v3263 = vld [vmem:[%s3 + $0x668] sm:$0xff]
        %v3264 = vld [vmem:[%s3 + $0x670] sm:$0xff]
        %v3265 = vld [vmem:[%s3 + $0x678] sm:$0xff]
        %v3266 = vld [vmem:[%s3 + $0x680] sm:$0xff]
        %v3267 = vld [vmem:[%s3 + $0x688] sm:$0xff]
        %v3268 = vld [vmem:[%s3 + $0x690] sm:$0xff]
        %v3269 = vld [vmem:[%s3 + $0x698] sm:$0xff]
        %v3270 = vld [vmem:[%s3 + $0x6a0] sm:$0xff]
        %v3271 = vld [vmem:[%s3 + $0x6a8] sm:$0xff]
        %v3272 = vld [vmem:[%s3 + $0x6b0] sm:$0xff]
        %v3273 = vld [vmem:[%s3 + $0x6b8] sm:$0xff]
        %v3274 = vld [vmem:[%s3 + $0x6c0] sm:$0xff]
        %v3275 = vld [vmem:[%s3 + $0x6c8] sm:$0xff]
        %v3276 = vld [vmem:[%s3 + $0x6d0] sm:$0xff]
        %v3277 = vld [vmem:[%s3 + $0x6d8] sm:$0xff]
        %v3278 = vld [vmem:[%s3 + $0x6e0] sm:$0xff]
        %v3279 = vld [vmem:[%s3 + $0x6e8] sm:$0xff]
        %v3280 = vld [vmem:[%s3 + $0x6f0] sm:$0xff]
        %v3281 = vld [vmem:[%s3 + $0x6f8] sm:$0xff]
        %v3282 = vld [vmem:[%s3 + $0x700] sm:$0xff]
        %v3283 = vld [vmem:[%s3 + $0x708] sm:$0xff]
        %v3284 = vld [vmem:[%s3 + $0x710] sm:$0xff]
        %v3285 = vld [vmem:[%s3 + $0x718] sm:$0xff]
        %v3286 = vld [vmem:[%s3 + $0x720] sm:$0xff]
        %v3287 = vld [vmem:[%s3 + $0x728] sm:$0xff]
        %v3288 = vld [vmem:[%s3 + $0x730] sm:$0xff]
        %v3289 = vld [vmem:[%s3 + $0x738] sm:$0xff]
        %v3290 = vld [vmem:[%s3 + $0x740] sm:$0xff]
        %v3291 = vld [vmem:[%s3 + $0x748] sm:$0xff]
        %v3292 = vld [vmem:[%s3 + $0x750] sm:$0xff]
        %v3293 = vld [vmem:[%s3 + $0x758] sm:$0xff]
        %v3294 = vld [vmem:[%s3 + $0x760] sm:$0xff]
        %v3295 = vld [vmem:[%s3 + $0x768] sm:$0xff]
        %v3296 = vld [vmem:[%s3 + $0x770] sm:$0xff]
        %v3297 = vld [vmem:[%s3 + $0x778] sm:$0xff]
        %v3298 = vld [vmem:[%s3 + $0x780] sm:$0xff]
        %v3299 = vld [vmem:[%s3 + $0x788] sm:$0xff]
        %v3300 = vld [vmem:[%s3 + $0x790] sm:$0xff]
        %v3301 = vld [vmem:[%s3 + $0x798] sm:$0xff]
        %v3302 = vld [vmem:[%s3 + $0x7a0] sm:$0xff]
        %v3303 = vld [vmem:[%s3 + $0x7a8] sm:$0xff]
        %v3304 = vld [vmem:[%s3 + $0x7b0] sm:$0xff]
        %v3305 = vld [vmem:[%s3 + $0x7b8] sm:$0xff]
        %v3306 = vld [vmem:[%s3 + $0x7c0] sm:$0xff]
        %v3307 = vld [vmem:[%s3 + $0x7c8] sm:$0xff]
        %v3308 = vld [vmem:[%s3 + $0x7d0] sm:$0xff]
        %v3309 = vld [vmem:[%s3 + $0x7d8] sm:$0xff]
        %v3310 = vld [vmem:[%s3 + $0x7e0] sm:$0xff]
        %v3311 = vld [vmem:[%s3 + $0x7e8] sm:$0xff]
        %v3312 = vld [vmem:[%s3 + $0x7f0] sm:$0xff]
        %v3313 = vld [vmem:[%s3 + $0x7f8] sm:$0xff]
        %v3314 = vld [vmem:[%s3 + $0x800] sm:$0xff]
        %v3315 = vld [vmem:[%s3 + $0x808] sm:$0xff]
        %v3316 = vld [vmem:[%s3 + $0x810] sm:$0xff]
        %v3317 = vld [vmem:[%s3 + $0x818] sm:$0xff]
        %v3318 = vld [vmem:[%s3 + $0x820] sm:$0xff]
        %v3319 = vld [vmem:[%s3 + $0x828] sm:$0xff]
        %v3320 = vld [vmem:[%s3 + $0x830] sm:$0xff]
        %v3321 = vld [vmem:[%s3 + $0x838] sm:$0xff]
        %v3322 = vld [vmem:[%s3 + $0x840] sm:$0xff]
        %v3323 = vld [vmem:[%s3 + $0x848] sm:$0xff]
        %v3324 = vld [vmem:[%s3 + $0x850] sm:$0xff]
        %v3325 = vld [vmem:[%s3 + $0x858] sm:$0xff]
        %v3326 = vld [vmem:[%s3 + $0x860] sm:$0xff]
        %v3327 = vld [vmem:[%s3 + $0x868] sm:$0xff]
        %v3328 = vld [vmem:[%s3 + $0x870] sm:$0xff]
        %v3329 = vld [vmem:[%s3 + $0x878] sm:$0xff]
        %v3330 = vld [vmem:[%s3 + $0x880] sm:$0xff]
        %v3331 = vld [vmem:[%s3 + $0x888] sm:$0xff]
        %v3332 = vld [vmem:[%s3 + $0x890] sm:$0xff]
        %v3333 = vld [vmem:[%s3 + $0x898] sm:$0xff]
        %v3334 = vld [vmem:[%s3 + $0x8a0] sm:$0xff]
        %v3335 = vld [vmem:[%s3 + $0x8a8] sm:$0xff]
        %v3336 = vld [vmem:[%s3 + $0x8b0] sm:$0xff]
        %v3337 = vld [vmem:[%s3 + $0x8b8] sm:$0xff]
        %v3338 = vld [vmem:[%s3 + $0x8c0] sm:$0xff]
        %v3339 = vld [vmem:[%s3 + $0x8c8] sm:$0xff]
        %v3340 = vld [vmem:[%s3 + $0x8d0] sm:$0xff]
        %v3341 = vld [vmem:[%s3 + $0x8d8] sm:$0xff]
        %v3342 = vld [vmem:[%s3 + $0x8e0] sm:$0xff]
        %v3343 = vld [vmem:[%s3 + $0x8e8] sm:$0xff]
        %v3344 = vld [vmem:[%s3 + $0x8f0] sm:$0xff]
        %v3345 = vld [vmem:[%s3 + $0x8f8] sm:$0xff]
        %v3346 = vld [vmem:[%s3 + $0x900] sm:$0xff]
        %v3347 = vld [vmem:[%s3 + $0x908] sm:$0xff]
        %v3348 = vld [vmem:[%s3 + $0x910] sm:$0xff]
        %v3349 = vld [vmem:[%s3 + $0x918] sm:$0xff]
        %v3350 = vld [vmem:[%s3 + $0x920] sm:$0xff]
        %v3351 = vld [vmem:[%s3 + $0x928] sm:$0xff]
        %v3352 = vld [vmem:[%s3 + $0x930] sm:$0xff]
        %v3353 = vld [vmem:[%s3 + $0x938] sm:$0xff]
        %v3354 = vld [vmem:[%s3 + $0x940] sm:$0xff]
        %v3355 = vld [vmem:[%s3 + $0x948] sm:$0xff]
        %v3356 = vld [vmem:[%s3 + $0x950] sm:$0xff]
        %v3357 = vld [vmem:[%s3 + $0x958] sm:$0xff]
        %v3358 = vld [vmem:[%s3 + $0x960] sm:$0xff]
        %v3359 = vld [vmem:[%s3 + $0x968] sm:$0xff]
        %v3360 = vld [vmem:[%s3 + $0x970] sm:$0xff]
        %v3361 = vld [vmem:[%s3 + $0x978] sm:$0xff]
        %v3362 = vld [vmem:[%s3 + $0x980] sm:$0xff]
        %v3363 = vld [vmem:[%s3 + $0x988] sm:$0xff]
        %v3364 = vld [vmem:[%s3 + $0x990] sm:$0xff]
        %v3365 = vld [vmem:[%s3 + $0x998] sm:$0xff]
        %v3366 = vld [vmem:[%s3 + $0x9a0] sm:$0xff]
        %v3367 = vld [vmem:[%s3 + $0x9a8] sm:$0xff]
        %v3368 = vld [vmem:[%s3 + $0x9b0] sm:$0xff]
        %v3369 = vld [vmem:[%s3 + $0x9b8] sm:$0xff]
        %v3370 = vld [vmem:[%s3 + $0x9c0] sm:$0xff]
        %v3371 = vld [vmem:[%s3 + $0x9c8] sm:$0xff]
        %v3372 = vld [vmem:[%s3 + $0x9d0] sm:$0xff]
        %v3373 = vld [vmem:[%s3 + $0x9d8] sm:$0xff]
        %v3374 = vld [vmem:[%s3 + $0x9e0] sm:$0xff]
        %v3375 = vld [vmem:[%s3 + $0x9e8] sm:$0xff]
        %v3376 = vld [vmem:[%s3 + $0x9f0] sm:$0xff]
        %v3377 = vld [vmem:[%s3 + $0x9f8] sm:$0xff]
        %v3378 = vld [vmem:[%s3 + $0xa00] sm:$0xff]
        %v3379 = vld [vmem:[%s3 + $0xa08] sm:$0xff]
        %v3380 = vld [vmem:[%s3 + $0xa10] sm:$0xff]
        %v3381 = vld [vmem:[%s3 + $0xa18] sm:$0xff]
        %v3382 = vld [vmem:[%s3 + $0xa20] sm:$0xff]
        %v3383 = vld [vmem:[%s3 + $0xa28] sm:$0xff]
        %v3384 = vld [vmem:[%s3 + $0xa30] sm:$0xff]
        %v3385 = vld [vmem:[%s3 + $0xa38] sm:$0xff]
        %v3386 = vld [vmem:[%s3 + $0xa40] sm:$0xff]
        %v3387 = vld [vmem:[%s3 + $0xa48] sm:$0xff]
        %v3388 = vld [vmem:[%s3 + $0xa50] sm:$0xff]
        %v3389 = vld [vmem:[%s3 + $0xa58] sm:$0xff]
        %v3390 = vld [vmem:[%s3 + $0xa60] sm:$0xff]
        %v3391 = vld [vmem:[%s3 + $0xa68] sm:$0xff]
        %v3392 = vld [vmem:[%s3 + $0xa70] sm:$0xff]
        %v3393 = vld [vmem:[%s3 + $0xa78] sm:$0xff]
        %v3394 = vld [vmem:[%s3 + $0xa80] sm:$0xff]
        %v3395 = vld [vmem:[%s3 + $0xa88] sm:$0xff]
        %v3396 = vld [vmem:[%s3 + $0xa90] sm:$0xff]
        %v3397 = vld [vmem:[%s3 + $0xa98] sm:$0xff]
        %v3398 = vld [vmem:[%s3 + $0xaa0] sm:$0xff]
        %v3399 = vld [vmem:[%s3 + $0xaa8] sm:$0xff]
        %v3400 = vld [vmem:[%s3 + $0xab0] sm:$0xff]
        %v3401 = vld [vmem:[%s3 + $0xab8] sm:$0xff]
        %v3402 = vld [vmem:[%s3 + $0xac0] sm:$0xff]
        %v3403 = vld [vmem:[%s3 + $0xac8] sm:$0xff]
        %v3404 = vld [vmem:[%s3 + $0xad0] sm:$0xff]
        %v3405 = vld [vmem:[%s3 + $0xad8] sm:$0xff]
        %v3406 = vld [vmem:[%s3 + $0xae0] sm:$0xff]
        %v3407 = vld [vmem:[%s3 + $0xae8] sm:$0xff]
        %v3408 = vld [vmem:[%s3 + $0xaf0] sm:$0xff]
        %v3409 = vld [vmem:[%s3 + $0xaf8] sm:$0xff]
        %v3410 = vld [vmem:[%s5 + $0x3] sm:$0xf]
        %v3412 = vperm.slane %v3410, 0
        %v3413 = vperm.slane %v3410, 1
        %v3414 = vperm.slane %v3410, 2
        %v3415 = vperm.slane %v3410, 3
        %v3772 = vunpack.c.l.b16 %v3058
        %v3773 = vunpack.c.h.b16 %v3058
        %v3774 = vunpack.c.l.b16 %v3059
        %v3775 = vunpack.c.h.b16 %v3059
        %v3776 = vunpack.c.l.b16 %v3060
        %v3777 = vunpack.c.h.b16 %v3060
        %v3778 = vunpack.c.l.b16 %v3061
        %v3779 = vunpack.c.h.b16 %v3061
        %v3780 = vunpack.c.l.b16 %v3062
        %v3781 = vunpack.c.h.b16 %v3062
        %v3782 = vunpack.c.l.b16 %v3063
        %v3783 = vunpack.c.h.b16 %v3063
        %v3784 = vunpack.c.l.b16 %v3064
        %v3785 = vunpack.c.h.b16 %v3064
        %v3786 = vunpack.c.l.b16 %v3065
        %v3787 = vunpack.c.h.b16 %v3065
        %v3788 = vunpack.c.l.b16 %v3066
        %v3789 = vunpack.c.h.b16 %v3066
        %v3790 = vunpack.c.l.b16 %v3067
        %v3791 = vunpack.c.h.b16 %v3067
        %v3792 = vunpack.c.l.b16 %v3068
        %v3793 = vunpack.c.h.b16 %v3068
        %v3794 = vunpack.c.l.b16 %v3069
        %v3795 = vunpack.c.h.b16 %v3069
        %v3796 = vunpack.c.l.b16 %v3070
        %v3797 = vunpack.c.h.b16 %v3070
        %v3798 = vunpack.c.l.b16 %v3071
        %v3799 = vunpack.c.h.b16 %v3071
        %v3800 = vunpack.c.l.b16 %v3072
        %v3801 = vunpack.c.h.b16 %v3072
        %v3802 = vunpack.c.l.b16 %v3073
        %v3803 = vunpack.c.h.b16 %v3073
        %v3804 = vunpack.c.l.b16 %v3074
        %v3805 = vunpack.c.h.b16 %v3074
        %v3806 = vunpack.c.l.b16 %v3075
        %v3807 = vunpack.c.h.b16 %v3075
        %v3808 = vunpack.c.l.b16 %v3076
        %v3809 = vunpack.c.h.b16 %v3076
        %v3810 = vunpack.c.l.b16 %v3077
        %v3811 = vunpack.c.h.b16 %v3077
        %v3812 = vunpack.c.l.b16 %v3078
        %v3813 = vunpack.c.h.b16 %v3078
        %v3814 = vunpack.c.l.b16 %v3079
        %v3815 = vunpack.c.h.b16 %v3079
        %v3816 = vunpack.c.l.b16 %v3080
        %v3817 = vunpack.c.h.b16 %v3080
        %v3818 = vunpack.c.l.b16 %v3081
        %v3819 = vunpack.c.h.b16 %v3081
        %v3820 = vunpack.c.l.b16 %v3082
        %v3821 = vunpack.c.h.b16 %v3082
        %v3822 = vunpack.c.l.b16 %v3083
        %v3823 = vunpack.c.h.b16 %v3083
        %v3824 = vunpack.c.l.b16 %v3084
        %v3825 = vunpack.c.h.b16 %v3084
        %v3826 = vunpack.c.l.b16 %v3085
        %v3827 = vunpack.c.h.b16 %v3085
        %v3828 = vunpack.c.l.b16 %v3086
        %v3829 = vunpack.c.h.b16 %v3086
        %v3830 = vunpack.c.l.b16 %v3087
        %v3831 = vunpack.c.h.b16 %v3087
        %v3832 = vunpack.c.l.b16 %v3088
        %v3833 = vunpack.c.h.b16 %v3088
        %v3834 = vunpack.c.l.b16 %v3089
        %v3835 = vunpack.c.h.b16 %v3089
        %v3836 = vunpack.c.l.b16 %v3090
        %v3837 = vunpack.c.h.b16 %v3090
        %v3838 = vunpack.c.l.b16 %v3091
        %v3839 = vunpack.c.h.b16 %v3091
        %v3840 = vunpack.c.l.b16 %v3092
        %v3841 = vunpack.c.h.b16 %v3092
        %v3842 = vunpack.c.l.b16 %v3093
        %v3843 = vunpack.c.h.b16 %v3093
        %v3844 = vunpack.c.l.b16 %v3094
        %v3845 = vunpack.c.h.b16 %v3094
        %v3846 = vunpack.c.l.b16 %v3095
        %v3847 = vunpack.c.h.b16 %v3095
        %v3848 = vunpack.c.l.b16 %v3096
        %v3849 = vunpack.c.h.b16 %v3096
        %v3850 = vunpack.c.l.b16 %v3097
        %v3851 = vunpack.c.h.b16 %v3097
        %v3852 = vunpack.c.l.b16 %v3098
        %v3853 = vunpack.c.h.b16 %v3098
        %v3854 = vunpack.c.l.b16 %v3099
        %v3855 = vunpack.c.h.b16 %v3099
        %v3856 = vunpack.c.l.b16 %v3100
        %v3857 = vunpack.c.h.b16 %v3100
        %v3858 = vunpack.c.l.b16 %v3101
        %v3859 = vunpack.c.h.b16 %v3101
        %v3860 = vunpack.c.l.b16 %v3102
        %v3861 = vunpack.c.h.b16 %v3102
        %v3862 = vunpack.c.l.b16 %v3103
        %v3863 = vunpack.c.h.b16 %v3103
        %v3864 = vunpack.c.l.b16 %v3104
        %v3865 = vunpack.c.h.b16 %v3104
        %v3866 = vunpack.c.l.b16 %v3105
        %v3867 = vunpack.c.h.b16 %v3105
        %v3868 = vunpack.c.l.b16 %v3106
        %v3869 = vunpack.c.h.b16 %v3106
        %v3870 = vunpack.c.l.b16 %v3107
        %v3871 = vunpack.c.h.b16 %v3107
        %v3872 = vunpack.c.l.b16 %v3108
        %v3873 = vunpack.c.h.b16 %v3108
        %v3874 = vunpack.c.l.b16 %v3109
        %v3875 = vunpack.c.h.b16 %v3109
        %v3876 = vunpack.c.l.b16 %v3110
        %v3877 = vunpack.c.h.b16 %v3110
        %v3878 = vunpack.c.l.b16 %v3111
        %v3879 = vunpack.c.h.b16 %v3111
        %v3880 = vunpack.c.l.b16 %v3112
        %v3881 = vunpack.c.h.b16 %v3112
        %v3882 = vunpack.c.l.b16 %v3113
        %v3883 = vunpack.c.h.b16 %v3113
        %v3884 = vunpack.c.l.b16 %v3114
        %v3885 = vunpack.c.h.b16 %v3114
        %v3886 = vunpack.c.l.b16 %v3115
        %v3887 = vunpack.c.h.b16 %v3115
        %v3888 = vunpack.c.l.b16 %v3116
        %v3889 = vunpack.c.h.b16 %v3116
        %v3890 = vunpack.c.l.b16 %v3117
        %v3891 = vunpack.c.h.b16 %v3117
        %v3892 = vunpack.c.l.b16 %v3118
        %v3893 = vunpack.c.h.b16 %v3118
        %v3894 = vunpack.c.l.b16 %v3119
        %v3895 = vunpack.c.h.b16 %v3119
        %v3896 = vunpack.c.l.b16 %v3120
        %v3897 = vunpack.c.h.b16 %v3120
        %v3898 = vunpack.c.l.b16 %v3121
        %v3899 = vunpack.c.h.b16 %v3121
        %v3900 = vunpack.c.l.b16 %v3122
        %v3901 = vunpack.c.h.b16 %v3122
        %v3902 = vunpack.c.l.b16 %v3123
        %v3903 = vunpack.c.h.b16 %v3123
        %v3904 = vunpack.c.l.b16 %v3124
        %v3905 = vunpack.c.h.b16 %v3124
        %v3906 = vunpack.c.l.b16 %v3125
        %v3907 = vunpack.c.h.b16 %v3125
        %v3908 = vunpack.c.l.b16 %v3126
        %v3909 = vunpack.c.h.b16 %v3126
        %v3910 = vunpack.c.l.b16 %v3127
        %v3911 = vunpack.c.h.b16 %v3127
        %v3912 = vunpack.c.l.b16 %v3128
        %v3913 = vunpack.c.h.b16 %v3128
        %v3914 = vunpack.c.l.b16 %v3129
        %v3915 = vunpack.c.h.b16 %v3129
        %v3916 = vunpack.c.l.b16 %v3130
        %v3917 = vunpack.c.h.b16 %v3130
        %v3918 = vunpack.c.l.b16 %v3131
        %v3919 = vunpack.c.h.b16 %v3131
        %v3920 = vunpack.c.l.b16 %v3132
        %v3921 = vunpack.c.h.b16 %v3132
        %v3922 = vunpack.c.l.b16 %v3133
        %v3923 = vunpack.c.h.b16 %v3133
        %v3924 = vunpack.c.l.b16 %v3134
        %v3925 = vunpack.c.h.b16 %v3134
        %v3926 = vunpack.c.l.b16 %v3135
        %v3927 = vunpack.c.h.b16 %v3135
        %v3928 = vunpack.c.l.b16 %v3136
        %v3929 = vunpack.c.h.b16 %v3136
        %v3930 = vunpack.c.l.b16 %v3137
        %v3931 = vunpack.c.h.b16 %v3137
        %v3932 = vunpack.c.l.b16 %v3138
        %v3933 = vunpack.c.h.b16 %v3138
        %v3934 = vunpack.c.l.b16 %v3139
        %v3935 = vunpack.c.h.b16 %v3139
        %v3936 = vunpack.c.l.b16 %v3140
        %v3937 = vunpack.c.h.b16 %v3140
        %v3938 = vunpack.c.l.b16 %v3141
        %v3939 = vunpack.c.h.b16 %v3141
        %v3940 = vunpack.c.l.b16 %v3142
        %v3941 = vunpack.c.h.b16 %v3142
        %v3942 = vunpack.c.l.b16 %v3143
        %v3943 = vunpack.c.h.b16 %v3143
        %v3944 = vunpack.c.l.b16 %v3144
        %v3945 = vunpack.c.h.b16 %v3144
        %v3946 = vunpack.c.l.b16 %v3145
        %v3947 = vunpack.c.h.b16 %v3145
        %v3948 = vunpack.c.l.b16 %v3146
        %v3949 = vunpack.c.h.b16 %v3146
        %v3950 = vunpack.c.l.b16 %v3147
        %v3951 = vunpack.c.h.b16 %v3147
        %v3952 = vunpack.c.l.b16 %v3148
        %v3953 = vunpack.c.h.b16 %v3148
        %v3954 = vunpack.c.l.b16 %v3149
        %v3955 = vunpack.c.h.b16 %v3149
        %v3956 = vunpack.c.l.b16 %v3150
        %v3957 = vunpack.c.h.b16 %v3150
        %v3958 = vunpack.c.l.b16 %v3151
        %v3959 = vunpack.c.h.b16 %v3151
        %v3960 = vunpack.c.l.b16 %v3152
        %v3961 = vunpack.c.h.b16 %v3152
        %v3962 = vunpack.c.l.b16 %v3153
        %v3963 = vunpack.c.h.b16 %v3153
        %v3964 = vunpack.c.l.b16 %v3154
        %v3965 = vunpack.c.h.b16 %v3154
        %v3966 = vunpack.c.l.b16 %v3155
        %v3967 = vunpack.c.h.b16 %v3155
        %v3968 = vunpack.c.l.b16 %v3156
        %v3969 = vunpack.c.h.b16 %v3156
        %v3970 = vunpack.c.l.b16 %v3157
        %v3971 = vunpack.c.h.b16 %v3157
        %v3972 = vunpack.c.l.b16 %v3158
        %v3973 = vunpack.c.h.b16 %v3158
        %v3974 = vunpack.c.l.b16 %v3159
        %v3975 = vunpack.c.h.b16 %v3159
        %v3976 = vunpack.c.l.b16 %v3160
        %v3977 = vunpack.c.h.b16 %v3160
        %v3978 = vunpack.c.l.b16 %v3161
        %v3979 = vunpack.c.h.b16 %v3161
        %v3980 = vunpack.c.l.b16 %v3162
        %v3981 = vunpack.c.h.b16 %v3162
        %v3982 = vunpack.c.l.b16 %v3163
        %v3983 = vunpack.c.h.b16 %v3163
        %v3984 = vunpack.c.l.b16 %v3164
        %v3985 = vunpack.c.h.b16 %v3164
        %v3986 = vunpack.c.l.b16 %v3165
        %v3987 = vunpack.c.h.b16 %v3165
        %v3988 = vunpack.c.l.b16 %v3166
        %v3989 = vunpack.c.h.b16 %v3166
        %v3990 = vunpack.c.l.b16 %v3167
        %v3991 = vunpack.c.h.b16 %v3167
        %v3992 = vunpack.c.l.b16 %v3168
        %v3993 = vunpack.c.h.b16 %v3168
        %v3994 = vunpack.c.l.b16 %v3169
        %v3995 = vunpack.c.h.b16 %v3169
        %v3996 = vunpack.c.l.b16 %v3170
        %v3997 = vunpack.c.h.b16 %v3170
        %v3998 = vunpack.c.l.b16 %v3171
        %v3999 = vunpack.c.h.b16 %v3171
        %v4000 = vunpack.c.l.b16 %v3172
        %v4001 = vunpack.c.h.b16 %v3172
        %v4002 = vunpack.c.l.b16 %v3173
        %v4003 = vunpack.c.h.b16 %v3173
        %v4004 = vunpack.c.l.b16 %v3174
        %v4005 = vunpack.c.h.b16 %v3174
        %v4006 = vunpack.c.l.b16 %v3175
        %v4007 = vunpack.c.h.b16 %v3175
        %v4008 = vunpack.c.l.b16 %v3176
        %v4009 = vunpack.c.h.b16 %v3176
        %v4010 = vunpack.c.l.b16 %v3177
        %v4011 = vunpack.c.h.b16 %v3177
        %v4012 = vunpack.c.l.b16 %v3178
        %v4013 = vunpack.c.h.b16 %v3178
        %v4014 = vunpack.c.l.b16 %v3179
        %v4015 = vunpack.c.h.b16 %v3179
        %v4016 = vunpack.c.l.b16 %v3180
        %v4017 = vunpack.c.h.b16 %v3180
        %v4018 = vunpack.c.l.b16 %v3181
        %v4019 = vunpack.c.h.b16 %v3181
        %v4020 = vunpack.c.l.b16 %v3182
        %v4021 = vunpack.c.h.b16 %v3182
        %v4022 = vunpack.c.l.b16 %v3183
        %v4023 = vunpack.c.h.b16 %v3183
        %v4024 = vunpack.c.l.b16 %v3184
        %v4025 = vunpack.c.h.b16 %v3184
        %v4026 = vunpack.c.l.b16 %v3185
        %v4027 = vunpack.c.h.b16 %v3185
        %v4028 = vunpack.c.l.b16 %v3186
        %v4029 = vunpack.c.h.b16 %v3186
        %v4030 = vunpack.c.l.b16 %v3187
        %v4031 = vunpack.c.h.b16 %v3187
        %v4032 = vunpack.c.l.b16 %v3188
        %v4033 = vunpack.c.h.b16 %v3188
        %v4034 = vunpack.c.l.b16 %v3189
        %v4035 = vunpack.c.h.b16 %v3189
        %v4036 = vunpack.c.l.b16 %v3190
        %v4037 = vunpack.c.h.b16 %v3190
        %v4038 = vunpack.c.l.b16 %v3191
        %v4039 = vunpack.c.h.b16 %v3191
        %v4040 = vunpack.c.l.b16 %v3192
        %v4041 = vunpack.c.h.b16 %v3192
        %v4042 = vunpack.c.l.b16 %v3193
        %v4043 = vunpack.c.h.b16 %v3193
        %v4044 = vunpack.c.l.b16 %v3194
        %v4045 = vunpack.c.h.b16 %v3194
        %v4046 = vunpack.c.l.b16 %v3195
        %v4047 = vunpack.c.h.b16 %v3195
        %v4048 = vunpack.c.l.b16 %v3196
        %v4049 = vunpack.c.h.b16 %v3196
        %v4050 = vunpack.c.l.b16 %v3197
        %v4051 = vunpack.c.h.b16 %v3197
        %v4052 = vunpack.c.l.b16 %v3198
        %v4053 = vunpack.c.h.b16 %v3198
        %v4054 = vunpack.c.l.b16 %v3199
        %v4055 = vunpack.c.h.b16 %v3199
        %v4056 = vunpack.c.l.b16 %v3200
        %v4057 = vunpack.c.h.b16 %v3200
        %v4058 = vunpack.c.l.b16 %v3201
        %v4059 = vunpack.c.h.b16 %v3201
        %v4060 = vunpack.c.l.b16 %v3202
        %v4061 = vunpack.c.h.b16 %v3202
        %v4062 = vunpack.c.l.b16 %v3203
        %v4063 = vunpack.c.h.b16 %v3203
        %v4064 = vunpack.c.l.b16 %v3204
        %v4065 = vunpack.c.h.b16 %v3204
        %v4066 = vunpack.c.l.b16 %v3205
        %v4067 = vunpack.c.h.b16 %v3205
        %v4068 = vunpack.c.l.b16 %v3206
        %v4069 = vunpack.c.h.b16 %v3206
        %v4070 = vunpack.c.l.b16 %v3207
        %v4071 = vunpack.c.h.b16 %v3207
        %v4072 = vunpack.c.l.b16 %v3208
        %v4073 = vunpack.c.h.b16 %v3208
        %v4074 = vunpack.c.l.b16 %v3209
        %v4075 = vunpack.c.h.b16 %v3209
        %v4076 = vunpack.c.l.b16 %v3210
        %v4077 = vunpack.c.h.b16 %v3210
        %v4078 = vunpack.c.l.b16 %v3211
        %v4079 = vunpack.c.h.b16 %v3211
        %v4080 = vunpack.c.l.b16 %v3212
        %v4081 = vunpack.c.h.b16 %v3212
        %v4082 = vunpack.c.l.b16 %v3213
        %v4083 = vunpack.c.h.b16 %v3213
        %v4084 = vunpack.c.l.b16 %v3214
        %v4085 = vunpack.c.h.b16 %v3214
        %v4086 = vunpack.c.l.b16 %v3215
        %v4087 = vunpack.c.h.b16 %v3215
        %v4088 = vunpack.c.l.b16 %v3216
        %v4089 = vunpack.c.h.b16 %v3216
        %v4090 = vunpack.c.l.b16 %v3217
        %v4091 = vunpack.c.h.b16 %v3217
        %v4092 = vunpack.c.l.b16 %v3218
        %v4093 = vunpack.c.h.b16 %v3218
        %v4094 = vunpack.c.l.b16 %v3219
        %v4095 = vunpack.c.h.b16 %v3219
        %v4096 = vunpack.c.l.b16 %v3220
        %v4097 = vunpack.c.h.b16 %v3220
        %v4098 = vunpack.c.l.b16 %v3221
        %v4099 = vunpack.c.h.b16 %v3221
        %v4100 = vunpack.c.l.b16 %v3222
        %v4101 = vunpack.c.h.b16 %v3222
        %v4102 = vunpack.c.l.b16 %v3223
        %v4103 = vunpack.c.h.b16 %v3223
        %v4104 = vunpack.c.l.b16 %v3224
        %v4105 = vunpack.c.h.b16 %v3224
        %v4106 = vunpack.c.l.b16 %v3225
        %v4107 = vunpack.c.h.b16 %v3225
        %v4108 = vunpack.c.l.b16 %v3226
        %v4109 = vunpack.c.h.b16 %v3226
        %v4110 = vunpack.c.l.b16 %v3227
        %v4111 = vunpack.c.h.b16 %v3227
        %v4112 = vunpack.c.l.b16 %v3228
        %v4113 = vunpack.c.h.b16 %v3228
        %v4114 = vunpack.c.l.b16 %v3229
        %v4115 = vunpack.c.h.b16 %v3229
        %v4116 = vunpack.c.l.b16 %v3230
        %v4117 = vunpack.c.h.b16 %v3230
        %v4118 = vunpack.c.l.b16 %v3231
        %v4119 = vunpack.c.h.b16 %v3231
        %v4120 = vunpack.c.l.b16 %v3232
        %v4121 = vunpack.c.h.b16 %v3232
        %v4122 = vunpack.c.l.b16 %v3233
        %v4123 = vunpack.c.h.b16 %v3233
        %v4124 = vunpack.c.l.b16 %v3234
        %v4125 = vunpack.c.h.b16 %v3234
        %v4126 = vunpack.c.l.b16 %v3235
        %v4127 = vunpack.c.h.b16 %v3235
        %v4128 = vunpack.c.l.b16 %v3236
        %v4129 = vunpack.c.h.b16 %v3236
        %v4130 = vunpack.c.l.b16 %v3237
        %v4131 = vunpack.c.h.b16 %v3237
        %v4132 = vunpack.c.l.b16 %v3238
        %v4133 = vunpack.c.h.b16 %v3238
        %v4134 = vunpack.c.l.b16 %v3239
        %v4135 = vunpack.c.h.b16 %v3239
        %v4136 = vunpack.c.l.b16 %v3240
        %v4137 = vunpack.c.h.b16 %v3240
        %v4138 = vunpack.c.l.b16 %v3241
        %v4139 = vunpack.c.h.b16 %v3241
        %v4140 = vunpack.c.l.b16 %v3242
        %v4141 = vunpack.c.h.b16 %v3242
        %v4142 = vunpack.c.l.b16 %v3243
        %v4143 = vunpack.c.h.b16 %v3243
        %v4144 = vunpack.c.l.b16 %v3244
        %v4145 = vunpack.c.h.b16 %v3244
        %v4146 = vunpack.c.l.b16 %v3245
        %v4147 = vunpack.c.h.b16 %v3245
        %v4148 = vunpack.c.l.b16 %v3246
        %v4149 = vunpack.c.h.b16 %v3246
        %v4150 = vunpack.c.l.b16 %v3247
        %v4151 = vunpack.c.h.b16 %v3247
        %v4152 = vunpack.c.l.b16 %v3248
        %v4153 = vunpack.c.h.b16 %v3248
        %v4154 = vunpack.c.l.b16 %v3249
        %v4155 = vunpack.c.h.b16 %v3249
        %v4156 = vunpack.c.l.b16 %v3250
        %v4157 = vunpack.c.h.b16 %v3250
        %v4158 = vunpack.c.l.b16 %v3251
        %v4159 = vunpack.c.h.b16 %v3251
        %v4160 = vunpack.c.l.b16 %v3252
        %v4161 = vunpack.c.h.b16 %v3252
        %v4162 = vunpack.c.l.b16 %v3253
        %v4163 = vunpack.c.h.b16 %v3253
        %v4164 = vunpack.c.l.b16 %v3254
        %v4165 = vunpack.c.h.b16 %v3254
        %v4166 = vunpack.c.l.b16 %v3255
        %v4167 = vunpack.c.h.b16 %v3255
        %v4168 = vunpack.c.l.b16 %v3256
        %v4169 = vunpack.c.h.b16 %v3256
        %v4170 = vunpack.c.l.b16 %v3257
        %v4171 = vunpack.c.h.b16 %v3257
        %v4172 = vunpack.c.l.b16 %v3258
        %v4173 = vunpack.c.h.b16 %v3258
        %v4174 = vunpack.c.l.b16 %v3259
        %v4175 = vunpack.c.h.b16 %v3259
        %v4176 = vunpack.c.l.b16 %v3260
        %v4177 = vunpack.c.h.b16 %v3260
        %v4178 = vunpack.c.l.b16 %v3261
        %v4179 = vunpack.c.h.b16 %v3261
        %v4180 = vunpack.c.l.b16 %v3262
        %v4181 = vunpack.c.h.b16 %v3262
        %v4182 = vunpack.c.l.b16 %v3263
        %v4183 = vunpack.c.h.b16 %v3263
        %v4184 = vunpack.c.l.b16 %v3264
        %v4185 = vunpack.c.h.b16 %v3264
        %v4186 = vunpack.c.l.b16 %v3265
        %v4187 = vunpack.c.h.b16 %v3265
        %v4188 = vunpack.c.l.b16 %v3266
        %v4189 = vunpack.c.h.b16 %v3266
        %v4190 = vunpack.c.l.b16 %v3267
        %v4191 = vunpack.c.h.b16 %v3267
        %v4192 = vunpack.c.l.b16 %v3268
        %v4193 = vunpack.c.h.b16 %v3268
        %v4194 = vunpack.c.l.b16 %v3269
        %v4195 = vunpack.c.h.b16 %v3269
        %v4196 = vunpack.c.l.b16 %v3270
        %v4197 = vunpack.c.h.b16 %v3270
        %v4198 = vunpack.c.l.b16 %v3271
        %v4199 = vunpack.c.h.b16 %v3271
        %v4200 = vunpack.c.l.b16 %v3272
        %v4201 = vunpack.c.h.b16 %v3272
        %v4202 = vunpack.c.l.b16 %v3273
        %v4203 = vunpack.c.h.b16 %v3273
        %v4204 = vunpack.c.l.b16 %v3274
        %v4205 = vunpack.c.h.b16 %v3274
        %v4206 = vunpack.c.l.b16 %v3275
        %v4207 = vunpack.c.h.b16 %v3275
        %v4208 = vunpack.c.l.b16 %v3276
        %v4209 = vunpack.c.h.b16 %v3276
        %v4210 = vunpack.c.l.b16 %v3277
        %v4211 = vunpack.c.h.b16 %v3277
        %v4212 = vunpack.c.l.b16 %v3278
        %v4213 = vunpack.c.h.b16 %v3278
        %v4214 = vunpack.c.l.b16 %v3279
        %v4215 = vunpack.c.h.b16 %v3279
        %v4216 = vunpack.c.l.b16 %v3280
        %v4217 = vunpack.c.h.b16 %v3280
        %v4218 = vunpack.c.l.b16 %v3281
        %v4219 = vunpack.c.h.b16 %v3281
        %v4220 = vunpack.c.l.b16 %v3282
        %v4221 = vunpack.c.h.b16 %v3282
        %v4222 = vunpack.c.l.b16 %v3283
        %v4223 = vunpack.c.h.b16 %v3283
        %v4224 = vunpack.c.l.b16 %v3284
        %v4225 = vunpack.c.h.b16 %v3284
        %v4226 = vunpack.c.l.b16 %v3285
        %v4227 = vunpack.c.h.b16 %v3285
        %v4228 = vunpack.c.l.b16 %v3286
        %v4229 = vunpack.c.h.b16 %v3286
        %v4230 = vunpack.c.l.b16 %v3287
        %v4231 = vunpack.c.h.b16 %v3287
        %v4232 = vunpack.c.l.b16 %v3288
        %v4233 = vunpack.c.h.b16 %v3288
        %v4234 = vunpack.c.l.b16 %v3289
        %v4235 = vunpack.c.h.b16 %v3289
        %v4236 = vunpack.c.l.b16 %v3290
        %v4237 = vunpack.c.h.b16 %v3290
        %v4238 = vunpack.c.l.b16 %v3291
        %v4239 = vunpack.c.h.b16 %v3291
        %v4240 = vunpack.c.l.b16 %v3292
        %v4241 = vunpack.c.h.b16 %v3292
        %v4242 = vunpack.c.l.b16 %v3293
        %v4243 = vunpack.c.h.b16 %v3293
        %v4244 = vunpack.c.l.b16 %v3294
        %v4245 = vunpack.c.h.b16 %v3294
        %v4246 = vunpack.c.l.b16 %v3295
        %v4247 = vunpack.c.h.b16 %v3295
        %v4248 = vunpack.c.l.b16 %v3296
        %v4249 = vunpack.c.h.b16 %v3296
        %v4250 = vunpack.c.l.b16 %v3297
        %v4251 = vunpack.c.h.b16 %v3297
        %v4252 = vunpack.c.l.b16 %v3298
        %v4253 = vunpack.c.h.b16 %v3298
        %v4254 = vunpack.c.l.b16 %v3299
        %v4255 = vunpack.c.h.b16 %v3299
        %v4256 = vunpack.c.l.b16 %v3300
        %v4257 = vunpack.c.h.b16 %v3300
        %v4258 = vunpack.c.l.b16 %v3301
        %v4259 = vunpack.c.h.b16 %v3301
        %v4260 = vunpack.c.l.b16 %v3302
        %v4261 = vunpack.c.h.b16 %v3302
        %v4262 = vunpack.c.l.b16 %v3303
        %v4263 = vunpack.c.h.b16 %v3303
        %v4264 = vunpack.c.l.b16 %v3304
        %v4265 = vunpack.c.h.b16 %v3304
        %v4266 = vunpack.c.l.b16 %v3305
        %v4267 = vunpack.c.h.b16 %v3305
        %v4268 = vunpack.c.l.b16 %v3306
        %v4269 = vunpack.c.h.b16 %v3306
        %v4270 = vunpack.c.l.b16 %v3307
        %v4271 = vunpack.c.h.b16 %v3307
        %v4272 = vunpack.c.l.b16 %v3308
        %v4273 = vunpack.c.h.b16 %v3308
        %v4274 = vunpack.c.l.b16 %v3309
        %v4275 = vunpack.c.h.b16 %v3309
        %v4276 = vunpack.c.l.b16 %v3310
        %v4277 = vunpack.c.h.b16 %v3310
        %v4278 = vunpack.c.l.b16 %v3311
        %v4279 = vunpack.c.h.b16 %v3311
        %v4280 = vunpack.c.l.b16 %v3312
        %v4281 = vunpack.c.h.b16 %v3312
        %v4282 = vunpack.c.l.b16 %v3313
        %v4283 = vunpack.c.h.b16 %v3313
        %v4284 = vunpack.c.l.b16 %v3314
        %v4285 = vunpack.c.h.b16 %v3314
        %v4286 = vunpack.c.l.b16 %v3315
        %v4287 = vunpack.c.h.b16 %v3315
        %v4288 = vunpack.c.l.b16 %v3316
        %v4289 = vunpack.c.h.b16 %v3316
        %v4290 = vunpack.c.l.b16 %v3317
        %v4291 = vunpack.c.h.b16 %v3317
        %v4292 = vunpack.c.l.b16 %v3318
        %v4293 = vunpack.c.h.b16 %v3318
        %v4294 = vunpack.c.l.b16 %v3319
        %v4295 = vunpack.c.h.b16 %v3319
        %v4296 = vunpack.c.l.b16 %v3320
        %v4297 = vunpack.c.h.b16 %v3320
        %v4298 = vunpack.c.l.b16 %v3321
        %v4299 = vunpack.c.h.b16 %v3321
        %v4300 = vunpack.c.l.b16 %v3322
        %v4301 = vunpack.c.h.b16 %v3322
        %v4302 = vunpack.c.l.b16 %v3323
        %v4303 = vunpack.c.h.b16 %v3323
        %v4304 = vunpack.c.l.b16 %v3324
        %v4305 = vunpack.c.h.b16 %v3324
        %v4306 = vunpack.c.l.b16 %v3325
        %v4307 = vunpack.c.h.b16 %v3325
        %v4308 = vunpack.c.l.b16 %v3326
        %v4309 = vunpack.c.h.b16 %v3326
        %v4310 = vunpack.c.l.b16 %v3327
        %v4311 = vunpack.c.h.b16 %v3327
        %v4312 = vunpack.c.l.b16 %v3328
        %v4313 = vunpack.c.h.b16 %v3328
        %v4314 = vunpack.c.l.b16 %v3329
        %v4315 = vunpack.c.h.b16 %v3329
        %v4316 = vunpack.c.l.b16 %v3330
        %v4317 = vunpack.c.h.b16 %v3330
        %v4318 = vunpack.c.l.b16 %v3331
        %v4319 = vunpack.c.h.b16 %v3331
        %v4320 = vunpack.c.l.b16 %v3332
        %v4321 = vunpack.c.h.b16 %v3332
        %v4322 = vunpack.c.l.b16 %v3333
        %v4323 = vunpack.c.h.b16 %v3333
        %v4324 = vunpack.c.l.b16 %v3334
        %v4325 = vunpack.c.h.b16 %v3334
        %v4326 = vunpack.c.l.b16 %v3335
        %v4327 = vunpack.c.h.b16 %v3335
        %v4328 = vunpack.c.l.b16 %v3336
        %v4329 = vunpack.c.h.b16 %v3336
        %v4330 = vunpack.c.l.b16 %v3337
        %v4331 = vunpack.c.h.b16 %v3337
        %v4332 = vunpack.c.l.b16 %v3338
        %v4333 = vunpack.c.h.b16 %v3338
        %v4334 = vunpack.c.l.b16 %v3339
        %v4335 = vunpack.c.h.b16 %v3339
        %v4336 = vunpack.c.l.b16 %v3340
        %v4337 = vunpack.c.h.b16 %v3340
        %v4338 = vunpack.c.l.b16 %v3341
        %v4339 = vunpack.c.h.b16 %v3341
        %v4340 = vunpack.c.l.b16 %v3342
        %v4341 = vunpack.c.h.b16 %v3342
        %v4342 = vunpack.c.l.b16 %v3343
        %v4343 = vunpack.c.h.b16 %v3343
        %v4344 = vunpack.c.l.b16 %v3344
        %v4345 = vunpack.c.h.b16 %v3344
        %v4346 = vunpack.c.l.b16 %v3345
        %v4347 = vunpack.c.h.b16 %v3345
        %v4348 = vunpack.c.l.b16 %v3346
        %v4349 = vunpack.c.h.b16 %v3346
        %v4350 = vunpack.c.l.b16 %v3347
        %v4351 = vunpack.c.h.b16 %v3347
        %v4352 = vunpack.c.l.b16 %v3348
        %v4353 = vunpack.c.h.b16 %v3348
        %v4354 = vunpack.c.l.b16 %v3349
        %v4355 = vunpack.c.h.b16 %v3349
        %v4356 = vunpack.c.l.b16 %v3350
        %v4357 = vunpack.c.h.b16 %v3350
        %v4358 = vunpack.c.l.b16 %v3351
        %v4359 = vunpack.c.h.b16 %v3351
        %v4360 = vunpack.c.l.b16 %v3352
        %v4361 = vunpack.c.h.b16 %v3352
        %v4362 = vunpack.c.l.b16 %v3353
        %v4363 = vunpack.c.h.b16 %v3353
        %v4364 = vunpack.c.l.b16 %v3354
        %v4365 = vunpack.c.h.b16 %v3354
        %v4366 = vunpack.c.l.b16 %v3355
        %v4367 = vunpack.c.h.b16 %v3355
        %v4368 = vunpack.c.l.b16 %v3356
        %v4369 = vunpack.c.h.b16 %v3356
        %v4370 = vunpack.c.l.b16 %v3357
        %v4371 = vunpack.c.h.b16 %v3357
        %v4372 = vunpack.c.l.b16 %v3358
        %v4373 = vunpack.c.h.b16 %v3358
        %v4374 = vunpack.c.l.b16 %v3359
        %v4375 = vunpack.c.h.b16 %v3359
        %v4376 = vunpack.c.l.b16 %v3360
        %v4377 = vunpack.c.h.b16 %v3360
        %v4378 = vunpack.c.l.b16 %v3361
        %v4379 = vunpack.c.h.b16 %v3361
        %v4380 = vunpack.c.l.b16 %v3362
        %v4381 = vunpack.c.h.b16 %v3362
        %v4382 = vunpack.c.l.b16 %v3363
        %v4383 = vunpack.c.h.b16 %v3363
        %v4384 = vunpack.c.l.b16 %v3364
        %v4385 = vunpack.c.h.b16 %v3364
        %v4386 = vunpack.c.l.b16 %v3365
        %v4387 = vunpack.c.h.b16 %v3365
        %v4388 = vunpack.c.l.b16 %v3366
        %v4389 = vunpack.c.h.b16 %v3366
        %v4390 = vunpack.c.l.b16 %v3367
        %v4391 = vunpack.c.h.b16 %v3367
        %v4392 = vunpack.c.l.b16 %v3368
        %v4393 = vunpack.c.h.b16 %v3368
        %v4394 = vunpack.c.l.b16 %v3369
        %v4395 = vunpack.c.h.b16 %v3369
        %v4396 = vunpack.c.l.b16 %v3370
        %v4397 = vunpack.c.h.b16 %v3370
        %v4398 = vunpack.c.l.b16 %v3371
        %v4399 = vunpack.c.h.b16 %v3371
        %v4400 = vunpack.c.l.b16 %v3372
        %v4401 = vunpack.c.h.b16 %v3372
        %v4402 = vunpack.c.l.b16 %v3373
        %v4403 = vunpack.c.h.b16 %v3373
        %v4404 = vunpack.c.l.b16 %v3374
        %v4405 = vunpack.c.h.b16 %v3374
        %v4406 = vunpack.c.l.b16 %v3375
        %v4407 = vunpack.c.h.b16 %v3375
        %v4408 = vunpack.c.l.b16 %v3376
        %v4409 = vunpack.c.h.b16 %v3376
        %v4410 = vunpack.c.l.b16 %v3377
        %v4411 = vunpack.c.h.b16 %v3377
        %v4412 = vunpack.c.l.b16 %v3378
        %v4413 = vunpack.c.h.b16 %v3378
        %v4414 = vunpack.c.l.b16 %v3379
        %v4415 = vunpack.c.h.b16 %v3379
        %v4416 = vunpack.c.l.b16 %v3380
        %v4417 = vunpack.c.h.b16 %v3380
        %v4418 = vunpack.c.l.b16 %v3381
        %v4419 = vunpack.c.h.b16 %v3381
        %v4420 = vunpack.c.l.b16 %v3382
        %v4421 = vunpack.c.h.b16 %v3382
        %v4422 = vunpack.c.l.b16 %v3383
        %v4423 = vunpack.c.h.b16 %v3383
        %v4424 = vunpack.c.l.b16 %v3384
        %v4425 = vunpack.c.h.b16 %v3384
        %v4426 = vunpack.c.l.b16 %v3385
        %v4427 = vunpack.c.h.b16 %v3385
        %v4428 = vunpack.c.l.b16 %v3386
        %v4429 = vunpack.c.h.b16 %v3386
        %v4430 = vunpack.c.l.b16 %v3387
        %v4431 = vunpack.c.h.b16 %v3387
        %v4432 = vunpack.c.l.b16 %v3388
        %v4433 = vunpack.c.h.b16 %v3388
        %v4434 = vunpack.c.l.b16 %v3389
        %v4435 = vunpack.c.h.b16 %v3389
        %v4436 = vunpack.c.l.b16 %v3390
        %v4437 = vunpack.c.h.b16 %v3390
        %v4438 = vunpack.c.l.b16 %v3391
        %v4439 = vunpack.c.h.b16 %v3391
        %v4440 = vunpack.c.l.b16 %v3392
        %v4441 = vunpack.c.h.b16 %v3392
        %v4442 = vunpack.c.l.b16 %v3393
        %v4443 = vunpack.c.h.b16 %v3393
        %v4444 = vunpack.c.l.b16 %v3394
        %v4445 = vunpack.c.h.b16 %v3394
        %v4446 = vunpack.c.l.b16 %v3395
        %v4447 = vunpack.c.h.b16 %v3395
        %v4448 = vunpack.c.l.b16 %v3396
        %v4449 = vunpack.c.h.b16 %v3396
        %v4450 = vunpack.c.l.b16 %v3397
        %v4451 = vunpack.c.h.b16 %v3397
        %v4452 = vunpack.c.l.b16 %v3398
        %v4453 = vunpack.c.h.b16 %v3398
        %v4454 = vunpack.c.l.b16 %v3399
        %v4455 = vunpack.c.h.b16 %v3399
        %v4456 = vunpack.c.l.b16 %v3400
        %v4457 = vunpack.c.h.b16 %v3400
        %v4458 = vunpack.c.l.b16 %v3401
        %v4459 = vunpack.c.h.b16 %v3401
        %v4460 = vunpack.c.l.b16 %v3402
        %v4461 = vunpack.c.h.b16 %v3402
        %v4462 = vunpack.c.l.b16 %v3403
        %v4463 = vunpack.c.h.b16 %v3403
        %v4464 = vunpack.c.l.b16 %v3404
        %v4465 = vunpack.c.h.b16 %v3404
        %v4466 = vunpack.c.l.b16 %v3405
        %v4467 = vunpack.c.h.b16 %v3405
        %v4468 = vunpack.c.l.b16 %v3406
        %v4469 = vunpack.c.h.b16 %v3406
        %v4470 = vunpack.c.l.b16 %v3407
        %v4471 = vunpack.c.h.b16 %v3407
        %v4472 = vunpack.c.l.b16 %v3408
        %v4473 = vunpack.c.h.b16 %v3408
        %v4474 = vunpack.c.l.b16 %v3409
        %v4475 = vunpack.c.h.b16 %v3409
        %v4476 = vpack.c.b16 %v3776, %v3772
        %v4477 = vpack.c.b16 %v3777, %v3773
        %v4478 = vpack.c.b16 %v3778, %v3774
        %v4479 = vpack.c.b16 %v3779, %v3775
        %v4480 = vpack.c.b16 %v3784, %v3780
        %v4481 = vpack.c.b16 %v3785, %v3781
        %v4482 = vpack.c.b16 %v3786, %v3782
        %v4483 = vpack.c.b16 %v3787, %v3783
        %v4484 = vpack.c.b16 %v3792, %v3788
        %v4485 = vpack.c.b16 %v3793, %v3789
        %v4486 = vpack.c.b16 %v3794, %v3790
        %v4487 = vpack.c.b16 %v3795, %v3791
        %v4488 = vpack.c.b16 %v3800, %v3796
        %v4489 = vpack.c.b16 %v3801, %v3797
        %v4490 = vpack.c.b16 %v3802, %v3798
        %v4491 = vpack.c.b16 %v3803, %v3799
        %v4492 = vpack.c.b16 %v3808, %v3804
        %v4493 = vpack.c.b16 %v3809, %v3805
        %v4494 = vpack.c.b16 %v3810, %v3806
        %v4495 = vpack.c.b16 %v3811, %v3807
        %v4496 = vpack.c.b16 %v3816, %v3812
        %v4497 = vpack.c.b16 %v3817, %v3813
        %v4498 = vpack.c.b16 %v3818, %v3814
        %v4499 = vpack.c.b16 %v3819, %v3815
        %v4500 = vpack.c.b16 %v3824, %v3820
        %v4501 = vpack.c.b16 %v3825, %v3821
        %v4502 = vpack.c.b16 %v3826, %v3822
        %v4503 = vpack.c.b16 %v3827, %v3823
        %v4504 = vpack.c.b16 %v3832, %v3828
        %v4505 = vpack.c.b16 %v3833, %v3829
        %v4506 = vpack.c.b16 %v3834, %v3830
        %v4507 = vpack.c.b16 %v3835, %v3831
        %v4508 = vpack.c.b16 %v3840, %v3836
        %v4509 = vpack.c.b16 %v3841, %v3837
        %v4510 = vpack.c.b16 %v3842, %v3838
        %v4511 = vpack.c.b16 %v3843, %v3839
        %v4512 = vpack.c.b16 %v3848, %v3844
        %v4513 = vpack.c.b16 %v3849, %v3845
        %v4514 = vpack.c.b16 %v3850, %v3846
        %v4515 = vpack.c.b16 %v3851, %v3847
        %v4516 = vpack.c.b16 %v3856, %v3852
        %v4517 = vpack.c.b16 %v3857, %v3853
        %v4518 = vpack.c.b16 %v3858, %v3854
        %v4519 = vpack.c.b16 %v3859, %v3855
        %v4520 = vpack.c.b16 %v3864, %v3860
        %v4521 = vpack.c.b16 %v3865, %v3861
        %v4522 = vpack.c.b16 %v3866, %v3862
        %v4523 = vpack.c.b16 %v3867, %v3863
        %v4524 = vpack.c.b16 %v3872, %v3868
        %v4525 = vpack.c.b16 %v3873, %v3869
        %v4526 = vpack.c.b16 %v3874, %v3870
        %v4527 = vpack.c.b16 %v3875, %v3871
        %v4528 = vpack.c.b16 %v3880, %v3876
        %v4529 = vpack.c.b16 %v3881, %v3877
        %v4530 = vpack.c.b16 %v3882, %v3878
        %v4531 = vpack.c.b16 %v3883, %v3879
        %v4532 = vpack.c.b16 %v3888, %v3884
        %v4533 = vpack.c.b16 %v3889, %v3885
        %v4534 = vpack.c.b16 %v3890, %v3886
        %v4535 = vpack.c.b16 %v3891, %v3887
        %v4536 = vpack.c.b16 %v3896, %v3892
        %v4537 = vpack.c.b16 %v3897, %v3893
        %v4538 = vpack.c.b16 %v3898, %v3894
        %v4539 = vpack.c.b16 %v3899, %v3895
        %v4540 = vpack.c.b16 %v3904, %v3900
        %v4541 = vpack.c.b16 %v3905, %v3901
        %v4542 = vpack.c.b16 %v3906, %v3902
        %v4543 = vpack.c.b16 %v3907, %v3903
        %v4544 = vpack.c.b16 %v3912, %v3908
        %v4545 = vpack.c.b16 %v3913, %v3909
        %v4546 = vpack.c.b16 %v3914, %v3910
        %v4547 = vpack.c.b16 %v3915, %v3911
        %v4548 = vpack.c.b16 %v3920, %v3916
        %v4549 = vpack.c.b16 %v3921, %v3917
        %v4550 = vpack.c.b16 %v3922, %v3918
        %v4551 = vpack.c.b16 %v3923, %v3919
        %v4552 = vpack.c.b16 %v3928, %v3924
        %v4553 = vpack.c.b16 %v3929, %v3925
        %v4554 = vpack.c.b16 %v3930, %v3926
        %v4555 = vpack.c.b16 %v3931, %v3927
        %v4556 = vpack.c.b16 %v3936, %v3932
        %v4557 = vpack.c.b16 %v3937, %v3933
        %v4558 = vpack.c.b16 %v3938, %v3934
        %v4559 = vpack.c.b16 %v3939, %v3935
        %v4560 = vpack.c.b16 %v3944, %v3940
        %v4561 = vpack.c.b16 %v3945, %v3941
        %v4562 = vpack.c.b16 %v3946, %v3942
        %v4563 = vpack.c.b16 %v3947, %v3943
        %v4564 = vpack.c.b16 %v3952, %v3948
        %v4565 = vpack.c.b16 %v3953, %v3949
        %v4566 = vpack.c.b16 %v3954, %v3950
        %v4567 = vpack.c.b16 %v3955, %v3951
        %v4568 = vpack.c.b16 %v3960, %v3956
        %v4569 = vpack.c.b16 %v3961, %v3957
        %v4570 = vpack.c.b16 %v3962, %v3958
        %v4571 = vpack.c.b16 %v3963, %v3959
        %v4572 = vpack.c.b16 %v3968, %v3964
        %v4573 = vpack.c.b16 %v3969, %v3965
        %v4574 = vpack.c.b16 %v3970, %v3966
        %v4575 = vpack.c.b16 %v3971, %v3967
        %v4576 = vpack.c.b16 %v3976, %v3972
        %v4577 = vpack.c.b16 %v3977, %v3973
        %v4578 = vpack.c.b16 %v3978, %v3974
        %v4579 = vpack.c.b16 %v3979, %v3975
        %v4580 = vpack.c.b16 %v3984, %v3980
        %v4581 = vpack.c.b16 %v3985, %v3981
        %v4582 = vpack.c.b16 %v3986, %v3982
        %v4583 = vpack.c.b16 %v3987, %v3983
        %v4584 = vpack.c.b16 %v3992, %v3988
        %v4585 = vpack.c.b16 %v3993, %v3989
        %v4586 = vpack.c.b16 %v3994, %v3990
        %v4587 = vpack.c.b16 %v3995, %v3991
        %v4588 = vpack.c.b16 %v4000, %v3996
        %v4589 = vpack.c.b16 %v4001, %v3997
        %v4590 = vpack.c.b16 %v4002, %v3998
        %v4591 = vpack.c.b16 %v4003, %v3999
        %v4592 = vpack.c.b16 %v4008, %v4004
        %v4593 = vpack.c.b16 %v4009, %v4005
        %v4594 = vpack.c.b16 %v4010, %v4006
        %v4595 = vpack.c.b16 %v4011, %v4007
        %v4596 = vpack.c.b16 %v4016, %v4012
        %v4597 = vpack.c.b16 %v4017, %v4013
        %v4598 = vpack.c.b16 %v4018, %v4014
        %v4599 = vpack.c.b16 %v4019, %v4015
        %v4600 = vpack.c.b16 %v4024, %v4020
        %v4601 = vpack.c.b16 %v4025, %v4021
        %v4602 = vpack.c.b16 %v4026, %v4022
        %v4603 = vpack.c.b16 %v4027, %v4023
        %v4604 = vpack.c.b16 %v4032, %v4028
        %v4605 = vpack.c.b16 %v4033, %v4029
        %v4606 = vpack.c.b16 %v4034, %v4030
        %v4607 = vpack.c.b16 %v4035, %v4031
        %v4608 = vpack.c.b16 %v4040, %v4036
        %v4609 = vpack.c.b16 %v4041, %v4037
        %v4610 = vpack.c.b16 %v4042, %v4038
        %v4611 = vpack.c.b16 %v4043, %v4039
        %v4612 = vpack.c.b16 %v4048, %v4044
        %v4613 = vpack.c.b16 %v4049, %v4045
        %v4614 = vpack.c.b16 %v4050, %v4046
        %v4615 = vpack.c.b16 %v4051, %v4047
        %v4616 = vpack.c.b16 %v4056, %v4052
        %v4617 = vpack.c.b16 %v4057, %v4053
        %v4618 = vpack.c.b16 %v4058, %v4054
        %v4619 = vpack.c.b16 %v4059, %v4055
        %v4620 = vpack.c.b16 %v4064, %v4060
        %v4621 = vpack.c.b16 %v4065, %v4061
        %v4622 = vpack.c.b16 %v4066, %v4062
        %v4623 = vpack.c.b16 %v4067, %v4063
        %v4624 = vpack.c.b16 %v4072, %v4068
        %v4625 = vpack.c.b16 %v4073, %v4069
        %v4626 = vpack.c.b16 %v4074, %v4070
        %v4627 = vpack.c.b16 %v4075, %v4071
        %v4628 = vpack.c.b16 %v4080, %v4076
        %v4629 = vpack.c.b16 %v4081, %v4077
        %v4630 = vpack.c.b16 %v4082, %v4078
        %v4631 = vpack.c.b16 %v4083, %v4079
        %v4632 = vpack.c.b16 %v4088, %v4084
        %v4633 = vpack.c.b16 %v4089, %v4085
        %v4634 = vpack.c.b16 %v4090, %v4086
        %v4635 = vpack.c.b16 %v4091, %v4087
        %v4636 = vpack.c.b16 %v4096, %v4092
        %v4637 = vpack.c.b16 %v4097, %v4093
        %v4638 = vpack.c.b16 %v4098, %v4094
        %v4639 = vpack.c.b16 %v4099, %v4095
        %v4640 = vpack.c.b16 %v4104, %v4100
        %v4641 = vpack.c.b16 %v4105, %v4101
        %v4642 = vpack.c.b16 %v4106, %v4102
        %v4643 = vpack.c.b16 %v4107, %v4103
        %v4644 = vpack.c.b16 %v4112, %v4108
        %v4645 = vpack.c.b16 %v4113, %v4109
        %v4646 = vpack.c.b16 %v4114, %v4110
        %v4647 = vpack.c.b16 %v4115, %v4111
        %v4648 = vpack.c.b16 %v4120, %v4116
        %v4649 = vpack.c.b16 %v4121, %v4117
        %v4650 = vpack.c.b16 %v4122, %v4118
        %v4651 = vpack.c.b16 %v4123, %v4119
        %v4652 = vpack.c.b16 %v4128, %v4124
        %v4653 = vpack.c.b16 %v4129, %v4125
        %v4654 = vpack.c.b16 %v4130, %v4126
        %v4655 = vpack.c.b16 %v4131, %v4127
        %v4656 = vpack.c.b16 %v4136, %v4132
        %v4657 = vpack.c.b16 %v4137, %v4133
        %v4658 = vpack.c.b16 %v4138, %v4134
        %v4659 = vpack.c.b16 %v4139, %v4135
        %v4660 = vpack.c.b16 %v4144, %v4140
        %v4661 = vpack.c.b16 %v4145, %v4141
        %v4662 = vpack.c.b16 %v4146, %v4142
        %v4663 = vpack.c.b16 %v4147, %v4143
        %v4664 = vpack.c.b16 %v4152, %v4148
        %v4665 = vpack.c.b16 %v4153, %v4149
        %v4666 = vpack.c.b16 %v4154, %v4150
        %v4667 = vpack.c.b16 %v4155, %v4151
        %v4668 = vpack.c.b16 %v4160, %v4156
        %v4669 = vpack.c.b16 %v4161, %v4157
        %v4670 = vpack.c.b16 %v4162, %v4158
        %v4671 = vpack.c.b16 %v4163, %v4159
        %v4672 = vpack.c.b16 %v4168, %v4164
        %v4673 = vpack.c.b16 %v4169, %v4165
        %v4674 = vpack.c.b16 %v4170, %v4166
        %v4675 = vpack.c.b16 %v4171, %v4167
        %v4676 = vpack.c.b16 %v4176, %v4172
        %v4677 = vpack.c.b16 %v4177, %v4173
        %v4678 = vpack.c.b16 %v4178, %v4174
        %v4679 = vpack.c.b16 %v4179, %v4175
        %v4680 = vpack.c.b16 %v4184, %v4180
        %v4681 = vpack.c.b16 %v4185, %v4181
        %v4682 = vpack.c.b16 %v4186, %v4182
        %v4683 = vpack.c.b16 %v4187, %v4183
        %v4684 = vpack.c.b16 %v4192, %v4188
        %v4685 = vpack.c.b16 %v4193, %v4189
        %v4686 = vpack.c.b16 %v4194, %v4190
        %v4687 = vpack.c.b16 %v4195, %v4191
        %v4688 = vpack.c.b16 %v4200, %v4196
        %v4689 = vpack.c.b16 %v4201, %v4197
        %v4690 = vpack.c.b16 %v4202, %v4198
        %v4691 = vpack.c.b16 %v4203, %v4199
        %v4692 = vpack.c.b16 %v4208, %v4204
        %v4693 = vpack.c.b16 %v4209, %v4205
        %v4694 = vpack.c.b16 %v4210, %v4206
        %v4695 = vpack.c.b16 %v4211, %v4207
        %v4696 = vpack.c.b16 %v4216, %v4212
        %v4697 = vpack.c.b16 %v4217, %v4213
        %v4698 = vpack.c.b16 %v4218, %v4214
        %v4699 = vpack.c.b16 %v4219, %v4215
        %v4700 = vpack.c.b16 %v4224, %v4220
        %v4701 = vpack.c.b16 %v4225, %v4221
        %v4702 = vpack.c.b16 %v4226, %v4222
        %v4703 = vpack.c.b16 %v4227, %v4223
        %v4704 = vpack.c.b16 %v4232, %v4228
        %v4705 = vpack.c.b16 %v4233, %v4229
        %v4706 = vpack.c.b16 %v4234, %v4230
        %v4707 = vpack.c.b16 %v4235, %v4231
        %v4708 = vpack.c.b16 %v4240, %v4236
        %v4709 = vpack.c.b16 %v4241, %v4237
        %v4710 = vpack.c.b16 %v4242, %v4238
        %v4711 = vpack.c.b16 %v4243, %v4239
        %v4712 = vpack.c.b16 %v4248, %v4244
        %v4713 = vpack.c.b16 %v4249, %v4245
        %v4714 = vpack.c.b16 %v4250, %v4246
        %v4715 = vpack.c.b16 %v4251, %v4247
        %v4716 = vpack.c.b16 %v4256, %v4252
        %v4717 = vpack.c.b16 %v4257, %v4253
        %v4718 = vpack.c.b16 %v4258, %v4254
        %v4719 = vpack.c.b16 %v4259, %v4255
        %v4720 = vpack.c.b16 %v4264, %v4260
        %v4721 = vpack.c.b16 %v4265, %v4261
        %v4722 = vpack.c.b16 %v4266, %v4262
        %v4723 = vpack.c.b16 %v4267, %v4263
        %v4724 = vpack.c.b16 %v4272, %v4268
        %v4725 = vpack.c.b16 %v4273, %v4269
        %v4726 = vpack.c.b16 %v4274, %v4270
        %v4727 = vpack.c.b16 %v4275, %v4271
        %v4728 = vpack.c.b16 %v4280, %v4276
        %v4729 = vpack.c.b16 %v4281, %v4277
        %v4730 = vpack.c.b16 %v4282, %v4278
        %v4731 = vpack.c.b16 %v4283, %v4279
        %v4732 = vpack.c.b16 %v4288, %v4284
        %v4733 = vpack.c.b16 %v4289, %v4285
        %v4734 = vpack.c.b16 %v4290, %v4286
        %v4735 = vpack.c.b16 %v4291, %v4287
        %v4736 = vpack.c.b16 %v4296, %v4292
        %v4737 = vpack.c.b16 %v4297, %v4293
        %v4738 = vpack.c.b16 %v4298, %v4294
        %v4739 = vpack.c.b16 %v4299, %v4295
        %v4740 = vpack.c.b16 %v4304, %v4300
        %v4741 = vpack.c.b16 %v4305, %v4301
        %v4742 = vpack.c.b16 %v4306, %v4302
        %v4743 = vpack.c.b16 %v4307, %v4303
        %v4744 = vpack.c.b16 %v4312, %v4308
        %v4745 = vpack.c.b16 %v4313, %v4309
        %v4746 = vpack.c.b16 %v4314, %v4310
        %v4747 = vpack.c.b16 %v4315, %v4311
        %v4748 = vpack.c.b16 %v4320, %v4316
        %v4749 = vpack.c.b16 %v4321, %v4317
        %v4750 = vpack.c.b16 %v4322, %v4318
        %v4751 = vpack.c.b16 %v4323, %v4319
        %v4752 = vpack.c.b16 %v4328, %v4324
        %v4753 = vpack.c.b16 %v4329, %v4325
        %v4754 = vpack.c.b16 %v4330, %v4326
        %v4755 = vpack.c.b16 %v4331, %v4327
        %v4756 = vpack.c.b16 %v4336, %v4332
        %v4757 = vpack.c.b16 %v4337, %v4333
        %v4758 = vpack.c.b16 %v4338, %v4334
        %v4759 = vpack.c.b16 %v4339, %v4335
        %v4760 = vpack.c.b16 %v4344, %v4340
        %v4761 = vpack.c.b16 %v4345, %v4341
        %v4762 = vpack.c.b16 %v4346, %v4342
        %v4763 = vpack.c.b16 %v4347, %v4343
        %v4764 = vpack.c.b16 %v4352, %v4348
        %v4765 = vpack.c.b16 %v4353, %v4349
        %v4766 = vpack.c.b16 %v4354, %v4350
        %v4767 = vpack.c.b16 %v4355, %v4351
        %v4768 = vpack.c.b16 %v4360, %v4356
        %v4769 = vpack.c.b16 %v4361, %v4357
        %v4770 = vpack.c.b16 %v4362, %v4358
        %v4771 = vpack.c.b16 %v4363, %v4359
        %v4772 = vpack.c.b16 %v4368, %v4364
        %v4773 = vpack.c.b16 %v4369, %v4365
        %v4774 = vpack.c.b16 %v4370, %v4366
        %v4775 = vpack.c.b16 %v4371, %v4367
        %v4776 = vpack.c.b16 %v4376, %v4372
        %v4777 = vpack.c.b16 %v4377, %v4373
        %v4778 = vpack.c.b16 %v4378, %v4374
        %v4779 = vpack.c.b16 %v4379, %v4375
        %v4780 = vpack.c.b16 %v4384, %v4380
        %v4781 = vpack.c.b16 %v4385, %v4381
        %v4782 = vpack.c.b16 %v4386, %v4382
        %v4783 = vpack.c.b16 %v4387, %v4383
        %v4784 = vpack.c.b16 %v4392, %v4388
        %v4785 = vpack.c.b16 %v4393, %v4389
        %v4786 = vpack.c.b16 %v4394, %v4390
        %v4787 = vpack.c.b16 %v4395, %v4391
        %v4788 = vpack.c.b16 %v4400, %v4396
        %v4789 = vpack.c.b16 %v4401, %v4397
        %v4790 = vpack.c.b16 %v4402, %v4398
        %v4791 = vpack.c.b16 %v4403, %v4399
        %v4792 = vpack.c.b16 %v4408, %v4404
        %v4793 = vpack.c.b16 %v4409, %v4405
        %v4794 = vpack.c.b16 %v4410, %v4406
        %v4795 = vpack.c.b16 %v4411, %v4407
        %v4796 = vpack.c.b16 %v4416, %v4412
        %v4797 = vpack.c.b16 %v4417, %v4413
        %v4798 = vpack.c.b16 %v4418, %v4414
        %v4799 = vpack.c.b16 %v4419, %v4415
        %v4800 = vpack.c.b16 %v4424, %v4420
        %v4801 = vpack.c.b16 %v4425, %v4421
        %v4802 = vpack.c.b16 %v4426, %v4422
        %v4803 = vpack.c.b16 %v4427, %v4423
        %v4804 = vpack.c.b16 %v4432, %v4428
        %v4805 = vpack.c.b16 %v4433, %v4429
        %v4806 = vpack.c.b16 %v4434, %v4430
        %v4807 = vpack.c.b16 %v4435, %v4431
        %v4808 = vpack.c.b16 %v4440, %v4436
        %v4809 = vpack.c.b16 %v4441, %v4437
        %v4810 = vpack.c.b16 %v4442, %v4438
        %v4811 = vpack.c.b16 %v4443, %v4439
        %v4812 = vpack.c.b16 %v4448, %v4444
        %v4813 = vpack.c.b16 %v4449, %v4445
        %v4814 = vpack.c.b16 %v4450, %v4446
        %v4815 = vpack.c.b16 %v4451, %v4447
        %v4816 = vpack.c.b16 %v4456, %v4452
        %v4817 = vpack.c.b16 %v4457, %v4453
        %v4818 = vpack.c.b16 %v4458, %v4454
        %v4819 = vpack.c.b16 %v4459, %v4455
        %v4820 = vpack.c.b16 %v4464, %v4460
        %v4821 = vpack.c.b16 %v4465, %v4461
        %v4822 = vpack.c.b16 %v4466, %v4462
        %v4823 = vpack.c.b16 %v4467, %v4463
        %v4824 = vpack.c.b16 %v4472, %v4468
        %v4825 = vpack.c.b16 %v4473, %v4469
        %v4826 = vpack.c.b16 %v4474, %v4470
        %v4827 = vpack.c.b16 %v4475, %v4471
        %5180 = vmatpush.bf16.msra.mxu0 %v4504
        %5181 = vmatpush.bf16.msra.mxu0 %v4500
        %5182 = vmatpush.bf16.msra.mxu0 %v4496
        %5183 = vmatpush.bf16.msra.mxu0 %v4492
        %5184 = vmatpush.bf16.msra.mxu0 %v4488
        %5185 = vmatpush.bf16.msra.mxu0 %v4484
        %5186 = vmatpush.bf16.msra.mxu0 %v4480
        %5187 = vmatpush.bf16.msra.mxu0 %v4476
        %5188 = vmatmul.bf16.gmra.mxu0 %v3047
        %v5189 = vpop.f32.mrf.mxu0
        %v5190 = vadd.f32 %v3412, %v5189
        %v5191 = vpop.f32.mrf.mxu0
        %5192 = vdwg.mxu0
        %5193 = vmatpush.bf16.msra.mxu0 %v4536
        %5194 = vmatpush.bf16.msra.mxu0 %v4532
        %5195 = vmatpush.bf16.msra.mxu0 %v4528
        %5196 = vmatpush.bf16.msra.mxu0 %v4524
        %5197 = vmatpush.bf16.msra.mxu0 %v4520
        %5198 = vmatpush.bf16.msra.mxu0 %v4516
        %5199 = vmatpush.bf16.msra.mxu0 %v4512
        %5200 = vmatpush.bf16.msra.mxu0 %v4508
        %5201 = vmatmul.bf16.gmra.mxu0 %v3048
        %v5202 = vpop.f32.mrf.mxu0
        %v5203 = vadd.f32 %v5190, %v5202
        %v5204 = vpop.f32.mrf.mxu0
        %5205 = vdwg.mxu0
        %5206 = vmatpush.bf16.msra.mxu0 %v4568
        %5207 = vmatpush.bf16.msra.mxu0 %v4564
        %5208 = vmatpush.bf16.msra.mxu0 %v4560
        %5209 = vmatpush.bf16.msra.mxu0 %v4556
        %5210 = vmatpush.bf16.msra.mxu0 %v4552
        %5211 = vmatpush.bf16.msra.mxu0 %v4548
        %5212 = vmatpush.bf16.msra.mxu0 %v4544
        %5213 = vmatpush.bf16.msra.mxu0 %v4540
        %5214 = vmatmul.bf16.gmra.mxu0 %v3049
        %v5215 = vpop.f32.mrf.mxu0
        %v5216 = vadd.f32 %v5203, %v5215
        %v5217 = vpop.f32.mrf.mxu0
        %5218 = vdwg.mxu0
        %5219 = vmatpush.bf16.msra.mxu0 %v4600
        %5220 = vmatpush.bf16.msra.mxu0 %v4596
        %5221 = vmatpush.bf16.msra.mxu0 %v4592
        %5222 = vmatpush.bf16.msra.mxu0 %v4588
        %5223 = vmatpush.bf16.msra.mxu0 %v4584
        %5224 = vmatpush.bf16.msra.mxu0 %v4580
        %5225 = vmatpush.bf16.msra.mxu0 %v4576
        %5226 = vmatpush.bf16.msra.mxu0 %v4572
        %5227 = vmatmul.bf16.gmra.mxu0 %v3050
        %v5228 = vpop.f32.mrf.mxu0
        %v5229 = vadd.f32 %v5216, %v5228
        %v5230 = vpop.f32.mrf.mxu0
        %5231 = vdwg.mxu0
        %5232 = vmatpush.bf16.msra.mxu0 %v4632
        %5233 = vmatpush.bf16.msra.mxu0 %v4628
        %5234 = vmatpush.bf16.msra.mxu0 %v4624
        %5235 = vmatpush.bf16.msra.mxu0 %v4620
        %5236 = vmatpush.bf16.msra.mxu0 %v4616
        %5237 = vmatpush.bf16.msra.mxu0 %v4612
        %5238 = vmatpush.bf16.msra.mxu0 %v4608
        %5239 = vmatpush.bf16.msra.mxu0 %v4604
        %5240 = vmatmul.bf16.gmra.mxu0 %v3051
        %v5241 = vpop.f32.mrf.mxu0
        %v5242 = vadd.f32 %v5229, %v5241
        %v5243 = vpop.f32.mrf.mxu0
        %5244 = vdwg.mxu0
        %5245 = vmatpush.bf16.msra.mxu0 %v4664
        %5246 = vmatpush.bf16.msra.mxu0 %v4660
        %5247 = vmatpush.bf16.msra.mxu0 %v4656
        %5248 = vmatpush.bf16.msra.mxu0 %v4652
        %5249 = vmatpush.bf16.msra.mxu0 %v4648
        %5250 = vmatpush.bf16.msra.mxu0 %v4644
        %5251 = vmatpush.bf16.msra.mxu0 %v4640
        %5252 = vmatpush.bf16.msra.mxu0 %v4636
        %5253 = vmatmul.bf16.gmra.mxu0 %v3052
        %v5254 = vpop.f32.mrf.mxu0
        %v5255 = vadd.f32 %v5242, %v5254
        %v5256 = vpop.f32.mrf.mxu0
        %5257 = vdwg.mxu0
        %5258 = vmatpush.bf16.msra.mxu0 %v4696
        %5259 = vmatpush.bf16.msra.mxu0 %v4692
        %5260 = vmatpush.bf16.msra.mxu0 %v4688
        %5261 = vmatpush.bf16.msra.mxu0 %v4684
        %5262 = vmatpush.bf16.msra.mxu0 %v4680
        %5263 = vmatpush.bf16.msra.mxu0 %v4676
        %5264 = vmatpush.bf16.msra.mxu0 %v4672
        %5265 = vmatpush.bf16.msra.mxu0 %v4668
        %5266 = vmatmul.bf16.gmra.mxu0 %v3053
        %v5267 = vpop.f32.mrf.mxu0
        %v5268 = vadd.f32 %v5255, %v5267
        %v5269 = vpop.f32.mrf.mxu0
        %5270 = vdwg.mxu0
        %5271 = vmatpush.bf16.msra.mxu0 %v4728
        %5272 = vmatpush.bf16.msra.mxu0 %v4724
        %5273 = vmatpush.bf16.msra.mxu0 %v4720
        %5274 = vmatpush.bf16.msra.mxu0 %v4716
        %5275 = vmatpush.bf16.msra.mxu0 %v4712
        %5276 = vmatpush.bf16.msra.mxu0 %v4708
        %5277 = vmatpush.bf16.msra.mxu0 %v4704
        %5278 = vmatpush.bf16.msra.mxu0 %v4700
        %5279 = vmatmul.bf16.gmra.mxu0 %v3054
        %v5280 = vpop.f32.mrf.mxu0
        %v5281 = vadd.f32 %v5268, %v5280
        %v5282 = vpop.f32.mrf.mxu0
        %5283 = vdwg.mxu0
        %5284 = vmatpush.bf16.msra.mxu0 %v4760
        %5285 = vmatpush.bf16.msra.mxu0 %v4756
        %5286 = vmatpush.bf16.msra.mxu0 %v4752
        %5287 = vmatpush.bf16.msra.mxu0 %v4748
        %5288 = vmatpush.bf16.msra.mxu0 %v4744
        %5289 = vmatpush.bf16.msra.mxu0 %v4740
        %5290 = vmatpush.bf16.msra.mxu0 %v4736
        %5291 = vmatpush.bf16.msra.mxu0 %v4732
        %5292 = vmatmul.bf16.gmra.mxu0 %v3055
        %v5293 = vpop.f32.mrf.mxu0
        %v5294 = vadd.f32 %v5281, %v5293
        %v5295 = vpop.f32.mrf.mxu0
        %5296 = vdwg.mxu0
        %5297 = vmatpush.bf16.msra.mxu0 %v4792
        %5298 = vmatpush.bf16.msra.mxu0 %v4788
        %5299 = vmatpush.bf16.msra.mxu0 %v4784
        %5300 = vmatpush.bf16.msra.mxu0 %v4780
        %5301 = vmatpush.bf16.msra.mxu0 %v4776
        %5302 = vmatpush.bf16.msra.mxu0 %v4772
        %5303 = vmatpush.bf16.msra.mxu0 %v4768
        %5304 = vmatpush.bf16.msra.mxu0 %v4764
        %5305 = vmatmul.bf16.gmra.mxu0 %v3056
        %v5306 = vpop.f32.mrf.mxu0
        %v5307 = vadd.f32 %v5294, %v5306
        %v5308 = vpop.f32.mrf.mxu0
        %5309 = vdwg.mxu0
        %5310 = vmatpush.bf16.msra.mxu0 %v4824
        %5311 = vmatpush.bf16.msra.mxu0 %v4820
        %5312 = vmatpush.bf16.msra.mxu0 %v4816
        %5313 = vmatpush.bf16.msra.mxu0 %v4812
        %5314 = vmatpush.bf16.msra.mxu0 %v4808
        %5315 = vmatpush.bf16.msra.mxu0 %v4804
        %5316 = vmatpush.bf16.msra.mxu0 %v4800
        %5317 = vmatpush.bf16.msra.mxu0 %v4796
        %5318 = vmatmul.bf16.gmra.mxu0 %v3057
        %v5319 = vpop.f32.mrf.mxu0
        %v5320 = vadd.f32 %v5307, %v5319
        %v5321 = vpop.f32.mrf.mxu0
        %5322 = vdwg.mxu0
        %5323 = vmatpush.bf16.msra.mxu0 %v4505
        %5324 = vmatpush.bf16.msra.mxu0 %v4501
        %5325 = vmatpush.bf16.msra.mxu0 %v4497
        %5326 = vmatpush.bf16.msra.mxu0 %v4493
        %5327 = vmatpush.bf16.msra.mxu0 %v4489
        %5328 = vmatpush.bf16.msra.mxu0 %v4485
        %5329 = vmatpush.bf16.msra.mxu0 %v4481
        %5330 = vmatpush.bf16.msra.mxu0 %v4477
        %5331 = vmatmul.bf16.gmra.mxu0 %v3047
        %v5332 = vpop.f32.mrf.mxu0
        %v5333 = vadd.f32 %v3413, %v5332
        %v5334 = vpop.f32.mrf.mxu0
        %5335 = vdwg.mxu0
        %5336 = vmatpush.bf16.msra.mxu0 %v4537
        %5337 = vmatpush.bf16.msra.mxu0 %v4533
        %5338 = vmatpush.bf16.msra.mxu0 %v4529
        %5339 = vmatpush.bf16.msra.mxu0 %v4525
        %5340 = vmatpush.bf16.msra.mxu0 %v4521
        %5341 = vmatpush.bf16.msra.mxu0 %v4517
        %5342 = vmatpush.bf16.msra.mxu0 %v4513
        %5343 = vmatpush.bf16.msra.mxu0 %v4509
        %5344 = vmatmul.bf16.gmra.mxu0 %v3048
        %v5345 = vpop.f32.mrf.mxu0
        %v5346 = vadd.f32 %v5333, %v5345
        %v5347 = vpop.f32.mrf.mxu0
        %5348 = vdwg.mxu0
        %5349 = vmatpush.bf16.msra.mxu0 %v4569
        %5350 = vmatpush.bf16.msra.mxu0 %v4565
        %5351 = vmatpush.bf16.msra.mxu0 %v4561
        %5352 = vmatpush.bf16.msra.mxu0 %v4557
        %5353 = vmatpush.bf16.msra.mxu0 %v4553
        %5354 = vmatpush.bf16.msra.mxu0 %v4549
        %5355 = vmatpush.bf16.msra.mxu0 %v4545
        %5356 = vmatpush.bf16.msra.mxu0 %v4541
        %5357 = vmatmul.bf16.gmra.mxu0 %v3049
        %v5358 = vpop.f32.mrf.mxu0
        %v5359 = vadd.f32 %v5346, %v5358
        %v5360 = vpop.f32.mrf.mxu0
        %5361 = vdwg.mxu0
        %5362 = vmatpush.bf16.msra.mxu0 %v4601
        %5363 = vmatpush.bf16.msra.mxu0 %v4597
        %5364 = vmatpush.bf16.msra.mxu0 %v4593
        %5365 = vmatpush.bf16.msra.mxu0 %v4589
        %5366 = vmatpush.bf16.msra.mxu0 %v4585
        %5367 = vmatpush.bf16.msra.mxu0 %v4581
        %5368 = vmatpush.bf16.msra.mxu0 %v4577
        %5369 = vmatpush.bf16.msra.mxu0 %v4573
        %5370 = vmatmul.bf16.gmra.mxu0 %v3050
        %v5371 = vpop.f32.mrf.mxu0
        %v5372 = vadd.f32 %v5359, %v5371
        %v5373 = vpop.f32.mrf.mxu0
        %5374 = vdwg.mxu0
        %5375 = vmatpush.bf16.msra.mxu0 %v4633
        %5376 = vmatpush.bf16.msra.mxu0 %v4629
        %5377 = vmatpush.bf16.msra.mxu0 %v4625
        %5378 = vmatpush.bf16.msra.mxu0 %v4621
        %5379 = vmatpush.bf16.msra.mxu0 %v4617
        %5380 = vmatpush.bf16.msra.mxu0 %v4613
        %5381 = vmatpush.bf16.msra.mxu0 %v4609
        %5382 = vmatpush.bf16.msra.mxu0 %v4605
        %5383 = vmatmul.bf16.gmra.mxu0 %v3051
        %v5384 = vpop.f32.mrf.mxu0
        %v5385 = vadd.f32 %v5372, %v5384
        %v5386 = vpop.f32.mrf.mxu0
        %5387 = vdwg.mxu0
        %5388 = vmatpush.bf16.msra.mxu0 %v4665
        %5389 = vmatpush.bf16.msra.mxu0 %v4661
        %5390 = vmatpush.bf16.msra.mxu0 %v4657
        %5391 = vmatpush.bf16.msra.mxu0 %v4653
        %5392 = vmatpush.bf16.msra.mxu0 %v4649
        %5393 = vmatpush.bf16.msra.mxu0 %v4645
        %5394 = vmatpush.bf16.msra.mxu0 %v4641
        %5395 = vmatpush.bf16.msra.mxu0 %v4637
        %5396 = vmatmul.bf16.gmra.mxu0 %v3052
        %v5397 = vpop.f32.mrf.mxu0
        %v5398 = vadd.f32 %v5385, %v5397
        %v5399 = vpop.f32.mrf.mxu0
        %5400 = vdwg.mxu0
        %5401 = vmatpush.bf16.msra.mxu0 %v4697
        %5402 = vmatpush.bf16.msra.mxu0 %v4693
        %5403 = vmatpush.bf16.msra.mxu0 %v4689
        %5404 = vmatpush.bf16.msra.mxu0 %v4685
        %5405 = vmatpush.bf16.msra.mxu0 %v4681
        %5406 = vmatpush.bf16.msra.mxu0 %v4677
        %5407 = vmatpush.bf16.msra.mxu0 %v4673
        %5408 = vmatpush.bf16.msra.mxu0 %v4669
        %5409 = vmatmul.bf16.gmra.mxu0 %v3053
        %v5410 = vpop.f32.mrf.mxu0
        %v5411 = vadd.f32 %v5398, %v5410
        %v5412 = vpop.f32.mrf.mxu0
        %5413 = vdwg.mxu0
        %5414 = vmatpush.bf16.msra.mxu0 %v4729
        %5415 = vmatpush.bf16.msra.mxu0 %v4725
        %5416 = vmatpush.bf16.msra.mxu0 %v4721
        %5417 = vmatpush.bf16.msra.mxu0 %v4717
        %5418 = vmatpush.bf16.msra.mxu0 %v4713
        %5419 = vmatpush.bf16.msra.mxu0 %v4709
        %5420 = vmatpush.bf16.msra.mxu0 %v4705
        %5421 = vmatpush.bf16.msra.mxu0 %v4701
        %5422 = vmatmul.bf16.gmra.mxu0 %v3054
        %v5423 = vpop.f32.mrf.mxu0
        %v5424 = vadd.f32 %v5411, %v5423
        %v5425 = vpop.f32.mrf.mxu0
        %5426 = vdwg.mxu0
        %5427 = vmatpush.bf16.msra.mxu0 %v4761
        %5428 = vmatpush.bf16.msra.mxu0 %v4757
        %5429 = vmatpush.bf16.msra.mxu0 %v4753
        %5430 = vmatpush.bf16.msra.mxu0 %v4749
        %5431 = vmatpush.bf16.msra.mxu0 %v4745
        %5432 = vmatpush.bf16.msra.mxu0 %v4741
        %5433 = vmatpush.bf16.msra.mxu0 %v4737
        %5434 = vmatpush.bf16.msra.mxu0 %v4733
        %5435 = vmatmul.bf16.gmra.mxu0 %v3055
        %v5436 = vpop.f32.mrf.mxu0
        %v5437 = vadd.f32 %v5424, %v5436
        %v5438 = vpop.f32.mrf.mxu0
        %5439 = vdwg.mxu0
        %5440 = vmatpush.bf16.msra.mxu0 %v4793
        %5441 = vmatpush.bf16.msra.mxu0 %v4789
        %5442 = vmatpush.bf16.msra.mxu0 %v4785
        %5443 = vmatpush.bf16.msra.mxu0 %v4781
        %5444 = vmatpush.bf16.msra.mxu0 %v4777
        %5445 = vmatpush.bf16.msra.mxu0 %v4773
        %5446 = vmatpush.bf16.msra.mxu0 %v4769
        %5447 = vmatpush.bf16.msra.mxu0 %v4765
        %5448 = vmatmul.bf16.gmra.mxu0 %v3056
        %v5449 = vpop.f32.mrf.mxu0
        %v5450 = vadd.f32 %v5437, %v5449
        %v5451 = vpop.f32.mrf.mxu0
        %5452 = vdwg.mxu0
        %5453 = vmatpush.bf16.msra.mxu0 %v4825
        %5454 = vmatpush.bf16.msra.mxu0 %v4821
        %5455 = vmatpush.bf16.msra.mxu0 %v4817
        %5456 = vmatpush.bf16.msra.mxu0 %v4813
        %5457 = vmatpush.bf16.msra.mxu0 %v4809
        %5458 = vmatpush.bf16.msra.mxu0 %v4805
        %5459 = vmatpush.bf16.msra.mxu0 %v4801
        %5460 = vmatpush.bf16.msra.mxu0 %v4797
        %5461 = vmatmul.bf16.gmra.mxu0 %v3057
        %v5462 = vpop.f32.mrf.mxu0
        %v5463 = vadd.f32 %v5450, %v5462
        %v5464 = vpop.f32.mrf.mxu0
        %5465 = vdwg.mxu0
        %5466 = vmatpush.bf16.msra.mxu0 %v4506
        %5467 = vmatpush.bf16.msra.mxu0 %v4502
        %5468 = vmatpush.bf16.msra.mxu0 %v4498
        %5469 = vmatpush.bf16.msra.mxu0 %v4494
        %5470 = vmatpush.bf16.msra.mxu0 %v4490
        %5471 = vmatpush.bf16.msra.mxu0 %v4486
        %5472 = vmatpush.bf16.msra.mxu0 %v4482
        %5473 = vmatpush.bf16.msra.mxu0 %v4478
        %5474 = vmatmul.bf16.gmra.mxu0 %v3047
        %v5475 = vpop.f32.mrf.mxu0
        %v5476 = vadd.f32 %v3414, %v5475
        %v5477 = vpop.f32.mrf.mxu0
        %5478 = vdwg.mxu0
        %5479 = vmatpush.bf16.msra.mxu0 %v4538
        %5480 = vmatpush.bf16.msra.mxu0 %v4534
        %5481 = vmatpush.bf16.msra.mxu0 %v4530
        %5482 = vmatpush.bf16.msra.mxu0 %v4526
        %5483 = vmatpush.bf16.msra.mxu0 %v4522
        %5484 = vmatpush.bf16.msra.mxu0 %v4518
        %5485 = vmatpush.bf16.msra.mxu0 %v4514
        %5486 = vmatpush.bf16.msra.mxu0 %v4510
        %5487 = vmatmul.bf16.gmra.mxu0 %v3048
        %v5488 = vpop.f32.mrf.mxu0
        %v5489 = vadd.f32 %v5476, %v5488
        %v5490 = vpop.f32.mrf.mxu0
        %5491 = vdwg.mxu0
        %5492 = vmatpush.bf16.msra.mxu0 %v4570
        %5493 = vmatpush.bf16.msra.mxu0 %v4566
        %5494 = vmatpush.bf16.msra.mxu0 %v4562
        %5495 = vmatpush.bf16.msra.mxu0 %v4558
        %5496 = vmatpush.bf16.msra.mxu0 %v4554
        %5497 = vmatpush.bf16.msra.mxu0 %v4550
        %5498 = vmatpush.bf16.msra.mxu0 %v4546
        %5499 = vmatpush.bf16.msra.mxu0 %v4542
        %5500 = vmatmul.bf16.gmra.mxu0 %v3049
        %v5501 = vpop.f32.mrf.mxu0
        %v5502 = vadd.f32 %v5489, %v5501
        %v5503 = vpop.f32.mrf.mxu0
        %5504 = vdwg.mxu0
        %5505 = vmatpush.bf16.msra.mxu0 %v4602
        %5506 = vmatpush.bf16.msra.mxu0 %v4598
        %5507 = vmatpush.bf16.msra.mxu0 %v4594
        %5508 = vmatpush.bf16.msra.mxu0 %v4590
        %5509 = vmatpush.bf16.msra.mxu0 %v4586
        %5510 = vmatpush.bf16.msra.mxu0 %v4582
        %5511 = vmatpush.bf16.msra.mxu0 %v4578
        %5512 = vmatpush.bf16.msra.mxu0 %v4574
        %5513 = vmatmul.bf16.gmra.mxu0 %v3050
        %v5514 = vpop.f32.mrf.mxu0
        %v5515 = vadd.f32 %v5502, %v5514
        %v5516 = vpop.f32.mrf.mxu0
        %5517 = vdwg.mxu0
        %5518 = vmatpush.bf16.msra.mxu0 %v4634
        %5519 = vmatpush.bf16.msra.mxu0 %v4630
        %5520 = vmatpush.bf16.msra.mxu0 %v4626
        %5521 = vmatpush.bf16.msra.mxu0 %v4622
        %5522 = vmatpush.bf16.msra.mxu0 %v4618
        %5523 = vmatpush.bf16.msra.mxu0 %v4614
        %5524 = vmatpush.bf16.msra.mxu0 %v4610
        %5525 = vmatpush.bf16.msra.mxu0 %v4606
        %5526 = vmatmul.bf16.gmra.mxu0 %v3051
        %v5527 = vpop.f32.mrf.mxu0
        %v5528 = vadd.f32 %v5515, %v5527
        %v5529 = vpop.f32.mrf.mxu0
        %5530 = vdwg.mxu0
        %5531 = vmatpush.bf16.msra.mxu0 %v4666
        %5532 = vmatpush.bf16.msra.mxu0 %v4662
        %5533 = vmatpush.bf16.msra.mxu0 %v4658
        %5534 = vmatpush.bf16.msra.mxu0 %v4654
        %5535 = vmatpush.bf16.msra.mxu0 %v4650
        %5536 = vmatpush.bf16.msra.mxu0 %v4646
        %5537 = vmatpush.bf16.msra.mxu0 %v4642
        %5538 = vmatpush.bf16.msra.mxu0 %v4638
        %5539 = vmatmul.bf16.gmra.mxu0 %v3052
        %v5540 = vpop.f32.mrf.mxu0
        %v5541 = vadd.f32 %v5528, %v5540
        %v5542 = vpop.f32.mrf.mxu0
        %5543 = vdwg.mxu0
        %5544 = vmatpush.bf16.msra.mxu0 %v4698
        %5545 = vmatpush.bf16.msra.mxu0 %v4694
        %5546 = vmatpush.bf16.msra.mxu0 %v4690
        %5547 = vmatpush.bf16.msra.mxu0 %v4686
        %5548 = vmatpush.bf16.msra.mxu0 %v4682
        %5549 = vmatpush.bf16.msra.mxu0 %v4678
        %5550 = vmatpush.bf16.msra.mxu0 %v4674
        %5551 = vmatpush.bf16.msra.mxu0 %v4670
        %5552 = vmatmul.bf16.gmra.mxu0 %v3053
        %v5553 = vpop.f32.mrf.mxu0
        %v5554 = vadd.f32 %v5541, %v5553
        %v5555 = vpop.f32.mrf.mxu0
        %5556 = vdwg.mxu0
        %5557 = vmatpush.bf16.msra.mxu0 %v4730
        %5558 = vmatpush.bf16.msra.mxu0 %v4726
        %5559 = vmatpush.bf16.msra.mxu0 %v4722
        %5560 = vmatpush.bf16.msra.mxu0 %v4718
        %5561 = vmatpush.bf16.msra.mxu0 %v4714
        %5562 = vmatpush.bf16.msra.mxu0 %v4710
        %5563 = vmatpush.bf16.msra.mxu0 %v4706
        %5564 = vmatpush.bf16.msra.mxu0 %v4702
        %5565 = vmatmul.bf16.gmra.mxu0 %v3054
        %v5566 = vpop.f32.mrf.mxu0
        %v5567 = vadd.f32 %v5554, %v5566
        %v5568 = vpop.f32.mrf.mxu0
        %5569 = vdwg.mxu0
        %5570 = vmatpush.bf16.msra.mxu0 %v4762
        %5571 = vmatpush.bf16.msra.mxu0 %v4758
        %5572 = vmatpush.bf16.msra.mxu0 %v4754
        %5573 = vmatpush.bf16.msra.mxu0 %v4750
        %5574 = vmatpush.bf16.msra.mxu0 %v4746
        %5575 = vmatpush.bf16.msra.mxu0 %v4742
        %5576 = vmatpush.bf16.msra.mxu0 %v4738
        %5577 = vmatpush.bf16.msra.mxu0 %v4734
        %5578 = vmatmul.bf16.gmra.mxu0 %v3055
        %v5579 = vpop.f32.mrf.mxu0
        %v5580 = vadd.f32 %v5567, %v5579
        %v5581 = vpop.f32.mrf.mxu0
        %5582 = vdwg.mxu0
        %5583 = vmatpush.bf16.msra.mxu0 %v4794
        %5584 = vmatpush.bf16.msra.mxu0 %v4790
        %5585 = vmatpush.bf16.msra.mxu0 %v4786
        %5586 = vmatpush.bf16.msra.mxu0 %v4782
        %5587 = vmatpush.bf16.msra.mxu0 %v4778
        %5588 = vmatpush.bf16.msra.mxu0 %v4774
        %5589 = vmatpush.bf16.msra.mxu0 %v4770
        %5590 = vmatpush.bf16.msra.mxu0 %v4766
        %5591 = vmatmul.bf16.gmra.mxu0 %v3056
        %v5592 = vpop.f32.mrf.mxu0
        %v5593 = vadd.f32 %v5580, %v5592
        %v5594 = vpop.f32.mrf.mxu0
        %5595 = vdwg.mxu0
        %5596 = vmatpush.bf16.msra.mxu0 %v4826
        %5597 = vmatpush.bf16.msra.mxu0 %v4822
        %5598 = vmatpush.bf16.msra.mxu0 %v4818
        %5599 = vmatpush.bf16.msra.mxu0 %v4814
        %5600 = vmatpush.bf16.msra.mxu0 %v4810
        %5601 = vmatpush.bf16.msra.mxu0 %v4806
        %5602 = vmatpush.bf16.msra.mxu0 %v4802
        %5603 = vmatpush.bf16.msra.mxu0 %v4798
        %5604 = vmatmul.bf16.gmra.mxu0 %v3057
        %v5605 = vpop.f32.mrf.mxu0
        %v5606 = vadd.f32 %v5593, %v5605
        %v5607 = vpop.f32.mrf.mxu0
        %5608 = vdwg.mxu0
        %5609 = vmatpush.bf16.msra.mxu0 %v4507
        %5610 = vmatpush.bf16.msra.mxu0 %v4503
        %5611 = vmatpush.bf16.msra.mxu0 %v4499
        %5612 = vmatpush.bf16.msra.mxu0 %v4495
        %5613 = vmatpush.bf16.msra.mxu0 %v4491
        %5614 = vmatpush.bf16.msra.mxu0 %v4487
        %5615 = vmatpush.bf16.msra.mxu0 %v4483
        %5616 = vmatpush.bf16.msra.mxu0 %v4479
        %5617 = vmatmul.bf16.gmra.mxu0 %v3047
        %v5618 = vpop.f32.mrf.mxu0
        %v5619 = vadd.f32 %v3415, %v5618
        %v5620 = vpop.f32.mrf.mxu0
        %5621 = vdwg.mxu0
        %5622 = vmatpush.bf16.msra.mxu0 %v4539
        %5623 = vmatpush.bf16.msra.mxu0 %v4535
        %5624 = vmatpush.bf16.msra.mxu0 %v4531
        %5625 = vmatpush.bf16.msra.mxu0 %v4527
        %5626 = vmatpush.bf16.msra.mxu0 %v4523
        %5627 = vmatpush.bf16.msra.mxu0 %v4519
        %5628 = vmatpush.bf16.msra.mxu0 %v4515
        %5629 = vmatpush.bf16.msra.mxu0 %v4511
        %5630 = vmatmul.bf16.gmra.mxu0 %v3048
        %v5631 = vpop.f32.mrf.mxu0
        %v5632 = vadd.f32 %v5619, %v5631
        %v5633 = vpop.f32.mrf.mxu0
        %5634 = vdwg.mxu0
        %5635 = vmatpush.bf16.msra.mxu0 %v4571
        %5636 = vmatpush.bf16.msra.mxu0 %v4567
        %5637 = vmatpush.bf16.msra.mxu0 %v4563
        %5638 = vmatpush.bf16.msra.mxu0 %v4559
        %5639 = vmatpush.bf16.msra.mxu0 %v4555
        %5640 = vmatpush.bf16.msra.mxu0 %v4551
        %5641 = vmatpush.bf16.msra.mxu0 %v4547
        %5642 = vmatpush.bf16.msra.mxu0 %v4543
        %5643 = vmatmul.bf16.gmra.mxu0 %v3049
        %v5644 = vpop.f32.mrf.mxu0
        %v5645 = vadd.f32 %v5632, %v5644
        %v5646 = vpop.f32.mrf.mxu0
        %5647 = vdwg.mxu0
        %5648 = vmatpush.bf16.msra.mxu0 %v4603
        %5649 = vmatpush.bf16.msra.mxu0 %v4599
        %5650 = vmatpush.bf16.msra.mxu0 %v4595
        %5651 = vmatpush.bf16.msra.mxu0 %v4591
        %5652 = vmatpush.bf16.msra.mxu0 %v4587
        %5653 = vmatpush.bf16.msra.mxu0 %v4583
        %5654 = vmatpush.bf16.msra.mxu0 %v4579
        %5655 = vmatpush.bf16.msra.mxu0 %v4575
        %5656 = vmatmul.bf16.gmra.mxu0 %v3050
        %v5657 = vpop.f32.mrf.mxu0
        %v5658 = vadd.f32 %v5645, %v5657
        %v5659 = vpop.f32.mrf.mxu0
        %5660 = vdwg.mxu0
        %5661 = vmatpush.bf16.msra.mxu0 %v4635
        %5662 = vmatpush.bf16.msra.mxu0 %v4631
        %5663 = vmatpush.bf16.msra.mxu0 %v4627
        %5664 = vmatpush.bf16.msra.mxu0 %v4623
        %5665 = vmatpush.bf16.msra.mxu0 %v4619
        %5666 = vmatpush.bf16.msra.mxu0 %v4615
        %5667 = vmatpush.bf16.msra.mxu0 %v4611
        %5668 = vmatpush.bf16.msra.mxu0 %v4607
        %5669 = vmatmul.bf16.gmra.mxu0 %v3051
        %v5670 = vpop.f32.mrf.mxu0
        %v5671 = vadd.f32 %v5658, %v5670
        %v5672 = vpop.f32.mrf.mxu0
        %5673 = vdwg.mxu0
        %5674 = vmatpush.bf16.msra.mxu0 %v4667
        %5675 = vmatpush.bf16.msra.mxu0 %v4663
        %5676 = vmatpush.bf16.msra.mxu0 %v4659
        %5677 = vmatpush.bf16.msra.mxu0 %v4655
        %5678 = vmatpush.bf16.msra.mxu0 %v4651
        %5679 = vmatpush.bf16.msra.mxu0 %v4647
        %5680 = vmatpush.bf16.msra.mxu0 %v4643
        %5681 = vmatpush.bf16.msra.mxu0 %v4639
        %5682 = vmatmul.bf16.gmra.mxu0 %v3052
        %v5683 = vpop.f32.mrf.mxu0
        %v5684 = vadd.f32 %v5671, %v5683
        %v5685 = vpop.f32.mrf.mxu0
        %5686 = vdwg.mxu0
        %5687 = vmatpush.bf16.msra.mxu0 %v4699
        %5688 = vmatpush.bf16.msra.mxu0 %v4695
        %5689 = vmatpush.bf16.msra.mxu0 %v4691
        %5690 = vmatpush.bf16.msra.mxu0 %v4687
        %5691 = vmatpush.bf16.msra.mxu0 %v4683
        %5692 = vmatpush.bf16.msra.mxu0 %v4679
        %5693 = vmatpush.bf16.msra.mxu0 %v4675
        %5694 = vmatpush.bf16.msra.mxu0 %v4671
        %5695 = vmatmul.bf16.gmra.mxu0 %v3053
        %v5696 = vpop.f32.mrf.mxu0
        %v5697 = vadd.f32 %v5684, %v5696
        %v5698 = vpop.f32.mrf.mxu0
        %5699 = vdwg.mxu0
        %5700 = vmatpush.bf16.msra.mxu0 %v4731
        %5701 = vmatpush.bf16.msra.mxu0 %v4727
        %5702 = vmatpush.bf16.msra.mxu0 %v4723
        %5703 = vmatpush.bf16.msra.mxu0 %v4719
        %5704 = vmatpush.bf16.msra.mxu0 %v4715
        %5705 = vmatpush.bf16.msra.mxu0 %v4711
        %5706 = vmatpush.bf16.msra.mxu0 %v4707
        %5707 = vmatpush.bf16.msra.mxu0 %v4703
        %5708 = vmatmul.bf16.gmra.mxu0 %v3054
        %v5709 = vpop.f32.mrf.mxu0
        %v5710 = vadd.f32 %v5697, %v5709
        %v5711 = vpop.f32.mrf.mxu0
        %5712 = vdwg.mxu0
        %5713 = vmatpush.bf16.msra.mxu0 %v4763
        %5714 = vmatpush.bf16.msra.mxu0 %v4759
        %5715 = vmatpush.bf16.msra.mxu0 %v4755
        %5716 = vmatpush.bf16.msra.mxu0 %v4751
        %5717 = vmatpush.bf16.msra.mxu0 %v4747
        %5718 = vmatpush.bf16.msra.mxu0 %v4743
        %5719 = vmatpush.bf16.msra.mxu0 %v4739
        %5720 = vmatpush.bf16.msra.mxu0 %v4735
        %5721 = vmatmul.bf16.gmra.mxu0 %v3055
        %v5722 = vpop.f32.mrf.mxu0
        %v5723 = vadd.f32 %v5710, %v5722
        %v5724 = vpop.f32.mrf.mxu0
        %5725 = vdwg.mxu0
        %5726 = vmatpush.bf16.msra.mxu0 %v4795
        %5727 = vmatpush.bf16.msra.mxu0 %v4791
        %5728 = vmatpush.bf16.msra.mxu0 %v4787
        %5729 = vmatpush.bf16.msra.mxu0 %v4783
        %5730 = vmatpush.bf16.msra.mxu0 %v4779
        %5731 = vmatpush.bf16.msra.mxu0 %v4775
        %5732 = vmatpush.bf16.msra.mxu0 %v4771
        %5733 = vmatpush.bf16.msra.mxu0 %v4767
        %5734 = vmatmul.bf16.gmra.mxu0 %v3056
        %v5735 = vpop.f32.mrf.mxu0
        %v5736 = vadd.f32 %v5723, %v5735
        %v5737 = vpop.f32.mrf.mxu0
        %5738 = vdwg.mxu0
        %5739 = vmatpush.bf16.msra.mxu0 %v4827
        %5740 = vmatpush.bf16.msra.mxu0 %v4823
        %5741 = vmatpush.bf16.msra.mxu0 %v4819
        %5742 = vmatpush.bf16.msra.mxu0 %v4815
        %5743 = vmatpush.bf16.msra.mxu0 %v4811
        %5744 = vmatpush.bf16.msra.mxu0 %v4807
        %5745 = vmatpush.bf16.msra.mxu0 %v4803
        %5746 = vmatpush.bf16.msra.mxu0 %v4799
        %5747 = vmatmul.bf16.gmra.mxu0 %v3057
        %v5748 = vpop.f32.mrf.mxu0
        %v5749 = vadd.f32 %v5736, %v5748
        %v5750 = vpop.f32.mrf.mxu0
        %5751 = vdwg.mxu0
        %vm5752 = vcmp.ge.f32.partialorder %v5320, 0.0
        %vm5753 = vcmp.ge.f32.partialorder %v5463, 0.0
        %vm5754 = vcmp.ge.f32.partialorder %v5606, 0.0
        %vm5755 = vcmp.ge.f32.partialorder %v5749, 0.0
        %v5756 = vmul.f32 %v5320, 0.01
        %v5757 = vmul.f32 %v5463, 0.01
        %v5758 = vmul.f32 %v5606, 0.01
        %v5759 = vmul.f32 %v5749, 0.01
        %v5760 = vsel %vm5752, %v5320, %v5756
        %v5761 = vsel %vm5753, %v5463, %v5757
        %v5762 = vsel %vm5754, %v5606, %v5758
        %v5763 = vsel %vm5755, %v5749, %v5759
        %v5764 = vpack.c.bf16 %v5760, %v5760
        %v5765 = vpack.c.bf16 %v5761, %v5761
        %v5766 = vpack.c.bf16 %v5762, %v5762
        %v5767 = vpack.c.bf16 %v5763, %v5763
        %v5768 = vld [vmem:[%s4] sm:$0xff]
        %v5769 = vld [vmem:[%s4 + $0x8] sm:$0xff]
        %v5770 = vld [vmem:[%s4 + $0x10] sm:$0xff]
        %v5771 = vld [vmem:[%s4 + $0x18] sm:$0xff]
        %v5772 = vld [vmem:[%s4 + $0x20] sm:$0xff]
        %v5773 = vld [vmem:[%s4 + $0x28] sm:$0xff]
        %v5774 = vld [vmem:[%s4 + $0x30] sm:$0xff]
        %v5775 = vld [vmem:[%s4 + $0x38] sm:$0xff]
        %v5776 = vld [vmem:[%s4 + $0x40] sm:$0xff]
        %v5777 = vld [vmem:[%s4 + $0x48] sm:$0xff]
        %v5778 = vld [vmem:[%s4 + $0x50] sm:$0xff]
        %v5779 = vld [vmem:[%s4 + $0x58] sm:$0xff]
        %v5780 = vld [vmem:[%s4 + $0x60] sm:$0xff]
        %v5781 = vld [vmem:[%s4 + $0x68] sm:$0xff]
        %v5782 = vld [vmem:[%s4 + $0x70] sm:$0xff]
        %v5783 = vld [vmem:[%s4 + $0x78] sm:$0xff]
        %v5784 = vld [vmem:[%s4 + $0x80] sm:$0xff]
        %v5785 = vld [vmem:[%s4 + $0x88] sm:$0xff]
        %v5786 = vld [vmem:[%s4 + $0x90] sm:$0xff]
        %v5787 = vld [vmem:[%s4 + $0x98] sm:$0xff]
        %v5788 = vld [vmem:[%s4 + $0xa0] sm:$0xff]
        %v5789 = vld [vmem:[%s4 + $0xa8] sm:$0xff]
        %v5790 = vld [vmem:[%s4 + $0xb0] sm:$0xff]
        %v5791 = vld [vmem:[%s4 + $0xb8] sm:$0xff]
        %v5792 = vld [vmem:[%s4 + $0xc0] sm:$0xff]
        %v5793 = vld [vmem:[%s4 + $0xc8] sm:$0xff]
        %v5794 = vld [vmem:[%s4 + $0xd0] sm:$0xff]
        %v5795 = vld [vmem:[%s4 + $0xd8] sm:$0xff]
        %v5796 = vld [vmem:[%s4 + $0xe0] sm:$0xff]
        %v5797 = vld [vmem:[%s4 + $0xe8] sm:$0xff]
        %v5798 = vld [vmem:[%s4 + $0xf0] sm:$0xff]
        %v5799 = vld [vmem:[%s4 + $0xf8] sm:$0xff]
        %v5800 = vld [vmem:[%s4 + $0x100] sm:$0xff]
        %v5801 = vld [vmem:[%s4 + $0x108] sm:$0xff]
        %v5802 = vld [vmem:[%s4 + $0x110] sm:$0xff]
        %v5803 = vld [vmem:[%s4 + $0x118] sm:$0xff]
        %v5804 = vld [vmem:[%s4 + $0x120] sm:$0xff]
        %v5805 = vld [vmem:[%s4 + $0x128] sm:$0xff]
        %v5806 = vld [vmem:[%s4 + $0x130] sm:$0xff]
        %v5807 = vld [vmem:[%s4 + $0x138] sm:$0xff]
        %v5808 = vld [vmem:[%s4 + $0x140] sm:$0xff]
        %v5809 = vld [vmem:[%s4 + $0x148] sm:$0xff]
        %v5810 = vld [vmem:[%s4 + $0x150] sm:$0xff]
        %v5811 = vld [vmem:[%s4 + $0x158] sm:$0xff]
        %v5812 = vld [vmem:[%s4 + $0x160] sm:$0xff]
        %v5813 = vld [vmem:[%s4 + $0x168] sm:$0xff]
        %v5814 = vld [vmem:[%s4 + $0x170] sm:$0xff]
        %v5815 = vld [vmem:[%s4 + $0x178] sm:$0xff]
        %v5816 = vld [vmem:[%s4 + $0x180] sm:$0xff]
        %v5817 = vld [vmem:[%s4 + $0x188] sm:$0xff]
        %v5818 = vld [vmem:[%s4 + $0x190] sm:$0xff]
        %v5819 = vld [vmem:[%s4 + $0x198] sm:$0xff]
        %v5820 = vld [vmem:[%s4 + $0x1a0] sm:$0xff]
        %v5821 = vld [vmem:[%s4 + $0x1a8] sm:$0xff]
        %v5822 = vld [vmem:[%s4 + $0x1b0] sm:$0xff]
        %v5823 = vld [vmem:[%s4 + $0x1b8] sm:$0xff]
        %v5824 = vld [vmem:[%s4 + $0x1c0] sm:$0xff]
        %v5825 = vld [vmem:[%s4 + $0x1c8] sm:$0xff]
        %v5826 = vld [vmem:[%s4 + $0x1d0] sm:$0xff]
        %v5827 = vld [vmem:[%s4 + $0x1d8] sm:$0xff]
        %v5828 = vld [vmem:[%s4 + $0x1e0] sm:$0xff]
        %v5829 = vld [vmem:[%s4 + $0x1e8] sm:$0xff]
        %v5830 = vld [vmem:[%s4 + $0x1f0] sm:$0xff]
        %v5831 = vld [vmem:[%s4 + $0x1f8] sm:$0xff]
        %v5832 = vld [vmem:[%s5 + $0x7] sm:$0x3]
        %v5834 = vperm.slane %v5832, 0
        %v5835 = vperm.slane %v5832, 1
        %v5902 = vunpack.c.l.b16 %v5768
        %v5903 = vunpack.c.h.b16 %v5768
        %v5904 = vunpack.c.l.b16 %v5769
        %v5905 = vunpack.c.h.b16 %v5769
        %v5906 = vunpack.c.l.b16 %v5770
        %v5907 = vunpack.c.h.b16 %v5770
        %v5908 = vunpack.c.l.b16 %v5771
        %v5909 = vunpack.c.h.b16 %v5771
        %v5910 = vunpack.c.l.b16 %v5772
        %v5911 = vunpack.c.h.b16 %v5772
        %v5912 = vunpack.c.l.b16 %v5773
        %v5913 = vunpack.c.h.b16 %v5773
        %v5914 = vunpack.c.l.b16 %v5774
        %v5915 = vunpack.c.h.b16 %v5774
        %v5916 = vunpack.c.l.b16 %v5775
        %v5917 = vunpack.c.h.b16 %v5775
        %v5918 = vunpack.c.l.b16 %v5776
        %v5919 = vunpack.c.h.b16 %v5776
        %v5920 = vunpack.c.l.b16 %v5777
        %v5921 = vunpack.c.h.b16 %v5777
        %v5922 = vunpack.c.l.b16 %v5778
        %v5923 = vunpack.c.h.b16 %v5778
        %v5924 = vunpack.c.l.b16 %v5779
        %v5925 = vunpack.c.h.b16 %v5779
        %v5926 = vunpack.c.l.b16 %v5780
        %v5927 = vunpack.c.h.b16 %v5780
        %v5928 = vunpack.c.l.b16 %v5781
        %v5929 = vunpack.c.h.b16 %v5781
        %v5930 = vunpack.c.l.b16 %v5782
        %v5931 = vunpack.c.h.b16 %v5782
        %v5932 = vunpack.c.l.b16 %v5783
        %v5933 = vunpack.c.h.b16 %v5783
        %v5934 = vunpack.c.l.b16 %v5784
        %v5935 = vunpack.c.h.b16 %v5784
        %v5936 = vunpack.c.l.b16 %v5785
        %v5937 = vunpack.c.h.b16 %v5785
        %v5938 = vunpack.c.l.b16 %v5786
        %v5939 = vunpack.c.h.b16 %v5786
        %v5940 = vunpack.c.l.b16 %v5787
        %v5941 = vunpack.c.h.b16 %v5787
        %v5942 = vunpack.c.l.b16 %v5788
        %v5943 = vunpack.c.h.b16 %v5788
        %v5944 = vunpack.c.l.b16 %v5789
        %v5945 = vunpack.c.h.b16 %v5789
        %v5946 = vunpack.c.l.b16 %v5790
        %v5947 = vunpack.c.h.b16 %v5790
        %v5948 = vunpack.c.l.b16 %v5791
        %v5949 = vunpack.c.h.b16 %v5791
        %v5950 = vunpack.c.l.b16 %v5792
        %v5951 = vunpack.c.h.b16 %v5792
        %v5952 = vunpack.c.l.b16 %v5793
        %v5953 = vunpack.c.h.b16 %v5793
        %v5954 = vunpack.c.l.b16 %v5794
        %v5955 = vunpack.c.h.b16 %v5794
        %v5956 = vunpack.c.l.b16 %v5795
        %v5957 = vunpack.c.h.b16 %v5795
        %v5958 = vunpack.c.l.b16 %v5796
        %v5959 = vunpack.c.h.b16 %v5796
        %v5960 = vunpack.c.l.b16 %v5797
        %v5961 = vunpack.c.h.b16 %v5797
        %v5962 = vunpack.c.l.b16 %v5798
        %v5963 = vunpack.c.h.b16 %v5798
        %v5964 = vunpack.c.l.b16 %v5799
        %v5965 = vunpack.c.h.b16 %v5799
        %v5966 = vunpack.c.l.b16 %v5800
        %v5967 = vunpack.c.h.b16 %v5800
        %v5968 = vunpack.c.l.b16 %v5801
        %v5969 = vunpack.c.h.b16 %v5801
        %v5970 = vunpack.c.l.b16 %v5802
        %v5971 = vunpack.c.h.b16 %v5802
        %v5972 = vunpack.c.l.b16 %v5803
        %v5973 = vunpack.c.h.b16 %v5803
        %v5974 = vunpack.c.l.b16 %v5804
        %v5975 = vunpack.c.h.b16 %v5804
        %v5976 = vunpack.c.l.b16 %v5805
        %v5977 = vunpack.c.h.b16 %v5805
        %v5978 = vunpack.c.l.b16 %v5806
        %v5979 = vunpack.c.h.b16 %v5806
        %v5980 = vunpack.c.l.b16 %v5807
        %v5981 = vunpack.c.h.b16 %v5807
        %v5982 = vunpack.c.l.b16 %v5808
        %v5983 = vunpack.c.h.b16 %v5808
        %v5984 = vunpack.c.l.b16 %v5809
        %v5985 = vunpack.c.h.b16 %v5809
        %v5986 = vunpack.c.l.b16 %v5810
        %v5987 = vunpack.c.h.b16 %v5810
        %v5988 = vunpack.c.l.b16 %v5811
        %v5989 = vunpack.c.h.b16 %v5811
        %v5990 = vunpack.c.l.b16 %v5812
        %v5991 = vunpack.c.h.b16 %v5812
        %v5992 = vunpack.c.l.b16 %v5813
        %v5993 = vunpack.c.h.b16 %v5813
        %v5994 = vunpack.c.l.b16 %v5814
        %v5995 = vunpack.c.h.b16 %v5814
        %v5996 = vunpack.c.l.b16 %v5815
        %v5997 = vunpack.c.h.b16 %v5815
        %v5998 = vunpack.c.l.b16 %v5816
        %v5999 = vunpack.c.h.b16 %v5816
        %v6000 = vunpack.c.l.b16 %v5817
        %v6001 = vunpack.c.h.b16 %v5817
        %v6002 = vunpack.c.l.b16 %v5818
        %v6003 = vunpack.c.h.b16 %v5818
        %v6004 = vunpack.c.l.b16 %v5819
        %v6005 = vunpack.c.h.b16 %v5819
        %v6006 = vunpack.c.l.b16 %v5820
        %v6007 = vunpack.c.h.b16 %v5820
        %v6008 = vunpack.c.l.b16 %v5821
        %v6009 = vunpack.c.h.b16 %v5821
        %v6010 = vunpack.c.l.b16 %v5822
        %v6011 = vunpack.c.h.b16 %v5822
        %v6012 = vunpack.c.l.b16 %v5823
        %v6013 = vunpack.c.h.b16 %v5823
        %v6014 = vunpack.c.l.b16 %v5824
        %v6015 = vunpack.c.h.b16 %v5824
        %v6016 = vunpack.c.l.b16 %v5825
        %v6017 = vunpack.c.h.b16 %v5825
        %v6018 = vunpack.c.l.b16 %v5826
        %v6019 = vunpack.c.h.b16 %v5826
        %v6020 = vunpack.c.l.b16 %v5827
        %v6021 = vunpack.c.h.b16 %v5827
        %v6022 = vunpack.c.l.b16 %v5828
        %v6023 = vunpack.c.h.b16 %v5828
        %v6024 = vunpack.c.l.b16 %v5829
        %v6025 = vunpack.c.h.b16 %v5829
        %v6026 = vunpack.c.l.b16 %v5830
        %v6027 = vunpack.c.h.b16 %v5830
        %v6028 = vunpack.c.l.b16 %v5831
        %v6029 = vunpack.c.h.b16 %v5831
        %v6030 = vpack.c.b16 %v5904, %v5902
        %v6031 = vpack.c.b16 %v5905, %v5903
        %v6032 = vpack.c.b16 %v5908, %v5906
        %v6033 = vpack.c.b16 %v5909, %v5907
        %v6034 = vpack.c.b16 %v5912, %v5910
        %v6035 = vpack.c.b16 %v5913, %v5911
        %v6036 = vpack.c.b16 %v5916, %v5914
        %v6037 = vpack.c.b16 %v5917, %v5915
        %v6038 = vpack.c.b16 %v5920, %v5918
        %v6039 = vpack.c.b16 %v5921, %v5919
        %v6040 = vpack.c.b16 %v5924, %v5922
        %v6041 = vpack.c.b16 %v5925, %v5923
        %v6042 = vpack.c.b16 %v5928, %v5926
        %v6043 = vpack.c.b16 %v5929, %v5927
        %v6044 = vpack.c.b16 %v5932, %v5930
        %v6045 = vpack.c.b16 %v5933, %v5931
        %v6046 = vpack.c.b16 %v5936, %v5934
        %v6047 = vpack.c.b16 %v5937, %v5935
        %v6048 = vpack.c.b16 %v5940, %v5938
        %v6049 = vpack.c.b16 %v5941, %v5939
        %v6050 = vpack.c.b16 %v5944, %v5942
        %v6051 = vpack.c.b16 %v5945, %v5943
        %v6052 = vpack.c.b16 %v5948, %v5946
        %v6053 = vpack.c.b16 %v5949, %v5947
        %v6054 = vpack.c.b16 %v5952, %v5950
        %v6055 = vpack.c.b16 %v5953, %v5951
        %v6056 = vpack.c.b16 %v5956, %v5954
        %v6057 = vpack.c.b16 %v5957, %v5955
        %v6058 = vpack.c.b16 %v5960, %v5958
        %v6059 = vpack.c.b16 %v5961, %v5959
        %v6060 = vpack.c.b16 %v5964, %v5962
        %v6061 = vpack.c.b16 %v5965, %v5963
        %v6062 = vpack.c.b16 %v5968, %v5966
        %v6063 = vpack.c.b16 %v5969, %v5967
        %v6064 = vpack.c.b16 %v5972, %v5970
        %v6065 = vpack.c.b16 %v5973, %v5971
        %v6066 = vpack.c.b16 %v5976, %v5974
        %v6067 = vpack.c.b16 %v5977, %v5975
        %v6068 = vpack.c.b16 %v5980, %v5978
        %v6069 = vpack.c.b16 %v5981, %v5979
        %v6070 = vpack.c.b16 %v5984, %v5982
        %v6071 = vpack.c.b16 %v5985, %v5983
        %v6072 = vpack.c.b16 %v5988, %v5986
        %v6073 = vpack.c.b16 %v5989, %v5987
        %v6074 = vpack.c.b16 %v5992, %v5990
        %v6075 = vpack.c.b16 %v5993, %v5991
        %v6076 = vpack.c.b16 %v5996, %v5994
        %v6077 = vpack.c.b16 %v5997, %v5995
        %v6078 = vpack.c.b16 %v6000, %v5998
        %v6079 = vpack.c.b16 %v6001, %v5999
        %v6080 = vpack.c.b16 %v6004, %v6002
        %v6081 = vpack.c.b16 %v6005, %v6003
        %v6082 = vpack.c.b16 %v6008, %v6006
        %v6083 = vpack.c.b16 %v6009, %v6007
        %v6084 = vpack.c.b16 %v6012, %v6010
        %v6085 = vpack.c.b16 %v6013, %v6011
        %v6086 = vpack.c.b16 %v6016, %v6014
        %v6087 = vpack.c.b16 %v6017, %v6015
        %v6088 = vpack.c.b16 %v6020, %v6018
        %v6089 = vpack.c.b16 %v6021, %v6019
        %v6090 = vpack.c.b16 %v6024, %v6022
        %v6091 = vpack.c.b16 %v6025, %v6023
        %v6092 = vpack.c.b16 %v6028, %v6026
        %v6093 = vpack.c.b16 %v6029, %v6027
        %6158 = vmatpush.bf16.msra.mxu0 %v6044
        %6159 = vmatpush.bf16.msra.mxu0 %v6042
        %6160 = vmatpush.bf16.msra.mxu0 %v6040
        %6161 = vmatpush.bf16.msra.mxu0 %v6038
        %6162 = vmatpush.bf16.msra.mxu0 %v6036
        %6163 = vmatpush.bf16.msra.mxu0 %v6034
        %6164 = vmatpush.bf16.msra.mxu0 %v6032
        %6165 = vmatpush.bf16.msra.mxu0 %v6030
        %6166 = vmatmul.bf16.gmra.mxu0 %v5764
        %v6167 = vpop.f32.mrf.mxu0
        %v6168 = vadd.f32 %v5834, %v6167
        %v6169 = vpop.f32.mrf.mxu0
        %6170 = vdwg.mxu0
        %6171 = vmatpush.bf16.msra.mxu0 %v6060
        %6172 = vmatpush.bf16.msra.mxu0 %v6058
        %6173 = vmatpush.bf16.msra.mxu0 %v6056
        %6174 = vmatpush.bf16.msra.mxu0 %v6054
        %6175 = vmatpush.bf16.msra.mxu0 %v6052
        %6176 = vmatpush.bf16.msra.mxu0 %v6050
        %6177 = vmatpush.bf16.msra.mxu0 %v6048
        %6178 = vmatpush.bf16.msra.mxu0 %v6046
        %6179 = vmatmul.bf16.gmra.mxu0 %v5765
        %v6180 = vpop.f32.mrf.mxu0
        %v6181 = vadd.f32 %v6168, %v6180
        %v6182 = vpop.f32.mrf.mxu0
        %6183 = vdwg.mxu0
        %6184 = vmatpush.bf16.msra.mxu0 %v6076
        %6185 = vmatpush.bf16.msra.mxu0 %v6074
        %6186 = vmatpush.bf16.msra.mxu0 %v6072
        %6187 = vmatpush.bf16.msra.mxu0 %v6070
        %6188 = vmatpush.bf16.msra.mxu0 %v6068
        %6189 = vmatpush.bf16.msra.mxu0 %v6066
        %6190 = vmatpush.bf16.msra.mxu0 %v6064
        %6191 = vmatpush.bf16.msra.mxu0 %v6062
        %6192 = vmatmul.bf16.gmra.mxu0 %v5766
        %v6193 = vpop.f32.mrf.mxu0
        %v6194 = vadd.f32 %v6181, %v6193
        %v6195 = vpop.f32.mrf.mxu0
        %6196 = vdwg.mxu0
        %6197 = vmatpush.bf16.msra.mxu0 %v6092
        %6198 = vmatpush.bf16.msra.mxu0 %v6090
        %6199 = vmatpush.bf16.msra.mxu0 %v6088
        %6200 = vmatpush.bf16.msra.mxu0 %v6086
        %6201 = vmatpush.bf16.msra.mxu0 %v6084
        %6202 = vmatpush.bf16.msra.mxu0 %v6082
        %6203 = vmatpush.bf16.msra.mxu0 %v6080
        %6204 = vmatpush.bf16.msra.mxu0 %v6078
        %6205 = vmatmul.bf16.gmra.mxu0 %v5767
        %v6206 = vpop.f32.mrf.mxu0
        %v6207 = vadd.f32 %v6194, %v6206
        %v6208 = vpop.f32.mrf.mxu0
        %6209 = vdwg.mxu0
        %6210 = vmatpush.bf16.msra.mxu0 %v6045
        %6211 = vmatpush.bf16.msra.mxu0 %v6043
        %6212 = vmatpush.bf16.msra.mxu0 %v6041
        %6213 = vmatpush.bf16.msra.mxu0 %v6039
        %6214 = vmatpush.bf16.msra.mxu0 %v6037
        %6215 = vmatpush.bf16.msra.mxu0 %v6035
        %6216 = vmatpush.bf16.msra.mxu0 %v6033
        %6217 = vmatpush.bf16.msra.mxu0 %v6031
        %6218 = vmatmul.bf16.gmra.mxu0 %v5764
        %v6219 = vpop.f32.mrf.mxu0
        %v6220 = vadd.f32 %v5835, %v6219
        %v6221 = vpop.f32.mrf.mxu0
        %6222 = vdwg.mxu0
        %6223 = vmatpush.bf16.msra.mxu0 %v6061
        %6224 = vmatpush.bf16.msra.mxu0 %v6059
        %6225 = vmatpush.bf16.msra.mxu0 %v6057
        %6226 = vmatpush.bf16.msra.mxu0 %v6055
        %6227 = vmatpush.bf16.msra.mxu0 %v6053
        %6228 = vmatpush.bf16.msra.mxu0 %v6051
        %6229 = vmatpush.bf16.msra.mxu0 %v6049
        %6230 = vmatpush.bf16.msra.mxu0 %v6047
        %6231 = vmatmul.bf16.gmra.mxu0 %v5765
        %v6232 = vpop.f32.mrf.mxu0
        %v6233 = vadd.f32 %v6220, %v6232
        %v6234 = vpop.f32.mrf.mxu0
        %6235 = vdwg.mxu0
        %6236 = vmatpush.bf16.msra.mxu0 %v6077
        %6237 = vmatpush.bf16.msra.mxu0 %v6075
        %6238 = vmatpush.bf16.msra.mxu0 %v6073
        %6239 = vmatpush.bf16.msra.mxu0 %v6071
        %6240 = vmatpush.bf16.msra.mxu0 %v6069
        %6241 = vmatpush.bf16.msra.mxu0 %v6067
        %6242 = vmatpush.bf16.msra.mxu0 %v6065
        %6243 = vmatpush.bf16.msra.mxu0 %v6063
        %6244 = vmatmul.bf16.gmra.mxu0 %v5766
        %v6245 = vpop.f32.mrf.mxu0
        %v6246 = vadd.f32 %v6233, %v6245
        %v6247 = vpop.f32.mrf.mxu0
        %6248 = vdwg.mxu0
        %6249 = vmatpush.bf16.msra.mxu0 %v6093
        %6250 = vmatpush.bf16.msra.mxu0 %v6091
        %6251 = vmatpush.bf16.msra.mxu0 %v6089
        %6252 = vmatpush.bf16.msra.mxu0 %v6087
        %6253 = vmatpush.bf16.msra.mxu0 %v6085
        %6254 = vmatpush.bf16.msra.mxu0 %v6083
        %6255 = vmatpush.bf16.msra.mxu0 %v6081
        %6256 = vmatpush.bf16.msra.mxu0 %v6079
        %6257 = vmatmul.bf16.gmra.mxu0 %v5767
        %v6258 = vpop.f32.mrf.mxu0
        %v6259 = vadd.f32 %v6246, %v6258
        %v6260 = vpop.f32.mrf.mxu0
        %6261 = vdwg.mxu0
        %vm6262 = vcmp.ge.f32.partialorder %v6207, 0.0
        %vm6263 = vcmp.ge.f32.partialorder %v6259, 0.0
        %v6264 = vmul.f32 %v6207, 0.01
        %v6265 = vmul.f32 %v6259, 0.01
        %v6266 = vsel %vm6262, %v6207, %v6264
        %v6267 = vsel %vm6263, %v6259, %v6265
        %v6268 = vrot.slane %v6266, 4
        %v6269 = vrot.slane %v6267, 4
        %v6270 = vsub.f32 %v6266, %v6268
        %v6271 = vsub.f32 %v6267, %v6269
        %v6272 = vand.u32 2147483647, %v6270
        %v6273 = vand.u32 2147483647, %v6271
        %v6274 = vadd.f32 %v6272, %v6273
        %6275 = vadd.xlane.f32.xlu0 %v6274
        %v6276 = vpop.xlane.xlu0 %6275
        %v6277 = vlaneseq
        %v6278 = vshrl.u32 %v6277, 7
        %v6279 = vlaneseq
        %v6280 = vand.u32 %v6279, 127
        %vm6281 = vcmp.eq.s32.totalorder %v6278, %v6280
        %v6282 = vsel %vm6281, %v6276, 0.0
        %vm6283 = vcmask 31744
        %v6284 = vsel %vm6283, %v6282, 0.0
        %v6285 = vrot.slane %v6284, 4
        %v6286 = vadd.f32 %v6284, %v6285
        %v6287 = vrot.slane %v6286, 2
        %v6288 = vadd.f32 %v6286, %v6287
        %v6289 = vrot.slane %v6288, 1
        %v6290 = vadd.f32 %v6288, %v6289
        %s6291 = sld [smem:[#allocation2]]
        %v6292 = vstv %s6291
        %v6293 = vmul.f32 %v6290, %v6292
        %s6294 = sld [smem:[#allocation2 + $0x1]]
        %v6295 = vstv %s6294
        %v6296 = vadd.f32 %v6293, %v6295
        %v6297 = vxor.u32 %v6296, 2147483648
        %v6298 = vmul.f32 %v6297, 1.442695
        %v6299 = vpow.pop %v6298
        %v6300 = vadd.f32 %v6299, 1.0
        %v6301 = vrcp.pop %v6300
        %v6302 = vmul.f32 %v6300, %v6301
        %v6303 = vsub.f32 1.0, %v6302
        %v6304 = vmul.f32 %v6301, %v6303
        %v6305 = vadd.f32 %v6301, %v6304
        %vm6306 = vweird.f32 %v6300
        %vm6307 = vweird.f32 %v6301
        %vm6308 = vmor %vm6306, %vm6307
        %v6309 = vsel %vm6308, %v6301, %v6305
        %v6310 = vand.u32 2147483647, %v6300
        %vm6311 = vcmp.eq.f32.partialorder %v6310, 8.507059e+37
        %v6312 = vand.u32 %v6300, 2147483648
        %v6313 = vor.u32 1.1754944e-38, %v6312
        %v6314 = vsel %vm6311, %v6313, %v6309
        %v6315 = vmul.f32 1.0, %v6314
        %v6316 = vld [vmem:[%s6] sm:$0xff]
        %v6317 = vld [vmem:[%s6 + $0x8] sm:$0xff]
        %v6318 = vld [vmem:[%s6 + $0x10] sm:$0xff]
        %v6319 = vld [vmem:[%s6 + $0x18] sm:$0xff]
        %v6320 = vld [vmem:[%s6 + $0x20] sm:$0xff]
        %v6321 = vld [vmem:[%s6 + $0x28] sm:$0xff]
        %v6322 = vld [vmem:[%s6 + $0x30] sm:$0xff]
        %v6323 = vld [vmem:[%s6 + $0x38] sm:$0xff]
        %v6324 = vld [vmem:[%s6 + $0x40] sm:$0xff]
        %v6325 = vld [vmem:[%s6 + $0x48] sm:$0xff]
        %v6326 = vld [vmem:[%s6 + $0x50] sm:$0xff]
        %v6327 = vld [vmem:[%s6 + $0x58] sm:$0xff]
        %v6328 = vld [vmem:[%s6 + $0x60] sm:$0xff]
        %v6329 = vld [vmem:[%s6 + $0x68] sm:$0xff]
        %v6330 = vld [vmem:[%s6 + $0x70] sm:$0xff]
        %v6331 = vld [vmem:[%s6 + $0x78] sm:$0xff]
        %v6332 = vld [vmem:[%s6 + $0x80] sm:$0xff]
        %v6333 = vld [vmem:[%s6 + $0x88] sm:$0xff]
        %v6334 = vld [vmem:[%s6 + $0x90] sm:$0xff]
        %v6335 = vld [vmem:[%s6 + $0x98] sm:$0xff]
        %v6336 = vld [vmem:[%s6 + $0xa0] sm:$0xff]
        %v6337 = vld [vmem:[%s6 + $0xa8] sm:$0xff]
        %v6338 = vld [vmem:[%s6 + $0xb0] sm:$0xff]
        %v6339 = vld [vmem:[%s6 + $0xb8] sm:$0xff]
        %v6340 = vld [vmem:[%s6 + $0xc0] sm:$0xff]
        %v6341 = vld [vmem:[%s6 + $0xc8] sm:$0xff]
        %v6342 = vld [vmem:[%s6 + $0xd0] sm:$0xff]
        %v6343 = vld [vmem:[%s6 + $0xd8] sm:$0xff]
        %v6344 = vld [vmem:[%s6 + $0xe0] sm:$0xff]
        %v6345 = vld [vmem:[%s6 + $0xe8] sm:$0xff]
        %v6346 = vld [vmem:[%s6 + $0xf0] sm:$0xff]
        %v6347 = vld [vmem:[%s6 + $0xf8] sm:$0xff]
        %v6348 = vld [vmem:[%s6 + $0x100] sm:$0xff]
        %v6349 = vld [vmem:[%s6 + $0x108] sm:$0xff]
        %v6350 = vld [vmem:[%s6 + $0x110] sm:$0xff]
        %v6351 = vld [vmem:[%s6 + $0x118] sm:$0xff]
        %v6352 = vld [vmem:[%s6 + $0x120] sm:$0xff]
        %v6353 = vld [vmem:[%s6 + $0x128] sm:$0xff]
        %v6354 = vld [vmem:[%s6 + $0x130] sm:$0xff]
        %v6355 = vld [vmem:[%s6 + $0x138] sm:$0xff]
        %6357 = vset.pattern.permute.xlu0 0
        %6358 = vperm.xlu0 %6357, %v6316
        %v6359 = vpop.permute.xlu0 %6358
        %6362 = vset.pattern.permute.xlu0 0
        %6363 = vperm.xlu0 %6362, %v6317
        %v6364 = vpop.permute.xlu0 %6363
        %6367 = vset.pattern.permute.xlu0 0
        %6368 = vperm.xlu0 %6367, %v6318
        %v6369 = vpop.permute.xlu0 %6368
        %6372 = vset.pattern.permute.xlu0 0
        %6373 = vperm.xlu0 %6372, %v6319
        %v6374 = vpop.permute.xlu0 %6373
        %6377 = vset.pattern.permute.xlu0 0
        %6378 = vperm.xlu0 %6377, %v6320
        %v6379 = vpop.permute.xlu0 %6378
        %6382 = vset.pattern.permute.xlu0 0
        %6383 = vperm.xlu0 %6382, %v6321
        %v6384 = vpop.permute.xlu0 %6383
        %6387 = vset.pattern.permute.xlu0 0
        %6388 = vperm.xlu0 %6387, %v6322
        %v6389 = vpop.permute.xlu0 %6388
        %6392 = vset.pattern.permute.xlu0 0
        %6393 = vperm.xlu0 %6392, %v6323
        %v6394 = vpop.permute.xlu0 %6393
        %v6396 = vmul.f32 %v6359, %v6315
        %v6397 = vmul.f32 %v6364, %v6315
        %v6398 = vmul.f32 %v6369, %v6315
        %v6399 = vmul.f32 %v6374, %v6315
        %v6400 = vmul.f32 %v6379, %v6315
        %v6401 = vmul.f32 %v6384, %v6315
        %v6402 = vmul.f32 %v6389, %v6315
        %v6403 = vmul.f32 %v6394, %v6315
        %6405 = vset.pattern.permute.xlu0 0
        %6406 = vperm.xlu0 %6405, %v6324
        %v6407 = vpop.permute.xlu0 %6406
        %6410 = vset.pattern.permute.xlu0 0
        %6411 = vperm.xlu0 %6410, %v6325
        %v6412 = vpop.permute.xlu0 %6411
        %6415 = vset.pattern.permute.xlu0 0
        %6416 = vperm.xlu0 %6415, %v6326
        %v6417 = vpop.permute.xlu0 %6416
        %6420 = vset.pattern.permute.xlu0 0
        %6421 = vperm.xlu0 %6420, %v6327
        %v6422 = vpop.permute.xlu0 %6421
        %6425 = vset.pattern.permute.xlu0 0
        %6426 = vperm.xlu0 %6425, %v6328
        %v6427 = vpop.permute.xlu0 %6426
        %6430 = vset.pattern.permute.xlu0 0
        %6431 = vperm.xlu0 %6430, %v6329
        %v6432 = vpop.permute.xlu0 %6431
        %6435 = vset.pattern.permute.xlu0 0
        %6436 = vperm.xlu0 %6435, %v6330
        %v6437 = vpop.permute.xlu0 %6436
        %6440 = vset.pattern.permute.xlu0 0
        %6441 = vperm.xlu0 %6440, %v6331
        %v6442 = vpop.permute.xlu0 %6441
        %v6444 = vadd.f32 %v6396, %v6407
        %v6445 = vadd.f32 %v6397, %v6412
        %v6446 = vadd.f32 %v6398, %v6417
        %v6447 = vadd.f32 %v6399, %v6422
        %v6448 = vadd.f32 %v6400, %v6427
        %v6449 = vadd.f32 %v6401, %v6432
        %v6450 = vadd.f32 %v6402, %v6437
        %v6451 = vadd.f32 %v6403, %v6442
        %v6452 = vtanh.pop %v6444
        %v6453 = vtanh.pop %v6445
        %v6454 = vtanh.pop %v6446
        %v6455 = vtanh.pop %v6447
        %v6456 = vtanh.pop %v6448
        %v6457 = vtanh.pop %v6449
        %v6458 = vtanh.pop %v6450
        %v6459 = vtanh.pop %v6451
        %6461 = vset.pattern.permute.xlu0 0
        %6462 = vperm.xlu0 %6461, %v6332
        %v6463 = vpop.permute.xlu0 %6462
        %6466 = vset.pattern.permute.xlu0 0
        %6467 = vperm.xlu0 %6466, %v6333
        %v6468 = vpop.permute.xlu0 %6467
        %6471 = vset.pattern.permute.xlu0 0
        %6472 = vperm.xlu0 %6471, %v6334
        %v6473 = vpop.permute.xlu0 %6472
        %6476 = vset.pattern.permute.xlu0 0
        %6477 = vperm.xlu0 %6476, %v6335
        %v6478 = vpop.permute.xlu0 %6477
        %6481 = vset.pattern.permute.xlu0 0
        %6482 = vperm.xlu0 %6481, %v6336
        %v6483 = vpop.permute.xlu0 %6482
        %6486 = vset.pattern.permute.xlu0 0
        %6487 = vperm.xlu0 %6486, %v6337
        %v6488 = vpop.permute.xlu0 %6487
        %6491 = vset.pattern.permute.xlu0 0
        %6492 = vperm.xlu0 %6491, %v6338
        %v6493 = vpop.permute.xlu0 %6492
        %6496 = vset.pattern.permute.xlu0 0
        %6497 = vperm.xlu0 %6496, %v6339
        %v6498 = vpop.permute.xlu0 %6497
        %v6500 = vmul.f32 %v6463, %v6315
        %v6501 = vmul.f32 %v6468, %v6315
        %v6502 = vmul.f32 %v6473, %v6315
        %v6503 = vmul.f32 %v6478, %v6315
        %v6504 = vmul.f32 %v6483, %v6315
        %v6505 = vmul.f32 %v6488, %v6315
        %v6506 = vmul.f32 %v6493, %v6315
        %v6507 = vmul.f32 %v6498, %v6315
        %6509 = vset.pattern.permute.xlu0 0
        %6510 = vperm.xlu0 %6509, %v6340
        %v6511 = vpop.permute.xlu0 %6510
        %6514 = vset.pattern.permute.xlu0 0
        %6515 = vperm.xlu0 %6514, %v6341
        %v6516 = vpop.permute.xlu0 %6515
        %6519 = vset.pattern.permute.xlu0 0
        %6520 = vperm.xlu0 %6519, %v6342
        %v6521 = vpop.permute.xlu0 %6520
        %6524 = vset.pattern.permute.xlu0 0
        %6525 = vperm.xlu0 %6524, %v6343
        %v6526 = vpop.permute.xlu0 %6525
        %6529 = vset.pattern.permute.xlu0 0
        %6530 = vperm.xlu0 %6529, %v6344
        %v6531 = vpop.permute.xlu0 %6530
        %6534 = vset.pattern.permute.xlu0 0
        %6535 = vperm.xlu0 %6534, %v6345
        %v6536 = vpop.permute.xlu0 %6535
        %6539 = vset.pattern.permute.xlu0 0
        %6540 = vperm.xlu0 %6539, %v6346
        %v6541 = vpop.permute.xlu0 %6540
        %6544 = vset.pattern.permute.xlu0 0
        %6545 = vperm.xlu0 %6544, %v6347
        %v6546 = vpop.permute.xlu0 %6545
        %v6548 = vadd.f32 %v6500, %v6511
        %v6549 = vadd.f32 %v6501, %v6516
        %v6550 = vadd.f32 %v6502, %v6521
        %v6551 = vadd.f32 %v6503, %v6526
        %v6552 = vadd.f32 %v6504, %v6531
        %v6553 = vadd.f32 %v6505, %v6536
        %v6554 = vadd.f32 %v6506, %v6541
        %v6555 = vadd.f32 %v6507, %v6546
        %v6556 = vxor.u32 %v6548, 2147483648
        %v6557 = vxor.u32 %v6549, 2147483648
        %v6558 = vxor.u32 %v6550, 2147483648
        %v6559 = vxor.u32 %v6551, 2147483648
        %v6560 = vxor.u32 %v6552, 2147483648
        %v6561 = vxor.u32 %v6553, 2147483648
        %v6562 = vxor.u32 %v6554, 2147483648
        %v6563 = vxor.u32 %v6555, 2147483648
        %v6564 = vmul.f32 %v6556, 1.442695
        %v6565 = vpow.pop %v6564
        %v6566 = vmul.f32 %v6557, 1.442695
        %v6567 = vpow.pop %v6566
        %v6568 = vmul.f32 %v6558, 1.442695
        %v6569 = vpow.pop %v6568
        %v6570 = vmul.f32 %v6559, 1.442695
        %v6571 = vpow.pop %v6570
        %v6572 = vmul.f32 %v6560, 1.442695
        %v6573 = vpow.pop %v6572
        %v6574 = vmul.f32 %v6561, 1.442695
        %v6575 = vpow.pop %v6574
        %v6576 = vmul.f32 %v6562, 1.442695
        %v6577 = vpow.pop %v6576
        %v6578 = vmul.f32 %v6563, 1.442695
        %v6579 = vpow.pop %v6578
        %v6580 = vadd.f32 %v6565, 1.0
        %v6581 = vadd.f32 %v6567, 1.0
        %v6582 = vadd.f32 %v6569, 1.0
        %v6583 = vadd.f32 %v6571, 1.0
        %v6584 = vadd.f32 %v6573, 1.0
        %v6585 = vadd.f32 %v6575, 1.0
        %v6586 = vadd.f32 %v6577, 1.0
        %v6587 = vadd.f32 %v6579, 1.0
        %v6588 = vrcp.pop %v6580
        %v6589 = vmul.f32 %v6580, %v6588
        %v6590 = vsub.f32 1.0, %v6589
        %v6591 = vmul.f32 %v6588, %v6590
        %v6592 = vadd.f32 %v6588, %v6591
        %vm6593 = vweird.f32 %v6580
        %vm6594 = vweird.f32 %v6588
        %vm6595 = vmor %vm6593, %vm6594
        %v6596 = vsel %vm6595, %v6588, %v6592
        %v6597 = vand.u32 2147483647, %v6580
        %vm6598 = vcmp.eq.f32.partialorder %v6597, 8.507059e+37
        %v6599 = vand.u32 %v6580, 2147483648
        %v6600 = vor.u32 1.1754944e-38, %v6599
        %v6601 = vsel %vm6598, %v6600, %v6596
        %v6602 = vmul.f32 1.0, %v6601
        %v6603 = vrcp.pop %v6581
        %v6604 = vmul.f32 %v6581, %v6603
        %v6605 = vsub.f32 1.0, %v6604
        %v6606 = vmul.f32 %v6603, %v6605
        %v6607 = vadd.f32 %v6603, %v6606
        %vm6608 = vweird.f32 %v6581
        %vm6609 = vweird.f32 %v6603
        %vm6610 = vmor %vm6608, %vm6609
        %v6611 = vsel %vm6610, %v6603, %v6607
        %v6612 = vand.u32 2147483647, %v6581
        %vm6613 = vcmp.eq.f32.partialorder %v6612, 8.507059e+37
        %v6614 = vand.u32 %v6581, 2147483648
        %v6615 = vor.u32 1.1754944e-38, %v6614
        %v6616 = vsel %vm6613, %v6615, %v6611
        %v6617 = vmul.f32 1.0, %v6616
        %v6618 = vrcp.pop %v6582
        %v6619 = vmul.f32 %v6582, %v6618
        %v6620 = vsub.f32 1.0, %v6619
        %v6621 = vmul.f32 %v6618, %v6620
        %v6622 = vadd.f32 %v6618, %v6621
        %vm6623 = vweird.f32 %v6582
        %vm6624 = vweird.f32 %v6618
        %vm6625 = vmor %vm6623, %vm6624
        %v6626 = vsel %vm6625, %v6618, %v6622
        %v6627 = vand.u32 2147483647, %v6582
        %vm6628 = vcmp.eq.f32.partialorder %v6627, 8.507059e+37
        %v6629 = vand.u32 %v6582, 2147483648
        %v6630 = vor.u32 1.1754944e-38, %v6629
        %v6631 = vsel %vm6628, %v6630, %v6626
        %v6632 = vmul.f32 1.0, %v6631
        %v6633 = vrcp.pop %v6583
        %v6634 = vmul.f32 %v6583, %v6633
        %v6635 = vsub.f32 1.0, %v6634
        %v6636 = vmul.f32 %v6633, %v6635
        %v6637 = vadd.f32 %v6633, %v6636
        %vm6638 = vweird.f32 %v6583
        %vm6639 = vweird.f32 %v6633
        %vm6640 = vmor %vm6638, %vm6639
        %v6641 = vsel %vm6640, %v6633, %v6637
        %v6642 = vand.u32 2147483647, %v6583
        %vm6643 = vcmp.eq.f32.partialorder %v6642, 8.507059e+37
        %v6644 = vand.u32 %v6583, 2147483648
        %v6645 = vor.u32 1.1754944e-38, %v6644
        %v6646 = vsel %vm6643, %v6645, %v6641
        %v6647 = vmul.f32 1.0, %v6646
        %v6648 = vrcp.pop %v6584
        %v6649 = vmul.f32 %v6584, %v6648
        %v6650 = vsub.f32 1.0, %v6649
        %v6651 = vmul.f32 %v6648, %v6650
        %v6652 = vadd.f32 %v6648, %v6651
        %vm6653 = vweird.f32 %v6584
        %vm6654 = vweird.f32 %v6648
        %vm6655 = vmor %vm6653, %vm6654
        %v6656 = vsel %vm6655, %v6648, %v6652
        %v6657 = vand.u32 2147483647, %v6584
        %vm6658 = vcmp.eq.f32.partialorder %v6657, 8.507059e+37
        %v6659 = vand.u32 %v6584, 2147483648
        %v6660 = vor.u32 1.1754944e-38, %v6659
        %v6661 = vsel %vm6658, %v6660, %v6656
        %v6662 = vmul.f32 1.0, %v6661
        %v6663 = vrcp.pop %v6585
        %v6664 = vmul.f32 %v6585, %v6663
        %v6665 = vsub.f32 1.0, %v6664
        %v6666 = vmul.f32 %v6663, %v6665
        %v6667 = vadd.f32 %v6663, %v6666
        %vm6668 = vweird.f32 %v6585
        %vm6669 = vweird.f32 %v6663
        %vm6670 = vmor %vm6668, %vm6669
        %v6671 = vsel %vm6670, %v6663, %v6667
        %v6672 = vand.u32 2147483647, %v6585
        %vm6673 = vcmp.eq.f32.partialorder %v6672, 8.507059e+37
        %v6674 = vand.u32 %v6585, 2147483648
        %v6675 = vor.u32 1.1754944e-38, %v6674
        %v6676 = vsel %vm6673, %v6675, %v6671
        %v6677 = vmul.f32 1.0, %v6676
        %v6678 = vrcp.pop %v6586
        %v6679 = vmul.f32 %v6586, %v6678
        %v6680 = vsub.f32 1.0, %v6679
        %v6681 = vmul.f32 %v6678, %v6680
        %v6682 = vadd.f32 %v6678, %v6681
        %vm6683 = vweird.f32 %v6586
        %vm6684 = vweird.f32 %v6678
        %vm6685 = vmor %vm6683, %vm6684
        %v6686 = vsel %vm6685, %v6678, %v6682
        %v6687 = vand.u32 2147483647, %v6586
        %vm6688 = vcmp.eq.f32.partialorder %v6687, 8.507059e+37
        %v6689 = vand.u32 %v6586, 2147483648
        %v6690 = vor.u32 1.1754944e-38, %v6689
        %v6691 = vsel %vm6688, %v6690, %v6686
        %v6692 = vmul.f32 1.0, %v6691
        %v6693 = vrcp.pop %v6587
        %v6694 = vmul.f32 %v6587, %v6693
        %v6695 = vsub.f32 1.0, %v6694
        %v6696 = vmul.f32 %v6693, %v6695
        %v6697 = vadd.f32 %v6693, %v6696
        %vm6698 = vweird.f32 %v6587
        %vm6699 = vweird.f32 %v6693
        %vm6700 = vmor %vm6698, %vm6699
        %v6701 = vsel %vm6700, %v6693, %v6697
        %v6702 = vand.u32 2147483647, %v6587
        %vm6703 = vcmp.eq.f32.partialorder %v6702, 8.507059e+37
        %v6704 = vand.u32 %v6587, 2147483648
        %v6705 = vor.u32 1.1754944e-38, %v6704
        %v6706 = vsel %vm6703, %v6705, %v6701
        %v6707 = vmul.f32 1.0, %v6706
        %v6708 = vmul.f32 %v6452, %v6602
        %v6709 = vmul.f32 %v6453, %v6617
        %v6710 = vmul.f32 %v6454, %v6632
        %v6711 = vmul.f32 %v6455, %v6647
        %v6712 = vmul.f32 %v6456, %v6662
        %v6713 = vmul.f32 %v6457, %v6677
        %v6714 = vmul.f32 %v6458, %v6692
        %v6715 = vmul.f32 %v6459, %v6707
        %6717 = vset.pattern.permute.xlu0 0
        %6718 = vperm.xlu0 %6717, %v6348
        %v6719 = vpop.permute.xlu0 %6718
        %6722 = vset.pattern.permute.xlu0 0
        %6723 = vperm.xlu0 %6722, %v6349
        %v6724 = vpop.permute.xlu0 %6723
        %6727 = vset.pattern.permute.xlu0 0
        %6728 = vperm.xlu0 %6727, %v6350
        %v6729 = vpop.permute.xlu0 %6728
        %6732 = vset.pattern.permute.xlu0 0
        %6733 = vperm.xlu0 %6732, %v6351
        %v6734 = vpop.permute.xlu0 %6733
        %6737 = vset.pattern.permute.xlu0 0
        %6738 = vperm.xlu0 %6737, %v6352
        %v6739 = vpop.permute.xlu0 %6738
        %6742 = vset.pattern.permute.xlu0 0
        %6743 = vperm.xlu0 %6742, %v6353
        %v6744 = vpop.permute.xlu0 %6743
        %6747 = vset.pattern.permute.xlu0 0
        %6748 = vperm.xlu0 %6747, %v6354
        %v6749 = vpop.permute.xlu0 %6748
        %6752 = vset.pattern.permute.xlu0 0
        %6753 = vperm.xlu0 %6752, %v6355
        %v6754 = vpop.permute.xlu0 %6753
        %v6756 = vmul.f32 %v6708, %v6719
        %v6757 = vmul.f32 %v6709, %v6724
        %v6758 = vmul.f32 %v6710, %v6729
        %v6759 = vmul.f32 %v6711, %v6734
        %v6760 = vmul.f32 %v6712, %v6739
        %v6761 = vmul.f32 %v6713, %v6744
        %v6762 = vmul.f32 %v6714, %v6749
        %v6763 = vmul.f32 %v6715, %v6754
        %v6764 = vsel %vm6283, %v6756, 0.0
        %v6765 = vsel %vm6283, %v6757, 0.0
        %v6766 = vadd.f32 %v6764, %v6765
        %v6767 = vsel %vm6283, %v6758, 0.0
        %v6768 = vadd.f32 %v6766, %v6767
        %v6769 = vsel %vm6283, %v6759, 0.0
        %v6770 = vadd.f32 %v6768, %v6769
        %v6771 = vsel %vm6283, %v6760, 0.0
        %v6772 = vadd.f32 %v6770, %v6771
        %v6773 = vsel %vm6283, %v6761, 0.0
        %v6774 = vadd.f32 %v6772, %v6773
        %v6775 = vsel %vm6283, %v6762, 0.0
        %v6776 = vadd.f32 %v6774, %v6775
        %v6777 = vsel %vm6283, %v6763, 0.0
        %v6778 = vadd.f32 %v6776, %v6777
        %v6779 = vrot.slane %v6778, 4
        %v6780 = vadd.f32 %v6778, %v6779
        %v6781 = vrot.slane %v6780, 2
        %v6782 = vadd.f32 %v6780, %v6781
        %v6783 = vrot.slane %v6782, 1
        %v6784 = vadd.f32 %v6782, %v6783
        %s6785 = sld [smem:[#allocation2 + $0x2]]
        %v6786 = vstv %s6785
        %v6787 = vadd.f32 %v6784, %v6786
        %v6788 = vsel %vm6283, %v6787, -inf
        %6789 = vmax.xlane.f32.xlu0 %v6788
        %v6790 = vpop.xlane.xlu0 %6789
        %v6791 = vsub.f32 %v6787, %v6790
        %v6792 = vmul.f32 %v6791, 1.442695
        %v6793 = vpow.pop %v6792
        %v6794 = vsel %vm6283, %v6793, 0.0
        %6795 = vadd.xlane.f32.xlu0 %v6794
        %v6796 = vpop.xlane.xlu0 %6795
        %v6797 = vrcp.pop %v6796
        %v6798 = vmul.f32 %v6796, %v6797
        %v6799 = vsub.f32 1.0, %v6798
        %v6800 = vmul.f32 %v6797, %v6799
        %v6801 = vadd.f32 %v6797, %v6800
        %vm6802 = vweird.f32 %v6796
        %vm6803 = vweird.f32 %v6797
        %vm6804 = vmor %vm6802, %vm6803
        %v6805 = vsel %vm6804, %v6797, %v6801
        %v6806 = vand.u32 2147483647, %v6796
        %vm6807 = vcmp.eq.f32.partialorder %v6806, 8.507059e+37
        %v6808 = vand.u32 %v6796, 2147483648
        %v6809 = vor.u32 1.1754944e-38, %v6808
        %v6810 = vsel %vm6807, %v6809, %v6805
        %v6811 = vmul.f32 %v6793, %v6810
        %v6812 = vmul.f32 %v6811, %v6315
        %v6813 = vsel %vm6283, %v6812, 0.0
        %6814 = vadd.xlane.f32.xlu0 %v6813
        %v6815 = vpop.xlane.xlu0 %6814
        %s6816 = sld [smem:[#allocation2 + $0x3]]
        %v6817 = vstv %s6816
        %v6818 = vmul.f32 %v6815, %v6817
        %s6819 = sld [smem:[#allocation2 + $0x4]]
        %v6820 = vstv %s6819
        %v6821 = vadd.f32 %v6818, %v6820
        %v6822 = vxor.u32 %v6821, 2147483648
        %v6823 = vmul.f32 %v6822, 1.442695
        %v6824 = vpow.pop %v6823
        %v6825 = vadd.f32 %v6824, 1.0
        %v6826 = vrcp.pop %v6825
        %v6827 = vmul.f32 %v6825, %v6826
        %v6828 = vsub.f32 1.0, %v6827
        %v6829 = vmul.f32 %v6826, %v6828
        %v6830 = vadd.f32 %v6826, %v6829
        %vm6831 = vweird.f32 %v6825
        %vm6832 = vweird.f32 %v6826
        %vm6833 = vmor %vm6831, %vm6832
        %v6834 = vsel %vm6833, %v6826, %v6830
        %v6835 = vand.u32 2147483647, %v6825
        %vm6836 = vcmp.eq.f32.partialorder %v6835, 8.507059e+37
        %v6837 = vand.u32 %v6825, 2147483648
        %v6838 = vor.u32 1.1754944e-38, %v6837
        %v6839 = vsel %vm6836, %v6838, %v6834
        %v6840 = vmul.f32 1.0, %v6839
        %vm6841 = vcmask 0
        %6842 = vst.msk [vmem:[%s352] sm:$0x1] %vm6841, %v6840
        %vm6843 = vcmask 24576
        %6844 = vst.msk [vmem:[%s344] sm:$0x1] %vm6843, %v6811
        %p6845 = scmp.lt.s32.totalorder %s25, 3
        %s6846 = scalar_select %p6845, %s25, 3
        %s6847 = scalar_lea.vmem %s8, %s6846
        %s6848 = sand.u32 %s232, 1
        %s6849 = scalar_lea.sflag [#allocation3], %s6848
        %s6850 = sand.u32 %s232, 1
        %s6851 = scalar_lea.vmem [#allocation5], %s6850
        // Predicated region
        $region57: #{gated_attention_forward_batched.1} parent=51 // pred_check
          %p6852 = pneg %p216
        $region58: #{gated_attention_forward_batched.1} parent=51 // pred_check_branch
          %6854 = sbr.rel (%p6852) target = $region60
        $region59: #{gated_attention_forward_batched.1} parent=51 // pred_region
          _
        $region60: #{gated_attention_forward_batched.1} parent=51 // pred_fallthru
          _
        // Predicated region
        $region61: #{gated_attention_forward_batched.1} parent=51 // pred_check
          %p6855 = pneg %p242
        $region62: #{gated_attention_forward_batched.1} parent=51 // pred_check_branch
          %6857 = sbr.rel (%p6855) target = $region64
        $region63: #{gated_attention_forward_batched.1} parent=51 // pred_region
          %6859 = vsyncadd %s6849, 0
          %s6860 = scalar_lea.hbm %s9, %s25
          %s6862 = sshll.u32 %s6851, 4
          %s6863 = int_to_ptr.vmem [resolvable:$true] %s6862
          %s6864 = sshll.u32 %s6860, 4
          %s6865 = int_to_ptr.hbm [resolvable:$true] %s6864
          %6867 = dma.vmem_to_hbm [thread:$0]  %s6863, 16, %s6865, %s6849
        $region64: #{gated_attention_forward_batched.1} parent=51 // pred_fallthru
          _
      $region52: #{gated_attention_forward_batched.1} parent=5 // pred_fallthru
        _
      %p6868 = scmp.le.s32.totalorder 2, %s20
      // Predicated region
      $region65: #{gated_attention_forward_batched.1} parent=5 // pred_check
        %p6869 = pneg %p6868
      $region66: #{gated_attention_forward_batched.1} parent=5 // pred_check_branch
        %6871 = sbr.rel (%p6869) target = $region68
      $region67: #{gated_attention_forward_batched.1} parent=5 // pred_region
        %s6872 = ssub.s32 %s20, 2
        // Predicated region
        $region69: #{gated_attention_forward_batched.1} parent=67 // pred_check
          %p6873 = pneg %p222
        $region70: #{gated_attention_forward_batched.1} parent=67 // pred_check_branch
          %6875 = sbr.rel (%p6873) target = $region72
        $region71: #{gated_attention_forward_batched.1} parent=67 // pred_region
          %p6876 = scmp.lt.s32.totalorder %s26, 3
          %s6877 = scalar_select %p6876, %s26, 3
          %s6878 = scalar_lea.vmem %s8, %s6877
        $region72: #{gated_attention_forward_batched.1} parent=67 // pred_fallthru
          _
        // Predicated region
        $region73: #{gated_attention_forward_batched.1} parent=67 // pred_check
          %p6879 = pneg %p248
        $region74: #{gated_attention_forward_batched.1} parent=67 // pred_check_branch
          %6881 = sbr.rel (%p6879) target = $region76
        $region75: #{gated_attention_forward_batched.1} parent=67 // pred_region
          %s6882 = sand.u32 %s233, 1
          %s6883 = scalar_lea.sflag [#allocation3], %s6882
          %s6884 = sand.u32 %s233, 1
          %s6885 = scalar_lea.vmem [#allocation5], %s6884
          %6887 = dma.done %s6883, 16
        $region76: #{gated_attention_forward_batched.1} parent=67 // pred_fallthru
          _
      $region68: #{gated_attention_forward_batched.1} parent=5 // pred_fallthru
        _
    $region6: #{gated_attention_forward_batched.1} parent=1 // loop_footer
      %s24 = sadd.s32 1, %s20
    $region7: #{gated_attention_forward_batched.1} parent=1 // loop_footer_branch
      %19 = sbr.rel target = $region3
    $region8: #{gated_attention_forward_batched.1} parent=1 // loop_exit
      _
    %6888 = vsyncpa [#allocation3], 1
    %s6889 = scalar_lea.sflag [#allocation3], 1
    %6890 = vsyncpa %s6889, 1
    %6891 = vsyncpa [#allocation4], 1
    %s6892 = scalar_lea.sflag [#allocation4], 1
    %6893 = vsyncpa %s6892, 1

</llo_original>
